<compile_context>
chip_gen: v7x
topology: tpu7x:2x2x1
jax: 0.10.0
libtpu: 0.0.40
codegen_flags: <defaults>
</compile_context>

<pallas_src>
import functools

import jax
import jax.numpy as jnp
from jax.experimental import pallas as pl
from jax.experimental.pallas import tpu as pltpu


# ----------------------------------------------------------------------------
# Tiling helpers
# ----------------------------------------------------------------------------
_TILE_M = 512                       # row tile (multiple of 8); fits v7x VMEM
_VMEM_LIMIT_BYTES = 48 * 1024 * 1024  # raised scoped-VMEM cap, safe on all gens


def _round_up(x, m):
    return -(-x // m) * m


def _tile_rows(M, target=_TILE_M):
    """Pick a row tile (multiple of 8, <= target) and the padded row count."""
    tm = min(target, _round_up(max(M, 1), 8))
    m_pad = _round_up(M, tm)
    return tm, m_pad


def _pad_rows(x, m_pad):
    M = x.shape[0]
    if m_pad == M:
        return x
    return jnp.pad(x, ((0, m_pad - M), (0, 0)))


def _row_spec(tm, width):
    return pl.BlockSpec((tm, width), lambda i: (i, 0))


def _const_spec(shape):
    return pl.BlockSpec(shape, lambda i: (0, 0))


def _cparams():
    return pltpu.CompilerParams(
        dimension_semantics=("parallel",),
        vmem_limit_bytes=_VMEM_LIMIT_BYTES,
    )


# ----------------------------------------------------------------------------
# Kernel 1: fused q-side projections (+ per-head softmax) + value projection
# ----------------------------------------------------------------------------
def _qproj_kernel(src_ref, pos_ref, woa_ref, boa_ref, wv_ref, bv_ref,
                  off_ref, aw_ref, val_ref, *, n_heads, lp, offw):
    src = src_ref[...]                                   # (tm, D) f32
    q = src + pos_ref[...]                               # query = src + pos

    # concatenated [offsets | attn-logits] projection on the MXU (bf16 inputs,
    # f32 accumulation)
    oa = (jnp.dot(q.astype(jnp.bfloat16), woa_ref[...],
                  preferred_element_type=jnp.float32) + boa_ref[...])
    off_ref[...] = oa[:, :offw]

    logits = oa[:, offw:]                                # (tm, H*L*P) f32
    # per-head softmax over the L*P sampling slots (f32)
    for h in range(n_heads):
        lg = logits[:, h * lp:(h + 1) * lp]
        m = jnp.max(lg, axis=-1, keepdims=True)
        e = jnp.exp(lg - m)
        aw_ref[:, h * lp:(h + 1) * lp] = e / jnp.sum(e, axis=-1, keepdims=True)

    # value projection uses src (not src + pos)
    val_ref[...] = (jnp.dot(src.astype(jnp.bfloat16), wv_ref[...],
                            preferred_element_type=jnp.float32) + bv_ref[...])


def pallas_qside_proj(src2, pos2, w_off, b_off, w_aw, b_aw, w_v, b_v,
                      n_heads, n_levels, n_points):
    M, D = src2.shape
    LP = n_levels * n_points
    OFFW = n_heads * LP * 2
    AWW = n_heads * LP
    WOA = OFFW + AWW

    w_oa = jnp.concatenate([w_off, w_aw], axis=1).astype(jnp.bfloat16)
    b_oa = jnp.concatenate([b_off, b_aw]).reshape(1, WOA)
    w_vb = w_v.astype(jnp.bfloat16)
    b_vb = b_v.reshape(1, D)

    tm, m_pad = _tile_rows(M)
    src_p = _pad_rows(src2, m_pad)
    pos_p = _pad_rows(pos2, m_pad)

    kernel = functools.partial(_qproj_kernel, n_heads=n_heads, lp=LP, offw=OFFW)
    off, aw, val = pl.pallas_call(
        kernel,
        out_shape=(jax.ShapeDtypeStruct((m_pad, OFFW), jnp.float32),
                   jax.ShapeDtypeStruct((m_pad, AWW), jnp.float32),
                   jax.ShapeDtypeStruct((m_pad, D), jnp.float32)),
        grid=(m_pad // tm,),
        in_specs=[_row_spec(tm, D), _row_spec(tm, D),
                  _const_spec((D, WOA)), _const_spec((1, WOA)),
                  _const_spec((D, D)), _const_spec((1, D))],
        out_specs=(_row_spec(tm, OFFW), _row_spec(tm, AWW), _row_spec(tm, D)),
        compiler_params=_cparams(),
    )(src_p, pos_p, w_oa, b_oa, w_vb, b_vb)
    return off[:M], aw[:M], val[:M]


# ----------------------------------------------------------------------------
# Kernel 2: output projection + residual + LayerNorm1
# ----------------------------------------------------------------------------
def _outproj_add_ln_kernel(a_ref, r_ref, w_ref, b_ref, g_ref, be_ref, o_ref):
    y = (jnp.dot(a_ref[...].astype(jnp.bfloat16), w_ref[...],
                 preferred_element_type=jnp.float32) + b_ref[...])
    h = y + r_ref[...]
    mu = jnp.mean(h, axis=-1, keepdims=True)
    d = h - mu
    var = jnp.mean(d * d, axis=-1, keepdims=True)
    o_ref[...] = d * jax.lax.rsqrt(var + 1e-5) * g_ref[...] + be_ref[...]


def pallas_outproj_add_ln(attn, residual, w, b, gamma, beta):
    M, D = attn.shape
    tm, m_pad = _tile_rows(M)
    attn_p = _pad_rows(attn, m_pad)
    res_p = _pad_rows(residual, m_pad)
    return pl.pallas_call(
        _outproj_add_ln_kernel,
        out_shape=jax.ShapeDtypeStruct((m_pad, D), jnp.float32),
        grid=(m_pad // tm,),
        in_specs=[_row_spec(tm, D), _row_spec(tm, D),
                  _const_spec((D, D)), _const_spec((1, D)),
                  _const_spec((1, D)), _const_spec((1, D))],
        out_specs=_row_spec(tm, D),
        compiler_params=_cparams(),
    )(attn_p, res_p, w.astype(jnp.bfloat16), b.reshape(1, D),
      gamma.reshape(1, D), beta.reshape(1, D))[:M]


# ----------------------------------------------------------------------------
# Kernel 3: FFN (linear1 -> ReLU -> linear2) + residual + LayerNorm2
# ----------------------------------------------------------------------------
def _ffn_ln_kernel(x_ref, w1_ref, b1_ref, w2_ref, b2_ref, g_ref, b_ref, o_ref):
    x = x_ref[...]
    h = jnp.maximum(
        jnp.dot(x.astype(jnp.bfloat16), w1_ref[...],
                preferred_element_type=jnp.float32) + b1_ref[...],
        0.0)
    y = (jnp.dot(h.astype(jnp.bfloat16), w2_ref[...],
                 preferred_element_type=jnp.float32) + b2_ref[...])
    z = x + y
    mu = jnp.mean(z, axis=-1, keepdims=True)
    d = z - mu
    var = jnp.mean(d * d, axis=-1, keepdims=True)
    o_ref[...] = d * jax.lax.rsqrt(var + 1e-5) * g_ref[...] + b_ref[...]


def pallas_ffn_layernorm(x, w1, b1, w2, b2, gamma, beta):
    M, D = x.shape
    F = w1.shape[1]
    tm, m_pad = _tile_rows(M)
    x_p = _pad_rows(x, m_pad)
    return pl.pallas_call(
        _ffn_ln_kernel,
        out_shape=jax.ShapeDtypeStruct((m_pad, D), jnp.float32),
        grid=(m_pad // tm,),
        in_specs=[_row_spec(tm, D),
                  _const_spec((D, F)), _const_spec((1, F)),
                  _const_spec((F, D)), _const_spec((1, D)),
                  _const_spec((1, D)), _const_spec((1, D))],
        out_specs=_row_spec(tm, D),
        compiler_params=_cparams(),
    )(x_p, w1.astype(jnp.bfloat16), b1.reshape(1, F),
      w2.astype(jnp.bfloat16), b2.reshape(1, D),
      gamma.reshape(1, D), beta.reshape(1, D))[:M]


# ----------------------------------------------------------------------------
# Deformable attention core (bilinear sampling) -- plain JAX glue
# ----------------------------------------------------------------------------
def ms_deform_attn_core(value, spatial_shapes, level_start_index,
                        sampling_locations, attention_weights):
    # value: (N, Len, H, Dh); sampling_locations: (N, Lq, H, L, P, 2)
    # attention_weights: (N, Lq, H, L, P)
    N, Len, Hh, Dh = value.shape
    _, Lq, _, L, P, _ = sampling_locations.shape

    Wf = spatial_shapes[:, 1].astype(jnp.float32)[None, None, None, :, None]
    Hf = spatial_shapes[:, 0].astype(jnp.float32)[None, None, None, :, None]
    Wi = spatial_shapes[:, 1][None, None, None, :, None]
    Hi = spatial_shapes[:, 0][None, None, None, :, None]
    starts = level_start_index[None, None, None, :, None]

    # grid_sample(align_corners=False): pixel = loc * size - 0.5
    x = sampling_locations[..., 0] * Wf - 0.5            # (N,Lq,H,L,P)
    y = sampling_locations[..., 1] * Hf - 0.5
    x0 = jnp.floor(x)
    y0 = jnp.floor(y)

    n_idx = jnp.arange(N)[:, None, None, None, None]
    h_idx = jnp.arange(Hh)[None, None, :, None, None]

    acc = jnp.zeros((N, Lq, Hh, Dh), jnp.float32)
    for dy in (0, 1):
        for dx in (0, 1):
            xi = x0 + dx
            yi = y0 + dy
            w = (1.0 - jnp.abs(x - xi)) * (1.0 - jnp.abs(y - yi))
            valid = ((xi >= 0.0) & (xi <= Wf - 1.0) &
                     (yi >= 0.0) & (yi <= Hf - 1.0))
            w = jnp.where(valid, w, 0.0) * attention_weights   # (N,Lq,H,L,P)
            xi_c = jnp.clip(xi.astype(jnp.int32), 0, Wi - 1)
            yi_c = jnp.clip(yi.astype(jnp.int32), 0, Hi - 1)
            gidx = starts + yi_c * Wi + xi_c                    # (N,Lq,H,L,P)
            sampled = value[n_idx, gidx, h_idx]                 # (N,Lq,H,L,P,Dh)
            # fuse weighting + reduction: no weighted 6-D intermediate
            acc = acc + jnp.einsum('nqhlp,nqhlpd->nqhd', w, sampled,
                                   preferred_element_type=jnp.float32)
    return acc.reshape(N, Lq, Hh * Dh)


# ----------------------------------------------------------------------------
# Encoder layer + encoder forward
# ----------------------------------------------------------------------------
def encoder_layer_forward(src, pos, reference_points, spatial_shapes,
                          level_start_index, params, cfg, padding_mask=None):
    N, Len, D = src.shape
    H, L, P = cfg["n_heads"], cfg["n_levels"], cfg["n_points"]
    Dh = D // H
    M = N * Len

    src2 = src.reshape(M, D)
    pos2 = jnp.zeros_like(src2) if pos is None else pos.reshape(M, D)

    # --- fused MSDeformAttn projections + per-head softmax (Pallas) ---
    off, aw, val = pallas_qside_proj(
        src2, pos2,
        params["w_off"], params["b_off"],
        params["w_aw"], params["b_aw"],
        params["w_v"], params["b_v"],
        H, L, P)
    off = off.reshape(N, Len, H, L, P, 2)
    aw = aw.reshape(N, Len, H, L, P)
    val = val.reshape(N, Len, D)
    if padding_mask is not None:
        val = jnp.where(padding_mask[..., None], 0.0, val)
    val = val.reshape(N, Len, H, Dh)

    # --- sampling locations (reference_points last dim == 2 branch) ---
    # TODO(synk): the 4-coordinate (box) reference_points branch of MSDeformAttn
    #             is not implemented.
    offset_normalizer = jnp.stack(
        [spatial_shapes[:, 1], spatial_shapes[:, 0]], -1).astype(jnp.float32)
    sampling_locations = (
        reference_points[:, :, None, :, None, :]
        + off / offset_normalizer[None, None, None, :, None, :]
    )

    attn = ms_deform_attn_core(val, spatial_shapes, level_start_index,
                               sampling_locations, aw)          # (N,Len,D)

    # output projection + residual + norm1, then FFN + residual + norm2 (Pallas)
    x = pallas_outproj_add_ln(attn.reshape(M, D), src2,
                              params["w_out"], params["b_out"],
                              params["g1"], params["be1"])
    x = pallas_ffn_layernorm(x, params["w1"], params["b1"],
                             params["w2"], params["b2"],
                             params["g2"], params["be2"])
    return x.reshape(N, Len, D)


def get_reference_points(spatial_shapes_list, valid_ratios):
    ref_list = []
    for lvl, (H_, W_) in enumerate(spatial_shapes_list):
        ref_y, ref_x = jnp.meshgrid(
            jnp.linspace(0.5, H_ - 0.5, H_, dtype=jnp.float32),
            jnp.linspace(0.5, W_ - 0.5, W_, dtype=jnp.float32),
            indexing="ij")
        ref_y = ref_y.reshape(-1)[None] / (valid_ratios[:, None, lvl, 1] * H_)
        ref_x = ref_x.reshape(-1)[None] / (valid_ratios[:, None, lvl, 0] * W_)
        ref_list.append(jnp.stack((ref_x, ref_y), -1))
    reference_points = jnp.concatenate(ref_list, 1)            # (N, Len, 2)
    reference_points = reference_points[:, :, None] * valid_ratios[:, None]
    return reference_points                                    # (N, Len, L, 2)


def deformable_encoder_forward(layer_params, src, spatial_shapes,
                               spatial_shapes_list, level_start_index,
                               valid_ratios, cfg, pos=None, padding_mask=None):
    # TODO(synk): dropout (dropout1/2/3) omitted -> matches eval()/inference mode.
    output = src
    reference_points = get_reference_points(spatial_shapes_list, valid_ratios)
    for params in layer_params:
        output = encoder_layer_forward(output, pos, reference_points,
                                       spatial_shapes, level_start_index,
                                       params, cfg, padding_mask)
    return output


# ----------------------------------------------------------------------------
# Deterministic parameter init (synthetic; not a checkpoint load)
# ----------------------------------------------------------------------------
def init_layer_params(key, D, H, L, P, F):
    ks = jax.random.split(key, 6)
    s = 0.02
    return dict(
        w_off=jax.random.normal(ks[0], (D, H * L * P * 2), jnp.float32) * s,
        b_off=jax.random.normal(ks[1], (H * L * P * 2,), jnp.float32) * s,
        w_aw=jax.random.normal(ks[2], (D, H * L * P), jnp.float32) * s,
        b_aw=jnp.zeros((H * L * P,), jnp.float32),
        w_v=jax.random.normal(ks[3], (D, D), jnp.float32) * s,
        b_v=jnp.zeros((D,), jnp.float32),
        w_out=jax.random.normal(ks[4], (D, D), jnp.float32) * s,
        b_out=jnp.zeros((D,), jnp.float32),
        g1=jnp.ones((D,), jnp.float32), be1=jnp.zeros((D,), jnp.float32),
        w1=jax.random.normal(ks[5], (D, F), jnp.float32) * s,
        b1=jnp.zeros((F,), jnp.float32),
        w2=jax.random.normal(jax.random.fold_in(key, 99), (F, D), jnp.float32) * s,
        b2=jnp.zeros((D,), jnp.float32),
        g2=jnp.ones((D,), jnp.float32), be2=jnp.zeros((D,), jnp.float32),
    )


if __name__ == "__main__":
    key = jax.random.PRNGKey(0)

    # small config consistent with the module's forward
    N = 2
    d_model = 32
    n_heads = 4
    n_levels = 2
    n_points = 2
    d_ffn = 64
    num_layers = 2
    cfg = dict(n_heads=n_heads, n_levels=n_levels, n_points=n_points)

    spatial_shapes_list = [(8, 8), (4, 4)]
    Len = sum(h * w for h, w in spatial_shapes_list)
    spatial_shapes = jnp.array(spatial_shapes_list, dtype=jnp.int32)
    lsi, acc = [], 0
    for h, w in spatial_shapes_list:
        lsi.append(acc)
        acc += h * w
    level_start_index = jnp.array(lsi, dtype=jnp.int32)

    k_src, k_pos, k_params = jax.random.split(key, 3)
    src = jax.random.normal(k_src, (N, Len, d_model), jnp.float32)
    pos = jax.random.normal(k_pos, (N, Len, d_model), jnp.float32)
    valid_ratios = jnp.ones((N, n_levels, 2), jnp.float32)

    layer_params = [
        init_layer_params(jax.random.fold_in(k_params, i),
                          d_model, n_heads, n_levels, n_points, d_ffn)
        for i in range(num_layers)
    ]

    fwd = jax.jit(functools.partial(
        deformable_encoder_forward,
        spatial_shapes_list=spatial_shapes_list,
        cfg=cfg,
    ))
    out = fwd(layer_params, src, spatial_shapes,
              level_start_index=level_start_index,
              valid_ratios=valid_ratios, pos=pos, padding_mask=None)
    out = jax.block_until_ready(out)

    assert out.shape == (N, Len, d_model), out.shape
    assert bool(jnp.all(jnp.isfinite(out)))
    print("KERNEL_OK")
</pallas_src>

<mosaic_0001>
module attributes {stable_mosaic.version = 11 : i64} {
  func.func @_qproj_kernel(%arg0: i32, %arg1: memref<160x32xf32, #tpu.memory_space<vmem>>, %arg2: memref<160x32xf32, #tpu.memory_space<vmem>>, %arg3: memref<32x48xbf16, #tpu.memory_space<vmem>>, %arg4: memref<1x48xf32, #tpu.memory_space<vmem>>, %arg5: memref<32x32xbf16, #tpu.memory_space<vmem>>, %arg6: memref<1x32xf32, #tpu.memory_space<vmem>>, %arg7: memref<160x32xf32, #tpu.memory_space<vmem>>, %arg8: memref<160x16xf32, #tpu.memory_space<vmem>>, %arg9: memref<160x32xf32, #tpu.memory_space<vmem>>) attributes {dimension_semantics = [#tpu.dimension_semantics<parallel>], iteration_bounds = array<i64: 1>, scalar_prefetch = 0 : i64, scratch_operands = 0 : i64, tpu.core_type = #tpu.core_type<tc>, window_params = [{transform_indices = @transform_0, window_bounds = array<i64: 160, 32>}, {transform_indices = @transform_1, window_bounds = array<i64: 160, 32>}, {pipeline_mode = #tpu.pipeline_mode<synchronous>, transform_indices = @transform_2, window_bounds = array<i64: 32, 48>}, {pipeline_mode = #tpu.pipeline_mode<synchronous>, transform_indices = @transform_3, window_bounds = array<i64: 1, 48>}, {pipeline_mode = #tpu.pipeline_mode<synchronous>, transform_indices = @transform_4, window_bounds = array<i64: 32, 32>}, {pipeline_mode = #tpu.pipeline_mode<synchronous>, transform_indices = @transform_5, window_bounds = array<i64: 1, 32>}, {transform_indices = @transform_6, window_bounds = array<i64: 160, 32>}, {transform_indices = @transform_7, window_bounds = array<i64: 160, 16>}, {transform_indices = @transform_8, window_bounds = array<i64: 160, 32>}]} {
    %c0 = arith.constant 0 : index
    %c0_0 = arith.constant 0 : index
    %0 = vector.load %arg1[%c0, %c0_0] : memref<160x32xf32, #tpu.memory_space<vmem>>, vector<160x32xf32>
    %c0_1 = arith.constant 0 : index
    %c0_2 = arith.constant 0 : index
    %1 = vector.load %arg2[%c0_1, %c0_2] : memref<160x32xf32, #tpu.memory_space<vmem>>, vector<160x32xf32>
    %2 = arith.addf %0, %1 : vector<160x32xf32>
    %3 = arith.truncf %2 : vector<160x32xf32> to vector<160x32xbf16>
    %c0_3 = arith.constant 0 : index
    %c0_4 = arith.constant 0 : index
    %4 = vector.load %arg3[%c0_3, %c0_4] : memref<32x48xbf16, #tpu.memory_space<vmem>>, vector<32x48xbf16>
    %cst = arith.constant dense<0.000000e+00> : vector<160x48xf32>
    %5 = tpu.matmul %3, %4, %cst {dimension_numbers = #tpu.dot_dimension_numbers<[1], [0], [0], [1], [0, 0, 1, 1], [], []>} : vector<160x32xbf16>, vector<32x48xbf16>, vector<160x48xf32> -> vector<160x48xf32>
    %c0_5 = arith.constant 0 : index
    %c0_6 = arith.constant 0 : index
    %6 = vector.load %arg4[%c0_5, %c0_6] : memref<1x48xf32, #tpu.memory_space<vmem>>, vector<1x48xf32>
    %7 = vector.broadcast %6 : vector<1x48xf32> to vector<160x48xf32>
    %8 = arith.addf %5, %7 : vector<160x48xf32>
    %9 = vector.extract_strided_slice %8 {offsets = [0, 0], sizes = [160, 32], strides = [1, 1]} : vector<160x48xf32> to vector<160x32xf32>
    %c0_7 = arith.constant 0 : index
    %c0_8 = arith.constant 0 : index
    %10 = vector.load %arg7[%c0_7, %c0_8] : memref<160x32xf32, #tpu.memory_space<vmem>>, vector<160x32xf32>
    tpu.vector_store %arg7[%c0_7, %c0_8], %9 {strides = array<i32>} : memref<160x32xf32, #tpu.memory_space<vmem>>, vector<160x32xf32>,
    %11 = vector.extract_strided_slice %8 {offsets = [0, 32], sizes = [160, 16], strides = [1, 1]} : vector<160x48xf32> to vector<160x16xf32>
    %12 = vector.extract_strided_slice %11 {offsets = [0, 0], sizes = [160, 4], strides = [1, 1]} : vector<160x16xf32> to vector<160x4xf32>
    %cst_9 = arith.constant dense<0xFF800000> : vector<160xf32>
    %13 = vector.multi_reduction <maximumf>, %12, %cst_9 [1] : vector<160x4xf32> to vector<160xf32>
    %14 = vector.shape_cast %13 : vector<160xf32> to vector<160x1xf32>
    %15 = vector.broadcast %14 : vector<160x1xf32> to vector<160x4xf32>
    %16 = arith.subf %12, %15 : vector<160x4xf32>
    %17 = math.exp %16 : vector<160x4xf32>
    %cst_10 = arith.constant dense<0.000000e+00> : vector<160xf32>
    %18 = vector.multi_reduction <add>, %17, %cst_10 [1] : vector<160x4xf32> to vector<160xf32>
    %19 = vector.shape_cast %18 : vector<160xf32> to vector<160x1xf32>
    %20 = vector.broadcast %19 : vector<160x1xf32> to vector<160x4xf32>
    %21 = arith.divf %17, %20 : vector<160x4xf32>
    %c0_11 = arith.constant 0 : index
    %c0_12 = arith.constant 0 : index
    %22 = vector.load %arg8[%c0_11, %c0_12] : memref<160x16xf32, #tpu.memory_space<vmem>>, vector<160x4xf32>
    tpu.vector_store %arg8[%c0_11, %c0_12], %21 {strides = array<i32>} : memref<160x16xf32, #tpu.memory_space<vmem>>, vector<160x4xf32>,
    %23 = vector.extract_strided_slice %11 {offsets = [0, 4], sizes = [160, 4], strides = [1, 1]} : vector<160x16xf32> to vector<160x4xf32>
    %cst_13 = arith.constant dense<0xFF800000> : vector<160xf32>
    %24 = vector.multi_reduction <maximumf>, %23, %cst_13 [1] : vector<160x4xf32> to vector<160xf32>
    %25 = vector.shape_cast %24 : vector<160xf32> to vector<160x1xf32>
    %26 = vector.broadcast %25 : vector<160x1xf32> to vector<160x4xf32>
    %27 = arith.subf %23, %26 : vector<160x4xf32>
    %28 = math.exp %27 : vector<160x4xf32>
    %cst_14 = arith.constant dense<0.000000e+00> : vector<160xf32>
    %29 = vector.multi_reduction <add>, %28, %cst_14 [1] : vector<160x4xf32> to vector<160xf32>
    %30 = vector.shape_cast %29 : vector<160xf32> to vector<160x1xf32>
    %31 = vector.broadcast %30 : vector<160x1xf32> to vector<160x4xf32>
    %32 = arith.divf %28, %31 : vector<160x4xf32>
    %c0_15 = arith.constant 0 : index
    %c4 = arith.constant 4 : index
    %33 = vector.load %arg8[%c0_15, %c4] : memref<160x16xf32, #tpu.memory_space<vmem>>, vector<160x4xf32>
    tpu.vector_store %arg8[%c0_15, %c4], %32 {strides = array<i32>} : memref<160x16xf32, #tpu.memory_space<vmem>>, vector<160x4xf32>,
    %34 = vector.extract_strided_slice %11 {offsets = [0, 8], sizes = [160, 4], strides = [1, 1]} : vector<160x16xf32> to vector<160x4xf32>
    %cst_16 = arith.constant dense<0xFF800000> : vector<160xf32>
    %35 = vector.multi_reduction <maximumf>, %34, %cst_16 [1] : vector<160x4xf32> to vector<160xf32>
    %36 = vector.shape_cast %35 : vector<160xf32> to vector<160x1xf32>
    %37 = vector.broadcast %36 : vector<160x1xf32> to vector<160x4xf32>
    %38 = arith.subf %34, %37 : vector<160x4xf32>
    %39 = math.exp %38 : vector<160x4xf32>
    %cst_17 = arith.constant dense<0.000000e+00> : vector<160xf32>
    %40 = vector.multi_reduction <add>, %39, %cst_17 [1] : vector<160x4xf32> to vector<160xf32>
    %41 = vector.shape_cast %40 : vector<160xf32> to vector<160x1xf32>
    %42 = vector.broadcast %41 : vector<160x1xf32> to vector<160x4xf32>
    %43 = arith.divf %39, %42 : vector<160x4xf32>
    %c0_18 = arith.constant 0 : index
    %c8 = arith.constant 8 : index
    %44 = vector.load %arg8[%c0_18, %c8] : memref<160x16xf32, #tpu.memory_space<vmem>>, vector<160x4xf32>
    tpu.vector_store %arg8[%c0_18, %c8], %43 {strides = array<i32>} : memref<160x16xf32, #tpu.memory_space<vmem>>, vector<160x4xf32>,
    %45 = vector.extract_strided_slice %11 {offsets = [0, 12], sizes = [160, 4], strides = [1, 1]} : vector<160x16xf32> to vector<160x4xf32>
    %cst_19 = arith.constant dense<0xFF800000> : vector<160xf32>
    %46 = vector.multi_reduction <maximumf>, %45, %cst_19 [1] : vector<160x4xf32> to vector<160xf32>
    %47 = vector.shape_cast %46 : vector<160xf32> to vector<160x1xf32>
    %48 = vector.broadcast %47 : vector<160x1xf32> to vector<160x4xf32>
    %49 = arith.subf %45, %48 : vector<160x4xf32>
    %50 = math.exp %49 : vector<160x4xf32>
    %cst_20 = arith.constant dense<0.000000e+00> : vector<160xf32>
    %51 = vector.multi_reduction <add>, %50, %cst_20 [1] : vector<160x4xf32> to vector<160xf32>
    %52 = vector.shape_cast %51 : vector<160xf32> to vector<160x1xf32>
    %53 = vector.broadcast %52 : vector<160x1xf32> to vector<160x4xf32>
    %54 = arith.divf %50, %53 : vector<160x4xf32>
    %c0_21 = arith.constant 0 : index
    %c12 = arith.constant 12 : index
    %55 = vector.load %arg8[%c0_21, %c12] : memref<160x16xf32, #tpu.memory_space<vmem>>, vector<160x4xf32>
    tpu.vector_store %arg8[%c0_21, %c12], %54 {strides = array<i32>} : memref<160x16xf32, #tpu.memory_space<vmem>>, vector<160x4xf32>,
    %56 = arith.truncf %0 : vector<160x32xf32> to vector<160x32xbf16>
    %c0_22 = arith.constant 0 : index
    %c0_23 = arith.constant 0 : index
    %57 = vector.load %arg5[%c0_22, %c0_23] : memref<32x32xbf16, #tpu.memory_space<vmem>>, vector<32x32xbf16>
    %cst_24 = arith.constant dense<0.000000e+00> : vector<160x32xf32>
    %58 = tpu.matmul %56, %57, %cst_24 {dimension_numbers = #tpu.dot_dimension_numbers<[1], [0], [0], [1], [0, 0, 1, 1], [], []>} : vector<160x32xbf16>, vector<32x32xbf16>, vector<160x32xf32> -> vector<160x32xf32>
    %c0_25 = arith.constant 0 : index
    %c0_26 = arith.constant 0 : index
    %59 = vector.load %arg6[%c0_25, %c0_26] : memref<1x32xf32, #tpu.memory_space<vmem>>, vector<1x32xf32>
    %60 = vector.broadcast %59 : vector<1x32xf32> to vector<160x32xf32>
    %61 = arith.addf %58, %60 : vector<160x32xf32>
    %c0_27 = arith.constant 0 : index
    %c0_28 = arith.constant 0 : index
    %62 = vector.load %arg9[%c0_27, %c0_28] : memref<160x32xf32, #tpu.memory_space<vmem>>, vector<160x32xf32>
    tpu.vector_store %arg9[%c0_27, %c0_28], %61 {strides = array<i32>} : memref<160x32xf32, #tpu.memory_space<vmem>>, vector<160x32xf32>,
    return
  }
  func.func @transform_0(%arg0: i32) -> (i32, i32) {
    %c0_i32 = arith.constant 0 : i32
    %c0_i32_0 = arith.constant 0 : i32
    return %arg0, %c0_i32 : i32, i32
  }
  func.func @transform_1(%arg0: i32) -> (i32, i32) {
    %c0_i32 = arith.constant 0 : i32
    %c0_i32_0 = arith.constant 0 : i32
    return %arg0, %c0_i32 : i32, i32
  }
  func.func @transform_2(%arg0: i32) -> (i32, i32) {
    %c0_i32 = arith.constant 0 : i32
    %c0_i32_0 = arith.constant 0 : i32
    %c0_i32_1 = arith.constant 0 : i32
    return %c0_i32, %c0_i32_0 : i32, i32
  }
  func.func @transform_3(%arg0: i32) -> (i32, i32) {
    %c0_i32 = arith.constant 0 : i32
    %c0_i32_0 = arith.constant 0 : i32
    %c0_i32_1 = arith.constant 0 : i32
    return %c0_i32, %c0_i32_0 : i32, i32
  }
  func.func @transform_4(%arg0: i32) -> (i32, i32) {
    %c0_i32 = arith.constant 0 : i32
    %c0_i32_0 = arith.constant 0 : i32
    %c0_i32_1 = arith.constant 0 : i32
    return %c0_i32, %c0_i32_0 : i32, i32
  }
  func.func @transform_5(%arg0: i32) -> (i32, i32) {
    %c0_i32 = arith.constant 0 : i32
    %c0_i32_0 = arith.constant 0 : i32
    %c0_i32_1 = arith.constant 0 : i32
    return %c0_i32, %c0_i32_0 : i32, i32
  }
  func.func @transform_6(%arg0: i32) -> (i32, i32) {
    %c0_i32 = arith.constant 0 : i32
    %c0_i32_0 = arith.constant 0 : i32
    return %arg0, %c0_i32 : i32, i32
  }
  func.func @transform_7(%arg0: i32) -> (i32, i32) {
    %c0_i32 = arith.constant 0 : i32
    %c0_i32_0 = arith.constant 0 : i32
    return %arg0, %c0_i32 : i32, i32
  }
  func.func @transform_8(%arg0: i32) -> (i32, i32) {
    %c0_i32 = arith.constant 0 : i32
    %c0_i32_0 = arith.constant 0 : i32
    return %arg0, %c0_i32 : i32, i32
  }
}

module attributes {stable_mosaic.version = 11 : i64} {
  func.func @_outproj_add_ln_kernel(%arg0: i32, %arg1: memref<160x32xf32, #tpu.memory_space<vmem>>, %arg2: memref<160x32xf32, #tpu.memory_space<vmem>>, %arg3: memref<32x32xbf16, #tpu.memory_space<vmem>>, %arg4: memref<1x32xf32, #tpu.memory_space<vmem>>, %arg5: memref<1x32xf32, #tpu.memory_space<vmem>>, %arg6: memref<1x32xf32, #tpu.memory_space<vmem>>, %arg7: memref<160x32xf32, #tpu.memory_space<vmem>>) attributes {dimension_semantics = [#tpu.dimension_semantics<parallel>], iteration_bounds = array<i64: 1>, scalar_prefetch = 0 : i64, scratch_operands = 0 : i64, tpu.core_type = #tpu.core_type<tc>, window_params = [{transform_indices = @transform_0, window_bounds = array<i64: 160, 32>}, {transform_indices = @transform_1, window_bounds = array<i64: 160, 32>}, {pipeline_mode = #tpu.pipeline_mode<synchronous>, transform_indices = @transform_2, window_bounds = array<i64: 32, 32>}, {pipeline_mode = #tpu.pipeline_mode<synchronous>, transform_indices = @transform_3, window_bounds = array<i64: 1, 32>}, {pipeline_mode = #tpu.pipeline_mode<synchronous>, transform_indices = @transform_4, window_bounds = array<i64: 1, 32>}, {pipeline_mode = #tpu.pipeline_mode<synchronous>, transform_indices = @transform_5, window_bounds = array<i64: 1, 32>}, {transform_indices = @transform_6, window_bounds = array<i64: 160, 32>}]} {
    %c0 = arith.constant 0 : index
    %c0_0 = arith.constant 0 : index
    %0 = vector.load %arg1[%c0, %c0_0] : memref<160x32xf32, #tpu.memory_space<vmem>>, vector<160x32xf32>
    %1 = arith.truncf %0 : vector<160x32xf32> to vector<160x32xbf16>
    %c0_1 = arith.constant 0 : index
    %c0_2 = arith.constant 0 : index
    %2 = vector.load %arg3[%c0_1, %c0_2] : memref<32x32xbf16, #tpu.memory_space<vmem>>, vector<32x32xbf16>
    %cst = arith.constant dense<0.000000e+00> : vector<160x32xf32>
    %3 = tpu.matmul %1, %2, %cst {dimension_numbers = #tpu.dot_dimension_numbers<[1], [0], [0], [1], [0, 0, 1, 1], [], []>} : vector<160x32xbf16>, vector<32x32xbf16>, vector<160x32xf32> -> vector<160x32xf32>
    %c0_3 = arith.constant 0 : index
    %c0_4 = arith.constant 0 : index
    %4 = vector.load %arg4[%c0_3, %c0_4] : memref<1x32xf32, #tpu.memory_space<vmem>>, vector<1x32xf32>
    %5 = vector.broadcast %4 : vector<1x32xf32> to vector<160x32xf32>
    %6 = arith.addf %3, %5 : vector<160x32xf32>
    %c0_5 = arith.constant 0 : index
    %c0_6 = arith.constant 0 : index
    %7 = vector.load %arg2[%c0_5, %c0_6] : memref<160x32xf32, #tpu.memory_space<vmem>>, vector<160x32xf32>
    %8 = arith.addf %6, %7 : vector<160x32xf32>
    %cst_7 = arith.constant dense<0.000000e+00> : vector<160xf32>
    %9 = vector.multi_reduction <add>, %8, %cst_7 [1] : vector<160x32xf32> to vector<160xf32>
    %10 = vector.shape_cast %9 : vector<160xf32> to vector<160x1xf32>
    %cst_8 = arith.constant 3.200000e+01 : f32
    %11 = vector.broadcast %cst_8 : f32 to vector<160x1xf32>
    %12 = arith.divf %10, %11 : vector<160x1xf32>
    %13 = vector.broadcast %12 : vector<160x1xf32> to vector<160x32xf32>
    %14 = arith.subf %8, %13 : vector<160x32xf32>
    %15 = arith.mulf %14, %14 : vector<160x32xf32>
    %cst_9 = arith.constant dense<0.000000e+00> : vector<160xf32>
    %16 = vector.multi_reduction <add>, %15, %cst_9 [1] : vector<160x32xf32> to vector<160xf32>
    %17 = vector.shape_cast %16 : vector<160xf32> to vector<160x1xf32>
    %cst_10 = arith.constant 3.200000e+01 : f32
    %18 = vector.broadcast %cst_10 : f32 to vector<160x1xf32>
    %19 = arith.divf %17, %18 : vector<160x1xf32>
    %cst_11 = arith.constant 9.99999974E-6 : f32
    %20 = vector.broadcast %cst_11 : f32 to vector<160x1xf32>
    %21 = arith.addf %19, %20 : vector<160x1xf32>
    %22 = math.rsqrt %21 : vector<160x1xf32>
    %23 = vector.broadcast %22 : vector<160x1xf32> to vector<160x32xf32>
    %24 = arith.mulf %14, %23 : vector<160x32xf32>
    %c0_12 = arith.constant 0 : index
    %c0_13 = arith.constant 0 : index
    %25 = vector.load %arg5[%c0_12, %c0_13] : memref<1x32xf32, #tpu.memory_space<vmem>>, vector<1x32xf32>
    %26 = vector.broadcast %25 : vector<1x32xf32> to vector<160x32xf32>
    %27 = arith.mulf %24, %26 : vector<160x32xf32>
    %c0_14 = arith.constant 0 : index
    %c0_15 = arith.constant 0 : index
    %28 = vector.load %arg6[%c0_14, %c0_15] : memref<1x32xf32, #tpu.memory_space<vmem>>, vector<1x32xf32>
    %29 = vector.broadcast %28 : vector<1x32xf32> to vector<160x32xf32>
    %30 = arith.addf %27, %29 : vector<160x32xf32>
    %c0_16 = arith.constant 0 : index
    %c0_17 = arith.constant 0 : index
    %31 = vector.load %arg7[%c0_16, %c0_17] : memref<160x32xf32, #tpu.memory_space<vmem>>, vector<160x32xf32>
    tpu.vector_store %arg7[%c0_16, %c0_17], %30 {strides = array<i32>} : memref<160x32xf32, #tpu.memory_space<vmem>>, vector<160x32xf32>,
    return
  }
  func.func @transform_0(%arg0: i32) -> (i32, i32) {
    %c0_i32 = arith.constant 0 : i32
    %c0_i32_0 = arith.constant 0 : i32
    return %arg0, %c0_i32 : i32, i32
  }
  func.func @transform_1(%arg0: i32) -> (i32, i32) {
    %c0_i32 = arith.constant 0 : i32
    %c0_i32_0 = arith.constant 0 : i32
    return %arg0, %c0_i32 : i32, i32
  }
  func.func @transform_2(%arg0: i32) -> (i32, i32) {
    %c0_i32 = arith.constant 0 : i32
    %c0_i32_0 = arith.constant 0 : i32
    %c0_i32_1 = arith.constant 0 : i32
    return %c0_i32, %c0_i32_0 : i32, i32
  }
  func.func @transform_3(%arg0: i32) -> (i32, i32) {
    %c0_i32 = arith.constant 0 : i32
    %c0_i32_0 = arith.constant 0 : i32
    %c0_i32_1 = arith.constant 0 : i32
    return %c0_i32, %c0_i32_0 : i32, i32
  }
  func.func @transform_4(%arg0: i32) -> (i32, i32) {
    %c0_i32 = arith.constant 0 : i32
    %c0_i32_0 = arith.constant 0 : i32
    %c0_i32_1 = arith.constant 0 : i32
    return %c0_i32, %c0_i32_0 : i32, i32
  }
  func.func @transform_5(%arg0: i32) -> (i32, i32) {
    %c0_i32 = arith.constant 0 : i32
    %c0_i32_0 = arith.constant 0 : i32
    %c0_i32_1 = arith.constant 0 : i32
    return %c0_i32, %c0_i32_0 : i32, i32
  }
  func.func @transform_6(%arg0: i32) -> (i32, i32) {
    %c0_i32 = arith.constant 0 : i32
    %c0_i32_0 = arith.constant 0 : i32
    return %arg0, %c0_i32 : i32, i32
  }
}

module attributes {stable_mosaic.version = 11 : i64} {
  func.func @_ffn_ln_kernel(%arg0: i32, %arg1: memref<160x32xf32, #tpu.memory_space<vmem>>, %arg2: memref<32x64xbf16, #tpu.memory_space<vmem>>, %arg3: memref<1x64xf32, #tpu.memory_space<vmem>>, %arg4: memref<64x32xbf16, #tpu.memory_space<vmem>>, %arg5: memref<1x32xf32, #tpu.memory_space<vmem>>, %arg6: memref<1x32xf32, #tpu.memory_space<vmem>>, %arg7: memref<1x32xf32, #tpu.memory_space<vmem>>, %arg8: memref<160x32xf32, #tpu.memory_space<vmem>>) attributes {dimension_semantics = [#tpu.dimension_semantics<parallel>], iteration_bounds = array<i64: 1>, scalar_prefetch = 0 : i64, scratch_operands = 0 : i64, tpu.core_type = #tpu.core_type<tc>, window_params = [{transform_indices = @transform_0, window_bounds = array<i64: 160, 32>}, {pipeline_mode = #tpu.pipeline_mode<synchronous>, transform_indices = @transform_1, window_bounds = array<i64: 32, 64>}, {pipeline_mode = #tpu.pipeline_mode<synchronous>, transform_indices = @transform_2, window_bounds = array<i64: 1, 64>}, {pipeline_mode = #tpu.pipeline_mode<synchronous>, transform_indices = @transform_3, window_bounds = array<i64: 64, 32>}, {pipeline_mode = #tpu.pipeline_mode<synchronous>, transform_indices = @transform_4, window_bounds = array<i64: 1, 32>}, {pipeline_mode = #tpu.pipeline_mode<synchronous>, transform_indices = @transform_5, window_bounds = array<i64: 1, 32>}, {pipeline_mode = #tpu.pipeline_mode<synchronous>, transform_indices = @transform_6, window_bounds = array<i64: 1, 32>}, {transform_indices = @transform_7, window_bounds = array<i64: 160, 32>}]} {
    %c0 = arith.constant 0 : index
    %c0_0 = arith.constant 0 : index
    %0 = vector.load %arg1[%c0, %c0_0] : memref<160x32xf32, #tpu.memory_space<vmem>>, vector<160x32xf32>
    %1 = arith.truncf %0 : vector<160x32xf32> to vector<160x32xbf16>
    %c0_1 = arith.constant 0 : index
    %c0_2 = arith.constant 0 : index
    %2 = vector.load %arg2[%c0_1, %c0_2] : memref<32x64xbf16, #tpu.memory_space<vmem>>, vector<32x64xbf16>
    %cst = arith.constant dense<0.000000e+00> : vector<160x64xf32>
    %3 = tpu.matmul %1, %2, %cst {dimension_numbers = #tpu.dot_dimension_numbers<[1], [0], [0], [1], [0, 0, 1, 1], [], []>} : vector<160x32xbf16>, vector<32x64xbf16>, vector<160x64xf32> -> vector<160x64xf32>
    %c0_3 = arith.constant 0 : index
    %c0_4 = arith.constant 0 : index
    %4 = vector.load %arg3[%c0_3, %c0_4] : memref<1x64xf32, #tpu.memory_space<vmem>>, vector<1x64xf32>
    %5 = vector.broadcast %4 : vector<1x64xf32> to vector<160x64xf32>
    %6 = arith.addf %3, %5 : vector<160x64xf32>
    %cst_5 = arith.constant 0.000000e+00 : f32
    %7 = vector.broadcast %cst_5 : f32 to vector<160x64xf32>
    %8 = arith.maximumf %6, %7 : vector<160x64xf32>
    %9 = arith.truncf %8 : vector<160x64xf32> to vector<160x64xbf16>
    %c0_6 = arith.constant 0 : index
    %c0_7 = arith.constant 0 : index
    %10 = vector.load %arg4[%c0_6, %c0_7] : memref<64x32xbf16, #tpu.memory_space<vmem>>, vector<64x32xbf16>
    %cst_8 = arith.constant dense<0.000000e+00> : vector<160x32xf32>
    %11 = tpu.matmul %9, %10, %cst_8 {dimension_numbers = #tpu.dot_dimension_numbers<[1], [0], [0], [1], [0, 0, 1, 1], [], []>} : vector<160x64xbf16>, vector<64x32xbf16>, vector<160x32xf32> -> vector<160x32xf32>
    %c0_9 = arith.constant 0 : index
    %c0_10 = arith.constant 0 : index
    %12 = vector.load %arg5[%c0_9, %c0_10] : memref<1x32xf32, #tpu.memory_space<vmem>>, vector<1x32xf32>
    %13 = vector.broadcast %12 : vector<1x32xf32> to vector<160x32xf32>
    %14 = arith.addf %11, %13 : vector<160x32xf32>
    %15 = arith.addf %0, %14 : vector<160x32xf32>
    %cst_11 = arith.constant dense<0.000000e+00> : vector<160xf32>
    %16 = vector.multi_reduction <add>, %15, %cst_11 [1] : vector<160x32xf32> to vector<160xf32>
    %17 = vector.shape_cast %16 : vector<160xf32> to vector<160x1xf32>
    %cst_12 = arith.constant 3.200000e+01 : f32
    %18 = vector.broadcast %cst_12 : f32 to vector<160x1xf32>
    %19 = arith.divf %17, %18 : vector<160x1xf32>
    %20 = vector.broadcast %19 : vector<160x1xf32> to vector<160x32xf32>
    %21 = arith.subf %15, %20 : vector<160x32xf32>
    %22 = arith.mulf %21, %21 : vector<160x32xf32>
    %cst_13 = arith.constant dense<0.000000e+00> : vector<160xf32>
    %23 = vector.multi_reduction <add>, %22, %cst_13 [1] : vector<160x32xf32> to vector<160xf32>
    %24 = vector.shape_cast %23 : vector<160xf32> to vector<160x1xf32>
    %cst_14 = arith.constant 3.200000e+01 : f32
    %25 = vector.broadcast %cst_14 : f32 to vector<160x1xf32>
    %26 = arith.divf %24, %25 : vector<160x1xf32>
    %cst_15 = arith.constant 9.99999974E-6 : f32
    %27 = vector.broadcast %cst_15 : f32 to vector<160x1xf32>
    %28 = arith.addf %26, %27 : vector<160x1xf32>
    %29 = math.rsqrt %28 : vector<160x1xf32>
    %30 = vector.broadcast %29 : vector<160x1xf32> to vector<160x32xf32>
    %31 = arith.mulf %21, %30 : vector<160x32xf32>
    %c0_16 = arith.constant 0 : index
    %c0_17 = arith.constant 0 : index
    %32 = vector.load %arg6[%c0_16, %c0_17] : memref<1x32xf32, #tpu.memory_space<vmem>>, vector<1x32xf32>
    %33 = vector.broadcast %32 : vector<1x32xf32> to vector<160x32xf32>
    %34 = arith.mulf %31, %33 : vector<160x32xf32>
    %c0_18 = arith.constant 0 : index
    %c0_19 = arith.constant 0 : index
    %35 = vector.load %arg7[%c0_18, %c0_19] : memref<1x32xf32, #tpu.memory_space<vmem>>, vector<1x32xf32>
    %36 = vector.broadcast %35 : vector<1x32xf32> to vector<160x32xf32>
    %37 = arith.addf %34, %36 : vector<160x32xf32>
    %c0_20 = arith.constant 0 : index
    %c0_21 = arith.constant 0 : index
    %38 = vector.load %arg8[%c0_20, %c0_21] : memref<160x32xf32, #tpu.memory_space<vmem>>, vector<160x32xf32>
    tpu.vector_store %arg8[%c0_20, %c0_21], %37 {strides = array<i32>} : memref<160x32xf32, #tpu.memory_space<vmem>>, vector<160x32xf32>,
    return
  }
  func.func @transform_0(%arg0: i32) -> (i32, i32) {
    %c0_i32 = arith.constant 0 : i32
    %c0_i32_0 = arith.constant 0 : i32
    return %arg0, %c0_i32 : i32, i32
  }
  func.func @transform_1(%arg0: i32) -> (i32, i32) {
    %c0_i32 = arith.constant 0 : i32
    %c0_i32_0 = arith.constant 0 : i32
    %c0_i32_1 = arith.constant 0 : i32
    return %c0_i32, %c0_i32_0 : i32, i32
  }
  func.func @transform_2(%arg0: i32) -> (i32, i32) {
    %c0_i32 = arith.constant 0 : i32
    %c0_i32_0 = arith.constant 0 : i32
    %c0_i32_1 = arith.constant 0 : i32
    return %c0_i32, %c0_i32_0 : i32, i32
  }
  func.func @transform_3(%arg0: i32) -> (i32, i32) {
    %c0_i32 = arith.constant 0 : i32
    %c0_i32_0 = arith.constant 0 : i32
    %c0_i32_1 = arith.constant 0 : i32
    return %c0_i32, %c0_i32_0 : i32, i32
  }
  func.func @transform_4(%arg0: i32) -> (i32, i32) {
    %c0_i32 = arith.constant 0 : i32
    %c0_i32_0 = arith.constant 0 : i32
    %c0_i32_1 = arith.constant 0 : i32
    return %c0_i32, %c0_i32_0 : i32, i32
  }
  func.func @transform_5(%arg0: i32) -> (i32, i32) {
    %c0_i32 = arith.constant 0 : i32
    %c0_i32_0 = arith.constant 0 : i32
    %c0_i32_1 = arith.constant 0 : i32
    return %c0_i32, %c0_i32_0 : i32, i32
  }
  func.func @transform_6(%arg0: i32) -> (i32, i32) {
    %c0_i32 = arith.constant 0 : i32
    %c0_i32_0 = arith.constant 0 : i32
    %c0_i32_1 = arith.constant 0 : i32
    return %c0_i32, %c0_i32_0 : i32, i32
  }
  func.func @transform_7(%arg0: i32) -> (i32, i32) {
    %c0_i32 = arith.constant 0 : i32
    %c0_i32_0 = arith.constant 0 : i32
    return %arg0, %c0_i32 : i32, i32
  }
}

module attributes {stable_mosaic.version = 11 : i64} {
  func.func @_qproj_kernel(%arg0: i32, %arg1: memref<160x32xf32, #tpu.memory_space<vmem>>, %arg2: memref<160x32xf32, #tpu.memory_space<vmem>>, %arg3: memref<32x48xbf16, #tpu.memory_space<vmem>>, %arg4: memref<1x48xf32, #tpu.memory_space<vmem>>, %arg5: memref<32x32xbf16, #tpu.memory_space<vmem>>, %arg6: memref<1x32xf32, #tpu.memory_space<vmem>>, %arg7: memref<160x32xf32, #tpu.memory_space<vmem>>, %arg8: memref<160x16xf32, #tpu.memory_space<vmem>>, %arg9: memref<160x32xf32, #tpu.memory_space<vmem>>) attributes {dimension_semantics = [#tpu.dimension_semantics<parallel>], iteration_bounds = array<i64: 1>, scalar_prefetch = 0 : i64, scratch_operands = 0 : i64, tpu.core_type = #tpu.core_type<tc>, window_params = [{transform_indices = @transform_0, window_bounds = array<i64: 160, 32>}, {transform_indices = @transform_1, window_bounds = array<i64: 160, 32>}, {pipeline_mode = #tpu.pipeline_mode<synchronous>, transform_indices = @transform_2, window_bounds = array<i64: 32, 48>}, {pipeline_mode = #tpu.pipeline_mode<synchronous>, transform_indices = @transform_3, window_bounds = array<i64: 1, 48>}, {pipeline_mode = #tpu.pipeline_mode<synchronous>, transform_indices = @transform_4, window_bounds = array<i64: 32, 32>}, {pipeline_mode = #tpu.pipeline_mode<synchronous>, transform_indices = @transform_5, window_bounds = array<i64: 1, 32>}, {transform_indices = @transform_6, window_bounds = array<i64: 160, 32>}, {transform_indices = @transform_7, window_bounds = array<i64: 160, 16>}, {transform_indices = @transform_8, window_bounds = array<i64: 160, 32>}]} {
    %c0 = arith.constant 0 : index
    %c0_0 = arith.constant 0 : index
    %0 = vector.load %arg1[%c0, %c0_0] : memref<160x32xf32, #tpu.memory_space<vmem>>, vector<160x32xf32>
    %c0_1 = arith.constant 0 : index
    %c0_2 = arith.constant 0 : index
    %1 = vector.load %arg2[%c0_1, %c0_2] : memref<160x32xf32, #tpu.memory_space<vmem>>, vector<160x32xf32>
    %2 = arith.addf %0, %1 : vector<160x32xf32>
    %3 = arith.truncf %2 : vector<160x32xf32> to vector<160x32xbf16>
    %c0_3 = arith.constant 0 : index
    %c0_4 = arith.constant 0 : index
    %4 = vector.load %arg3[%c0_3, %c0_4] : memref<32x48xbf16, #tpu.memory_space<vmem>>, vector<32x48xbf16>
    %cst = arith.constant dense<0.000000e+00> : vector<160x48xf32>
    %5 = tpu.matmul %3, %4, %cst {dimension_numbers = #tpu.dot_dimension_numbers<[1], [0], [0], [1], [0, 0, 1, 1], [], []>} : vector<160x32xbf16>, vector<32x48xbf16>, vector<160x48xf32> -> vector<160x48xf32>
    %c0_5 = arith.constant 0 : index
    %c0_6 = arith.constant 0 : index
    %6 = vector.load %arg4[%c0_5, %c0_6] : memref<1x48xf32, #tpu.memory_space<vmem>>, vector<1x48xf32>
    %7 = vector.broadcast %6 : vector<1x48xf32> to vector<160x48xf32>
    %8 = arith.addf %5, %7 : vector<160x48xf32>
    %9 = vector.extract_strided_slice %8 {offsets = [0, 0], sizes = [160, 32], strides = [1, 1]} : vector<160x48xf32> to vector<160x32xf32>
    %c0_7 = arith.constant 0 : index
    %c0_8 = arith.constant 0 : index
    %10 = vector.load %arg7[%c0_7, %c0_8] : memref<160x32xf32, #tpu.memory_space<vmem>>, vector<160x32xf32>
    tpu.vector_store %arg7[%c0_7, %c0_8], %9 {strides = array<i32>} : memref<160x32xf32, #tpu.memory_space<vmem>>, vector<160x32xf32>,
    %11 = vector.extract_strided_slice %8 {offsets = [0, 32], sizes = [160, 16], strides = [1, 1]} : vector<160x48xf32> to vector<160x16xf32>
    %12 = vector.extract_strided_slice %11 {offsets = [0, 0], sizes = [160, 4], strides = [1, 1]} : vector<160x16xf32> to vector<160x4xf32>
    %cst_9 = arith.constant dense<0xFF800000> : vector<160xf32>
    %13 = vector.multi_reduction <maximumf>, %12, %cst_9 [1] : vector<160x4xf32> to vector<160xf32>
    %14 = vector.shape_cast %13 : vector<160xf32> to vector<160x1xf32>
    %15 = vector.broadcast %14 : vector<160x1xf32> to vector<160x4xf32>
    %16 = arith.subf %12, %15 : vector<160x4xf32>
    %17 = math.exp %16 : vector<160x4xf32>
    %cst_10 = arith.constant dense<0.000000e+00> : vector<160xf32>
    %18 = vector.multi_reduction <add>, %17, %cst_10 [1] : vector<160x4xf32> to vector<160xf32>
    %19 = vector.shape_cast %18 : vector<160xf32> to vector<160x1xf32>
    %20 = vector.broadcast %19 : vector<160x1xf32> to vector<160x4xf32>
    %21 = arith.divf %17, %20 : vector<160x4xf32>
    %c0_11 = arith.constant 0 : index
    %c0_12 = arith.constant 0 : index
    %22 = vector.load %arg8[%c0_11, %c0_12] : memref<160x16xf32, #tpu.memory_space<vmem>>, vector<160x4xf32>
    tpu.vector_store %arg8[%c0_11, %c0_12], %21 {strides = array<i32>} : memref<160x16xf32, #tpu.memory_space<vmem>>, vector<160x4xf32>,
    %23 = vector.extract_strided_slice %11 {offsets = [0, 4], sizes = [160, 4], strides = [1, 1]} : vector<160x16xf32> to vector<160x4xf32>
    %cst_13 = arith.constant dense<0xFF800000> : vector<160xf32>
    %24 = vector.multi_reduction <maximumf>, %23, %cst_13 [1] : vector<160x4xf32> to vector<160xf32>
    %25 = vector.shape_cast %24 : vector<160xf32> to vector<160x1xf32>
    %26 = vector.broadcast %25 : vector<160x1xf32> to vector<160x4xf32>
    %27 = arith.subf %23, %26 : vector<160x4xf32>
    %28 = math.exp %27 : vector<160x4xf32>
    %cst_14 = arith.constant dense<0.000000e+00> : vector<160xf32>
    %29 = vector.multi_reduction <add>, %28, %cst_14 [1] : vector<160x4xf32> to vector<160xf32>
    %30 = vector.shape_cast %29 : vector<160xf32> to vector<160x1xf32>
    %31 = vector.broadcast %30 : vector<160x1xf32> to vector<160x4xf32>
    %32 = arith.divf %28, %31 : vector<160x4xf32>
    %c0_15 = arith.constant 0 : index
    %c4 = arith.constant 4 : index
    %33 = vector.load %arg8[%c0_15, %c4] : memref<160x16xf32, #tpu.memory_space<vmem>>, vector<160x4xf32>
    tpu.vector_store %arg8[%c0_15, %c4], %32 {strides = array<i32>} : memref<160x16xf32, #tpu.memory_space<vmem>>, vector<160x4xf32>,
    %34 = vector.extract_strided_slice %11 {offsets = [0, 8], sizes = [160, 4], strides = [1, 1]} : vector<160x16xf32> to vector<160x4xf32>
    %cst_16 = arith.constant dense<0xFF800000> : vector<160xf32>
    %35 = vector.multi_reduction <maximumf>, %34, %cst_16 [1] : vector<160x4xf32> to vector<160xf32>
    %36 = vector.shape_cast %35 : vector<160xf32> to vector<160x1xf32>
    %37 = vector.broadcast %36 : vector<160x1xf32> to vector<160x4xf32>
    %38 = arith.subf %34, %37 : vector<160x4xf32>
    %39 = math.exp %38 : vector<160x4xf32>
    %cst_17 = arith.constant dense<0.000000e+00> : vector<160xf32>
    %40 = vector.multi_reduction <add>, %39, %cst_17 [1] : vector<160x4xf32> to vector<160xf32>
    %41 = vector.shape_cast %40 : vector<160xf32> to vector<160x1xf32>
    %42 = vector.broadcast %41 : vector<160x1xf32> to vector<160x4xf32>
    %43 = arith.divf %39, %42 : vector<160x4xf32>
    %c0_18 = arith.constant 0 : index
    %c8 = arith.constant 8 : index
    %44 = vector.load %arg8[%c0_18, %c8] : memref<160x16xf32, #tpu.memory_space<vmem>>, vector<160x4xf32>
    tpu.vector_store %arg8[%c0_18, %c8], %43 {strides = array<i32>} : memref<160x16xf32, #tpu.memory_space<vmem>>, vector<160x4xf32>,
    %45 = vector.extract_strided_slice %11 {offsets = [0, 12], sizes = [160, 4], strides = [1, 1]} : vector<160x16xf32> to vector<160x4xf32>
    %cst_19 = arith.constant dense<0xFF800000> : vector<160xf32>
    %46 = vector.multi_reduction <maximumf>, %45, %cst_19 [1] : vector<160x4xf32> to vector<160xf32>
    %47 = vector.shape_cast %46 : vector<160xf32> to vector<160x1xf32>
    %48 = vector.broadcast %47 : vector<160x1xf32> to vector<160x4xf32>
    %49 = arith.subf %45, %48 : vector<160x4xf32>
    %50 = math.exp %49 : vector<160x4xf32>
    %cst_20 = arith.constant dense<0.000000e+00> : vector<160xf32>
    %51 = vector.multi_reduction <add>, %50, %cst_20 [1] : vector<160x4xf32> to vector<160xf32>
    %52 = vector.shape_cast %51 : vector<160xf32> to vector<160x1xf32>
    %53 = vector.broadcast %52 : vector<160x1xf32> to vector<160x4xf32>
    %54 = arith.divf %50, %53 : vector<160x4xf32>
    %c0_21 = arith.constant 0 : index
    %c12 = arith.constant 12 : index
    %55 = vector.load %arg8[%c0_21, %c12] : memref<160x16xf32, #tpu.memory_space<vmem>>, vector<160x4xf32>
    tpu.vector_store %arg8[%c0_21, %c12], %54 {strides = array<i32>} : memref<160x16xf32, #tpu.memory_space<vmem>>, vector<160x4xf32>,
    %56 = arith.truncf %0 : vector<160x32xf32> to vector<160x32xbf16>
    %c0_22 = arith.constant 0 : index
    %c0_23 = arith.constant 0 : index
    %57 = vector.load %arg5[%c0_22, %c0_23] : memref<32x32xbf16, #tpu.memory_space<vmem>>, vector<32x32xbf16>
    %cst_24 = arith.constant dense<0.000000e+00> : vector<160x32xf32>
    %58 = tpu.matmul %56, %57, %cst_24 {dimension_numbers = #tpu.dot_dimension_numbers<[1], [0], [0], [1], [0, 0, 1, 1], [], []>} : vector<160x32xbf16>, vector<32x32xbf16>, vector<160x32xf32> -> vector<160x32xf32>
    %c0_25 = arith.constant 0 : index
    %c0_26 = arith.constant 0 : index
    %59 = vector.load %arg6[%c0_25, %c0_26] : memref<1x32xf32, #tpu.memory_space<vmem>>, vector<1x32xf32>
    %60 = vector.broadcast %59 : vector<1x32xf32> to vector<160x32xf32>
    %61 = arith.addf %58, %60 : vector<160x32xf32>
    %c0_27 = arith.constant 0 : index
    %c0_28 = arith.constant 0 : index
    %62 = vector.load %arg9[%c0_27, %c0_28] : memref<160x32xf32, #tpu.memory_space<vmem>>, vector<160x32xf32>
    tpu.vector_store %arg9[%c0_27, %c0_28], %61 {strides = array<i32>} : memref<160x32xf32, #tpu.memory_space<vmem>>, vector<160x32xf32>,
    return
  }
  func.func @transform_0(%arg0: i32) -> (i32, i32) {
    %c0_i32 = arith.constant 0 : i32
    %c0_i32_0 = arith.constant 0 : i32
    return %arg0, %c0_i32 : i32, i32
  }
  func.func @transform_1(%arg0: i32) -> (i32, i32) {
    %c0_i32 = arith.constant 0 : i32
    %c0_i32_0 = arith.constant 0 : i32
    return %arg0, %c0_i32 : i32, i32
  }
  func.func @transform_2(%arg0: i32) -> (i32, i32) {
    %c0_i32 = arith.constant 0 : i32
    %c0_i32_0 = arith.constant 0 : i32
    %c0_i32_1 = arith.constant 0 : i32
    return %c0_i32, %c0_i32_0 : i32, i32
  }
  func.func @transform_3(%arg0: i32) -> (i32, i32) {
    %c0_i32 = arith.constant 0 : i32
    %c0_i32_0 = arith.constant 0 : i32
    %c0_i32_1 = arith.constant 0 : i32
    return %c0_i32, %c0_i32_0 : i32, i32
  }
  func.func @transform_4(%arg0: i32) -> (i32, i32) {
    %c0_i32 = arith.constant 0 : i32
    %c0_i32_0 = arith.constant 0 : i32
    %c0_i32_1 = arith.constant 0 : i32
    return %c0_i32, %c0_i32_0 : i32, i32
  }
  func.func @transform_5(%arg0: i32) -> (i32, i32) {
    %c0_i32 = arith.constant 0 : i32
    %c0_i32_0 = arith.constant 0 : i32
    %c0_i32_1 = arith.constant 0 : i32
    return %c0_i32, %c0_i32_0 : i32, i32
  }
  func.func @transform_6(%arg0: i32) -> (i32, i32) {
    %c0_i32 = arith.constant 0 : i32
    %c0_i32_0 = arith.constant 0 : i32
    return %arg0, %c0_i32 : i32, i32
  }
  func.func @transform_7(%arg0: i32) -> (i32, i32) {
    %c0_i32 = arith.constant 0 : i32
    %c0_i32_0 = arith.constant 0 : i32
    return %arg0, %c0_i32 : i32, i32
  }
  func.func @transform_8(%arg0: i32) -> (i32, i32) {
    %c0_i32 = arith.constant 0 : i32
    %c0_i32_0 = arith.constant 0 : i32
    return %arg0, %c0_i32 : i32, i32
  }
}

</mosaic_0001>

<llo_original>
// kernel: deformable_encoder_forward.6
$region0: #{deformable_encoder_forward.6}
  #allocation0 [shape = 'u32[]', space=smem, size = 0x4, offset = 0x4, fixed_abs, tag = 'smem constant byte address 0x4 - core index']
  #allocation1 [shape = 'u32[144,128]{1,0:T(1,128)}', space=vmem, size = 0x12000, scoped, tag = 'internal scratch']
  %s0 = inlined_call_operand.vmem [shape: f32[160,32], index: 0, kind: input, shape index: {}]
  %s1 = inlined_call_operand.vmem [shape: f32[160,32], index: 1, kind: input, shape index: {}]
  %s2 = inlined_call_operand.vmem [shape: bf16[32,48], index: 2, kind: input, shape index: {}]
  %s3 = inlined_call_operand.vmem [shape: f32[1,48], index: 3, kind: input, shape index: {}]
  %s4 = inlined_call_operand.vmem [shape: bf16[32,32], index: 4, kind: input, shape index: {}]
  %s5 = inlined_call_operand.hbm [shape: f32[1,32], index: 5, kind: input, shape index: {}]
  %s6 = inlined_call_operand.vmem [shape: f32[160,32], index: 6, kind: output, shape index: {0}]
  %s7 = inlined_call_operand.vmem [shape: f32[160,16], index: 7, kind: output, shape index: {1}]
  %s8 = inlined_call_operand.vmem [shape: f32[160,32], index: 8, kind: output, shape index: {2}]
  %9 = xla_tuple %s6, %s7, %s8
  %s10 = sld [smem:[#allocation0]]
  $region54: #{deformable_encoder_forward.6} parent=0
    _
  %s12 = ssub.s32 1, %s10
  %s13 = scalar_select 0, %s12, %s10
  $region1: #{deformable_encoder_forward.6} parent=0
    #allocation2 [shape = 'u8[512]{0}', space=vmem, size = 0x400, scoped, tag = 'input window, operand 5, single buffered']
    #allocation3 [shape = 's32[1]{0}', space=sflag, size = 0x4, scoped, tag = 'scoped memory for deformable_encoder_forward.6']
    %14 = vsyncpa [#allocation3], 0
    // Predicated region
    $region2: #{deformable_encoder_forward.6} parent=1 // pred_check
      _
    $region3: #{deformable_encoder_forward.6} parent=1 // pred_check_branch
      %16 = sbr.rel (0) target = $region5
    $region4: #{deformable_encoder_forward.6} parent=1 // pred_region
      _
    $region5: #{deformable_encoder_forward.6} parent=1 // pred_fallthru
      _
    // Predicated region
    $region6: #{deformable_encoder_forward.6} parent=1 // pred_check
      _
    $region7: #{deformable_encoder_forward.6} parent=1 // pred_check_branch
      %18 = sbr.rel (0) target = $region9
    $region8: #{deformable_encoder_forward.6} parent=1 // pred_region
      _
    $region9: #{deformable_encoder_forward.6} parent=1 // pred_fallthru
      _
    // Predicated region
    $region10: #{deformable_encoder_forward.6} parent=1 // pred_check
      _
    $region11: #{deformable_encoder_forward.6} parent=1 // pred_check_branch
      %20 = sbr.rel (0) target = $region13
    $region12: #{deformable_encoder_forward.6} parent=1 // pred_region
      _
    $region13: #{deformable_encoder_forward.6} parent=1 // pred_fallthru
      _
    // Predicated region
    $region14: #{deformable_encoder_forward.6} parent=1 // pred_check
      _
    $region15: #{deformable_encoder_forward.6} parent=1 // pred_check_branch
      %22 = sbr.rel (0) target = $region17
    $region16: #{deformable_encoder_forward.6} parent=1 // pred_region
      _
    $region17: #{deformable_encoder_forward.6} parent=1 // pred_fallthru
      _
    // Predicated region
    $region18: #{deformable_encoder_forward.6} parent=1 // pred_check
      _
    $region19: #{deformable_encoder_forward.6} parent=1 // pred_check_branch
      %24 = sbr.rel (0) target = $region21
    $region20: #{deformable_encoder_forward.6} parent=1 // pred_region
      _
    $region21: #{deformable_encoder_forward.6} parent=1 // pred_fallthru
      _
    // Predicated region
    $region22: #{deformable_encoder_forward.6} parent=1 // pred_check
      _
    $region23: #{deformable_encoder_forward.6} parent=1 // pred_check_branch
      %26 = sbr.rel (0) target = $region25
    $region24: #{deformable_encoder_forward.6} parent=1 // pred_region
      %s28 = ssub.s32 16, 16
      %29 = vsyncadd [#allocation3], %s28
      %s31 = sshll.u32 [#allocation2], 4
      %s32 = int_to_ptr.vmem [resolvable:$true] %s31
      %34 = dma.hbm_to_vmem [thread:$0]  %s5, 16, %s32, [#allocation3]
    $region25: #{deformable_encoder_forward.6} parent=1 // pred_fallthru
      _
    // Predicated region
    $region26: #{deformable_encoder_forward.6} parent=1 // pred_check
      _
    $region27: #{deformable_encoder_forward.6} parent=1 // pred_check_branch
      %36 = sbr.rel (0) target = $region29
    $region28: #{deformable_encoder_forward.6} parent=1 // pred_region
      %37 = dma.done [#allocation3], 16
    $region29: #{deformable_encoder_forward.6} parent=1 // pred_fallthru
      _
    %v39 = vld [vmem:[%s0] sm:$0xff]
    %v40 = vld [vmem:[%s0 + $0x8] sm:$0xff]
    %v41 = vld [vmem:[%s0 + $0x10] sm:$0xff]
    %v42 = vld [vmem:[%s0 + $0x18] sm:$0xff]
    %v43 = vld [vmem:[%s0 + $0x20] sm:$0xff]
    %v44 = vld [vmem:[%s0 + $0x28] sm:$0xff]
    %v45 = vld [vmem:[%s0 + $0x30] sm:$0xff]
    %v46 = vld [vmem:[%s0 + $0x38] sm:$0xff]
    %v47 = vld [vmem:[%s0 + $0x40] sm:$0xff]
    %v48 = vld [vmem:[%s0 + $0x48] sm:$0xff]
    %v49 = vld [vmem:[%s0 + $0x50] sm:$0xff]
    %v50 = vld [vmem:[%s0 + $0x58] sm:$0xff]
    %v51 = vld [vmem:[%s0 + $0x60] sm:$0xff]
    %v52 = vld [vmem:[%s0 + $0x68] sm:$0xff]
    %v53 = vld [vmem:[%s0 + $0x70] sm:$0xff]
    %v54 = vld [vmem:[%s0 + $0x78] sm:$0xff]
    %v55 = vld [vmem:[%s0 + $0x80] sm:$0xff]
    %v56 = vld [vmem:[%s0 + $0x88] sm:$0xff]
    %v57 = vld [vmem:[%s0 + $0x90] sm:$0xff]
    %v58 = vld [vmem:[%s0 + $0x98] sm:$0xff]
    %v59 = vld [vmem:[%s1] sm:$0xff]
    %v60 = vld [vmem:[%s1 + $0x8] sm:$0xff]
    %v61 = vld [vmem:[%s1 + $0x10] sm:$0xff]
    %v62 = vld [vmem:[%s1 + $0x18] sm:$0xff]
    %v63 = vld [vmem:[%s1 + $0x20] sm:$0xff]
    %v64 = vld [vmem:[%s1 + $0x28] sm:$0xff]
    %v65 = vld [vmem:[%s1 + $0x30] sm:$0xff]
    %v66 = vld [vmem:[%s1 + $0x38] sm:$0xff]
    %v67 = vld [vmem:[%s1 + $0x40] sm:$0xff]
    %v68 = vld [vmem:[%s1 + $0x48] sm:$0xff]
    %v69 = vld [vmem:[%s1 + $0x50] sm:$0xff]
    %v70 = vld [vmem:[%s1 + $0x58] sm:$0xff]
    %v71 = vld [vmem:[%s1 + $0x60] sm:$0xff]
    %v72 = vld [vmem:[%s1 + $0x68] sm:$0xff]
    %v73 = vld [vmem:[%s1 + $0x70] sm:$0xff]
    %v74 = vld [vmem:[%s1 + $0x78] sm:$0xff]
    %v75 = vld [vmem:[%s1 + $0x80] sm:$0xff]
    %v76 = vld [vmem:[%s1 + $0x88] sm:$0xff]
    %v77 = vld [vmem:[%s1 + $0x90] sm:$0xff]
    %v78 = vld [vmem:[%s1 + $0x98] sm:$0xff]
    %v79 = vadd.f32 %v39, %v59
    %v80 = vadd.f32 %v40, %v60
    %v81 = vadd.f32 %v41, %v61
    %v82 = vadd.f32 %v42, %v62
    %v83 = vadd.f32 %v43, %v63
    %v84 = vadd.f32 %v44, %v64
    %v85 = vadd.f32 %v45, %v65
    %v86 = vadd.f32 %v46, %v66
    %v87 = vadd.f32 %v47, %v67
    %v88 = vadd.f32 %v48, %v68
    %v89 = vadd.f32 %v49, %v69
    %v90 = vadd.f32 %v50, %v70
    %v91 = vadd.f32 %v51, %v71
    %v92 = vadd.f32 %v52, %v72
    %v93 = vadd.f32 %v53, %v73
    %v94 = vadd.f32 %v54, %v74
    %v95 = vadd.f32 %v55, %v75
    %v96 = vadd.f32 %v56, %v76
    %v97 = vadd.f32 %v57, %v77
    %v98 = vadd.f32 %v58, %v78
    %v99 = vpack.c.bf16 %v80, %v79
    %v100 = vpack.c.bf16 %v82, %v81
    %v101 = vpack.c.bf16 %v84, %v83
    %v102 = vpack.c.bf16 %v86, %v85
    %v103 = vpack.c.bf16 %v88, %v87
    %v104 = vpack.c.bf16 %v90, %v89
    %v105 = vpack.c.bf16 %v92, %v91
    %v106 = vpack.c.bf16 %v94, %v93
    %v107 = vpack.c.bf16 %v96, %v95
    %v108 = vpack.c.bf16 %v98, %v97
    %v109 = vld [vmem:[%s2] sm:$0xf]
    %v110 = vld [vmem:[%s2 + $0x4] sm:$0xf]
    %v111 = vld [vmem:[%s2 + $0x8] sm:$0xf]
    %v112 = vld [vmem:[%s2 + $0xc] sm:$0xf]
    %v113 = vld [vmem:[%s3] sm:$0x1]
    %v115 = vlaneseq
    %v116 = vshrl.u32 %v115, 7
    %v117 = vsub.s32 0, %v116
    %v118 = vrot.slane %v113, %v117
    %v124 = vunpack.c.l.b16 %v109
    %v125 = vunpack.c.l.b16 %v110
    %v126 = vunpack.c.l.b16 %v111
    %v127 = vunpack.c.l.b16 %v112
    %v128 = vpack.c.b16 %v125, %v124
    %v129 = vpack.c.b16 %v127, %v126
    %vm132 = vcmask 261120
    %v134 = vsel %vm132, %v99, 0
    %v137 = vsel %vm132, %v100, 0
    %v140 = vsel %vm132, %v101, 0
    %v143 = vsel %vm132, %v102, 0
    %v146 = vsel %vm132, %v103, 0
    %v149 = vsel %vm132, %v104, 0
    %v152 = vsel %vm132, %v105, 0
    %v155 = vsel %vm132, %v106, 0
    %v158 = vsel %vm132, %v107, 0
    %v161 = vsel %vm132, %v108, 0
    %163 = vmatprep.subr.bf16.mxu0 0
    %164 = vmatpush1.bf16.msra.mxu0 %v128
    %165 = vmatprep.subr.bf16.mxu0 0
    %166 = vmatpush1.bf16.msra.mxu0 %v129
    %167 = vmatprep.subr.bf16.mxu0 0
    %168 = vmatpush1.bf16.msra.mxu0 0
    %169 = vmatprep.subr.bf16.mxu0 0
    %170 = vmatpush1.bf16.msra.mxu0 0
    %171 = vmatprep.subr.bf16.mxu0 0
    %172 = vmatpush1.bf16.msra.mxu0 0
    %173 = vmatprep.subr.bf16.mxu0 0
    %174 = vmatpush1.bf16.msra.mxu0 0
    %175 = vmatprep.subr.bf16.mxu0 0
    %176 = vmatpush1.bf16.msra.mxu0 0
    %177 = vmatprep.subr.bf16.mxu0 0
    %178 = vmatpush1.bf16.msra.mxu0 0
    %179 = vmatprep.subr.bf16.mxu0 0
    %180 = vmatpush1.bf16.msra.mxu0 0
    %181 = vmatprep.subr.bf16.mxu0 0
    %182 = vmatpush1.bf16.msra.mxu0 0
    %183 = vmatprep.subr.bf16.mxu0 0
    %184 = vmatpush1.bf16.msra.mxu0 0
    %185 = vmatprep.subr.bf16.mxu0 0
    %186 = vmatpush1.bf16.msra.mxu0 0
    %187 = vmatprep.subr.bf16.mxu0 0
    %188 = vmatpush1.bf16.msra.mxu0 0
    %189 = vmatprep.subr.bf16.mxu0 0
    %190 = vmatpush1.bf16.msra.mxu0 0
    %191 = vmatprep.subr.bf16.mxu0 0
    %192 = vmatpush1.bf16.msra.mxu0 0
    %193 = vmatprep.subr.bf16.mxu0 0
    %194 = vmatpush1.bf16.msra.mxu0 0
    %195 = vmatprep.mubr.bf16.mxu0 0
    %196 = vmatmul.mubr.bf16.gmra.mrb[0].mxu0 %v134
    %v197 = vpop.f32.mrb[0].mxu0
    %v198 = vadd.f32 %v118, %v197
    %v199 = vpop.f32.mrb[0].mxu0
    %v200 = vpop.f32.mrb[0].mxu0
    %v201 = vadd.f32 %v118, %v200
    %v202 = vpop.f32.mrb[0].mxu0
    %203 = vmatprep.mubr.bf16.mxu0 0
    %204 = vmatmul.mubr.bf16.gmra.mrb[0].mxu0 %v137
    %v205 = vpop.f32.mrb[0].mxu0
    %v206 = vadd.f32 %v118, %v205
    %v207 = vpop.f32.mrb[0].mxu0
    %v208 = vpop.f32.mrb[0].mxu0
    %v209 = vadd.f32 %v118, %v208
    %v210 = vpop.f32.mrb[0].mxu0
    %211 = vmatprep.mubr.bf16.mxu0 0
    %212 = vmatmul.mubr.bf16.gmra.mrb[0].mxu0 %v140
    %v213 = vpop.f32.mrb[0].mxu0
    %v214 = vadd.f32 %v118, %v213
    %v215 = vpop.f32.mrb[0].mxu0
    %v216 = vpop.f32.mrb[0].mxu0
    %v217 = vadd.f32 %v118, %v216
    %v218 = vpop.f32.mrb[0].mxu0
    %219 = vmatprep.mubr.bf16.mxu0 0
    %220 = vmatmul.mubr.bf16.gmra.mrb[0].mxu0 %v143
    %v221 = vpop.f32.mrb[0].mxu0
    %v222 = vadd.f32 %v118, %v221
    %v223 = vpop.f32.mrb[0].mxu0
    %v224 = vpop.f32.mrb[0].mxu0
    %v225 = vadd.f32 %v118, %v224
    %v226 = vpop.f32.mrb[0].mxu0
    %227 = vmatprep.mubr.bf16.mxu0 0
    %228 = vmatmul.mubr.bf16.gmra.mrb[0].mxu0 %v146
    %v229 = vpop.f32.mrb[0].mxu0
    %v230 = vadd.f32 %v118, %v229
    %v231 = vpop.f32.mrb[0].mxu0
    %v232 = vpop.f32.mrb[0].mxu0
    %v233 = vadd.f32 %v118, %v232
    %v234 = vpop.f32.mrb[0].mxu0
    %235 = vmatprep.mubr.bf16.mxu0 0
    %236 = vmatmul.mubr.bf16.gmra.mrb[0].mxu0 %v149
    %v237 = vpop.f32.mrb[0].mxu0
    %v238 = vadd.f32 %v118, %v237
    %v239 = vpop.f32.mrb[0].mxu0
    %v240 = vpop.f32.mrb[0].mxu0
    %v241 = vadd.f32 %v118, %v240
    %v242 = vpop.f32.mrb[0].mxu0
    %243 = vmatprep.mubr.bf16.mxu0 0
    %244 = vmatmul.mubr.bf16.gmra.mrb[0].mxu0 %v152
    %v245 = vpop.f32.mrb[0].mxu0
    %v246 = vadd.f32 %v118, %v245
    %v247 = vpop.f32.mrb[0].mxu0
    %v248 = vpop.f32.mrb[0].mxu0
    %v249 = vadd.f32 %v118, %v248
    %v250 = vpop.f32.mrb[0].mxu0
    %251 = vmatprep.mubr.bf16.mxu0 0
    %252 = vmatmul.mubr.bf16.gmra.mrb[0].mxu0 %v155
    %v253 = vpop.f32.mrb[0].mxu0
    %v254 = vadd.f32 %v118, %v253
    %v255 = vpop.f32.mrb[0].mxu0
    %v256 = vpop.f32.mrb[0].mxu0
    %v257 = vadd.f32 %v118, %v256
    %v258 = vpop.f32.mrb[0].mxu0
    %259 = vmatprep.mubr.bf16.mxu0 0
    %260 = vmatmul.mubr.bf16.gmra.mrb[0].mxu0 %v158
    %v261 = vpop.f32.mrb[0].mxu0
    %v262 = vadd.f32 %v118, %v261
    %v263 = vpop.f32.mrb[0].mxu0
    %v264 = vpop.f32.mrb[0].mxu0
    %v265 = vadd.f32 %v118, %v264
    %v266 = vpop.f32.mrb[0].mxu0
    %267 = vmatprep.mubr.bf16.mxu0 0
    %268 = vmatmul.mubr.bf16.gmra.mrb[0].mxu0 %v161
    %v269 = vpop.f32.mrb[0].mxu0
    %v270 = vadd.f32 %v118, %v269
    %v271 = vpop.f32.mrb[0].mxu0
    %v272 = vpop.f32.mrb[0].mxu0
    %v273 = vadd.f32 %v118, %v272
    %v274 = vpop.f32.mrb[0].mxu0
    %275 = vdwg.mxu0
    %276 = vst.msk [vmem:[%s6] sm:$0xff] %vm132, %v198
    %277 = vst.msk [vmem:[%s6 + $0x8] sm:$0xff] %vm132, %v201
    %278 = vst.msk [vmem:[%s6 + $0x10] sm:$0xff] %vm132, %v206
    %279 = vst.msk [vmem:[%s6 + $0x18] sm:$0xff] %vm132, %v209
    %280 = vst.msk [vmem:[%s6 + $0x20] sm:$0xff] %vm132, %v214
    %281 = vst.msk [vmem:[%s6 + $0x28] sm:$0xff] %vm132, %v217
    %282 = vst.msk [vmem:[%s6 + $0x30] sm:$0xff] %vm132, %v222
    %283 = vst.msk [vmem:[%s6 + $0x38] sm:$0xff] %vm132, %v225
    %284 = vst.msk [vmem:[%s6 + $0x40] sm:$0xff] %vm132, %v230
    %285 = vst.msk [vmem:[%s6 + $0x48] sm:$0xff] %vm132, %v233
    %286 = vst.msk [vmem:[%s6 + $0x50] sm:$0xff] %vm132, %v238
    %287 = vst.msk [vmem:[%s6 + $0x58] sm:$0xff] %vm132, %v241
    %288 = vst.msk [vmem:[%s6 + $0x60] sm:$0xff] %vm132, %v246
    %289 = vst.msk [vmem:[%s6 + $0x68] sm:$0xff] %vm132, %v249
    %290 = vst.msk [vmem:[%s6 + $0x70] sm:$0xff] %vm132, %v254
    %291 = vst.msk [vmem:[%s6 + $0x78] sm:$0xff] %vm132, %v257
    %292 = vst.msk [vmem:[%s6 + $0x80] sm:$0xff] %vm132, %v262
    %293 = vst.msk [vmem:[%s6 + $0x88] sm:$0xff] %vm132, %v265
    %294 = vst.msk [vmem:[%s6 + $0x90] sm:$0xff] %vm132, %v270
    %295 = vst.msk [vmem:[%s6 + $0x98] sm:$0xff] %vm132, %v273
    %vm296 = vcmask 294144
    %v297 = vsel %vm296, %v198, -inf
    %298 = vmax.xlane.f32.xlu0 %v297
    %v299 = vpop.xlane.xlu0 %298
    %v300 = vsel %vm296, %v201, -inf
    %301 = vmax.xlane.f32.xlu0 %v300
    %v302 = vpop.xlane.xlu0 %301
    %v303 = vsel %vm296, %v206, -inf
    %304 = vmax.xlane.f32.xlu0 %v303
    %v305 = vpop.xlane.xlu0 %304
    %v306 = vsel %vm296, %v209, -inf
    %307 = vmax.xlane.f32.xlu0 %v306
    %v308 = vpop.xlane.xlu0 %307
    %v309 = vsel %vm296, %v214, -inf
    %310 = vmax.xlane.f32.xlu0 %v309
    %v311 = vpop.xlane.xlu0 %310
    %v312 = vsel %vm296, %v217, -inf
    %313 = vmax.xlane.f32.xlu0 %v312
    %v314 = vpop.xlane.xlu0 %313
    %v315 = vsel %vm296, %v222, -inf
    %316 = vmax.xlane.f32.xlu0 %v315
    %v317 = vpop.xlane.xlu0 %316
    %v318 = vsel %vm296, %v225, -inf
    %319 = vmax.xlane.f32.xlu0 %v318
    %v320 = vpop.xlane.xlu0 %319
    %v321 = vsel %vm296, %v230, -inf
    %322 = vmax.xlane.f32.xlu0 %v321
    %v323 = vpop.xlane.xlu0 %322
    %v324 = vsel %vm296, %v233, -inf
    %325 = vmax.xlane.f32.xlu0 %v324
    %v326 = vpop.xlane.xlu0 %325
    %v327 = vsel %vm296, %v238, -inf
    %328 = vmax.xlane.f32.xlu0 %v327
    %v329 = vpop.xlane.xlu0 %328
    %v330 = vsel %vm296, %v241, -inf
    %331 = vmax.xlane.f32.xlu0 %v330
    %v332 = vpop.xlane.xlu0 %331
    %v333 = vsel %vm296, %v246, -inf
    %334 = vmax.xlane.f32.xlu0 %v333
    %v335 = vpop.xlane.xlu0 %334
    %v336 = vsel %vm296, %v249, -inf
    %337 = vmax.xlane.f32.xlu0 %v336
    %v338 = vpop.xlane.xlu0 %337
    %v339 = vsel %vm296, %v254, -inf
    %340 = vmax.xlane.f32.xlu0 %v339
    %v341 = vpop.xlane.xlu0 %340
    %v342 = vsel %vm296, %v257, -inf
    %343 = vmax.xlane.f32.xlu0 %v342
    %v344 = vpop.xlane.xlu0 %343
    %v345 = vsel %vm296, %v262, -inf
    %346 = vmax.xlane.f32.xlu0 %v345
    %v347 = vpop.xlane.xlu0 %346
    %v348 = vsel %vm296, %v265, -inf
    %349 = vmax.xlane.f32.xlu0 %v348
    %v350 = vpop.xlane.xlu0 %349
    %v351 = vsel %vm296, %v270, -inf
    %352 = vmax.xlane.f32.xlu0 %v351
    %v353 = vpop.xlane.xlu0 %352
    %v354 = vsel %vm296, %v273, -inf
    %355 = vmax.xlane.f32.xlu0 %v354
    %v356 = vpop.xlane.xlu0 %355
    %v357 = vsub.f32 %v198, %v299
    %v358 = vsub.f32 %v201, %v302
    %v359 = vsub.f32 %v206, %v305
    %v360 = vsub.f32 %v209, %v308
    %v361 = vsub.f32 %v214, %v311
    %v362 = vsub.f32 %v217, %v314
    %v363 = vsub.f32 %v222, %v317
    %v364 = vsub.f32 %v225, %v320
    %v365 = vsub.f32 %v230, %v323
    %v366 = vsub.f32 %v233, %v326
    %v367 = vsub.f32 %v238, %v329
    %v368 = vsub.f32 %v241, %v332
    %v369 = vsub.f32 %v246, %v335
    %v370 = vsub.f32 %v249, %v338
    %v371 = vsub.f32 %v254, %v341
    %v372 = vsub.f32 %v257, %v344
    %v373 = vsub.f32 %v262, %v347
    %v374 = vsub.f32 %v265, %v350
    %v375 = vsub.f32 %v270, %v353
    %v376 = vsub.f32 %v273, %v356
    %v377 = vmul.f32 %v357, 1.442695
    %v378 = vpow.pop %v377
    %v379 = vmul.f32 %v358, 1.442695
    %v380 = vpow.pop %v379
    %v381 = vmul.f32 %v359, 1.442695
    %v382 = vpow.pop %v381
    %v383 = vmul.f32 %v360, 1.442695
    %v384 = vpow.pop %v383
    %v385 = vmul.f32 %v361, 1.442695
    %v386 = vpow.pop %v385
    %v387 = vmul.f32 %v362, 1.442695
    %v388 = vpow.pop %v387
    %v389 = vmul.f32 %v363, 1.442695
    %v390 = vpow.pop %v389
    %v391 = vmul.f32 %v364, 1.442695
    %v392 = vpow.pop %v391
    %v393 = vmul.f32 %v365, 1.442695
    %v394 = vpow.pop %v393
    %v395 = vmul.f32 %v366, 1.442695
    %v396 = vpow.pop %v395
    %v397 = vmul.f32 %v367, 1.442695
    %v398 = vpow.pop %v397
    %v399 = vmul.f32 %v368, 1.442695
    %v400 = vpow.pop %v399
    %v401 = vmul.f32 %v369, 1.442695
    %v402 = vpow.pop %v401
    %v403 = vmul.f32 %v370, 1.442695
    %v404 = vpow.pop %v403
    %v405 = vmul.f32 %v371, 1.442695
    %v406 = vpow.pop %v405
    %v407 = vmul.f32 %v372, 1.442695
    %v408 = vpow.pop %v407
    %v409 = vmul.f32 %v373, 1.442695
    %v410 = vpow.pop %v409
    %v411 = vmul.f32 %v374, 1.442695
    %v412 = vpow.pop %v411
    %v413 = vmul.f32 %v375, 1.442695
    %v414 = vpow.pop %v413
    %v415 = vmul.f32 %v376, 1.442695
    %v416 = vpow.pop %v415
    %437 = vrot.lane.b32.xlu0 %v378, 96
    %v438 = vpop.permute.xlu0 %437
    %439 = vrot.lane.b32.xlu0 %v380, 96
    %v440 = vpop.permute.xlu0 %439
    %441 = vrot.lane.b32.xlu0 %v382, 96
    %v442 = vpop.permute.xlu0 %441
    %443 = vrot.lane.b32.xlu0 %v384, 96
    %v444 = vpop.permute.xlu0 %443
    %445 = vrot.lane.b32.xlu0 %v386, 96
    %v446 = vpop.permute.xlu0 %445
    %447 = vrot.lane.b32.xlu0 %v388, 96
    %v448 = vpop.permute.xlu0 %447
    %449 = vrot.lane.b32.xlu0 %v390, 96
    %v450 = vpop.permute.xlu0 %449
    %451 = vrot.lane.b32.xlu0 %v392, 96
    %v452 = vpop.permute.xlu0 %451
    %453 = vrot.lane.b32.xlu0 %v394, 96
    %v454 = vpop.permute.xlu0 %453
    %455 = vrot.lane.b32.xlu0 %v396, 96
    %v456 = vpop.permute.xlu0 %455
    %457 = vrot.lane.b32.xlu0 %v398, 96
    %v458 = vpop.permute.xlu0 %457
    %459 = vrot.lane.b32.xlu0 %v400, 96
    %v460 = vpop.permute.xlu0 %459
    %461 = vrot.lane.b32.xlu0 %v402, 96
    %v462 = vpop.permute.xlu0 %461
    %463 = vrot.lane.b32.xlu0 %v404, 96
    %v464 = vpop.permute.xlu0 %463
    %465 = vrot.lane.b32.xlu0 %v406, 96
    %v466 = vpop.permute.xlu0 %465
    %467 = vrot.lane.b32.xlu0 %v408, 96
    %v468 = vpop.permute.xlu0 %467
    %469 = vrot.lane.b32.xlu0 %v410, 96
    %v470 = vpop.permute.xlu0 %469
    %471 = vrot.lane.b32.xlu0 %v412, 96
    %v472 = vpop.permute.xlu0 %471
    %473 = vrot.lane.b32.xlu0 %v414, 96
    %v474 = vpop.permute.xlu0 %473
    %475 = vrot.lane.b32.xlu0 %v416, 96
    %v476 = vpop.permute.xlu0 %475
    %vm497 = vcmask 31744
    %v498 = vsel %vm497, %v438, 0.0
    %499 = vadd.xlane.f32.xlu0 %v498
    %v500 = vpop.xlane.xlu0 %499
    %v501 = vsel %vm497, %v440, 0.0
    %502 = vadd.xlane.f32.xlu0 %v501
    %v503 = vpop.xlane.xlu0 %502
    %v504 = vsel %vm497, %v442, 0.0
    %505 = vadd.xlane.f32.xlu0 %v504
    %v506 = vpop.xlane.xlu0 %505
    %v507 = vsel %vm497, %v444, 0.0
    %508 = vadd.xlane.f32.xlu0 %v507
    %v509 = vpop.xlane.xlu0 %508
    %v510 = vsel %vm497, %v446, 0.0
    %511 = vadd.xlane.f32.xlu0 %v510
    %v512 = vpop.xlane.xlu0 %511
    %v513 = vsel %vm497, %v448, 0.0
    %514 = vadd.xlane.f32.xlu0 %v513
    %v515 = vpop.xlane.xlu0 %514
    %v516 = vsel %vm497, %v450, 0.0
    %517 = vadd.xlane.f32.xlu0 %v516
    %v518 = vpop.xlane.xlu0 %517
    %v519 = vsel %vm497, %v452, 0.0
    %520 = vadd.xlane.f32.xlu0 %v519
    %v521 = vpop.xlane.xlu0 %520
    %v522 = vsel %vm497, %v454, 0.0
    %523 = vadd.xlane.f32.xlu0 %v522
    %v524 = vpop.xlane.xlu0 %523
    %v525 = vsel %vm497, %v456, 0.0
    %526 = vadd.xlane.f32.xlu0 %v525
    %v527 = vpop.xlane.xlu0 %526
    %v528 = vsel %vm497, %v458, 0.0
    %529 = vadd.xlane.f32.xlu0 %v528
    %v530 = vpop.xlane.xlu0 %529
    %v531 = vsel %vm497, %v460, 0.0
    %532 = vadd.xlane.f32.xlu0 %v531
    %v533 = vpop.xlane.xlu0 %532
    %v534 = vsel %vm497, %v462, 0.0
    %535 = vadd.xlane.f32.xlu0 %v534
    %v536 = vpop.xlane.xlu0 %535
    %v537 = vsel %vm497, %v464, 0.0
    %538 = vadd.xlane.f32.xlu0 %v537
    %v539 = vpop.xlane.xlu0 %538
    %v540 = vsel %vm497, %v466, 0.0
    %541 = vadd.xlane.f32.xlu0 %v540
    %v542 = vpop.xlane.xlu0 %541
    %v543 = vsel %vm497, %v468, 0.0
    %544 = vadd.xlane.f32.xlu0 %v543
    %v545 = vpop.xlane.xlu0 %544
    %v546 = vsel %vm497, %v470, 0.0
    %547 = vadd.xlane.f32.xlu0 %v546
    %v548 = vpop.xlane.xlu0 %547
    %v549 = vsel %vm497, %v472, 0.0
    %550 = vadd.xlane.f32.xlu0 %v549
    %v551 = vpop.xlane.xlu0 %550
    %v552 = vsel %vm497, %v474, 0.0
    %553 = vadd.xlane.f32.xlu0 %v552
    %v554 = vpop.xlane.xlu0 %553
    %v555 = vsel %vm497, %v476, 0.0
    %556 = vadd.xlane.f32.xlu0 %v555
    %v557 = vpop.xlane.xlu0 %556
    %v558 = vrcp.pop %v500
    %v559 = vmul.f32 %v378, %v558
    %v560 = vrcp.pop %v503
    %v561 = vmul.f32 %v380, %v560
    %v562 = vrcp.pop %v506
    %v563 = vmul.f32 %v382, %v562
    %v564 = vrcp.pop %v509
    %v565 = vmul.f32 %v384, %v564
    %v566 = vrcp.pop %v512
    %v567 = vmul.f32 %v386, %v566
    %v568 = vrcp.pop %v515
    %v569 = vmul.f32 %v388, %v568
    %v570 = vrcp.pop %v518
    %v571 = vmul.f32 %v390, %v570
    %v572 = vrcp.pop %v521
    %v573 = vmul.f32 %v392, %v572
    %v574 = vrcp.pop %v524
    %v575 = vmul.f32 %v394, %v574
    %v576 = vrcp.pop %v527
    %v577 = vmul.f32 %v396, %v576
    %v578 = vrcp.pop %v530
    %v579 = vmul.f32 %v398, %v578
    %v580 = vrcp.pop %v533
    %v581 = vmul.f32 %v400, %v580
    %v582 = vrcp.pop %v536
    %v583 = vmul.f32 %v402, %v582
    %v584 = vrcp.pop %v539
    %v585 = vmul.f32 %v404, %v584
    %v586 = vrcp.pop %v542
    %v587 = vmul.f32 %v406, %v586
    %v588 = vrcp.pop %v545
    %v589 = vmul.f32 %v408, %v588
    %v590 = vrcp.pop %v548
    %v591 = vmul.f32 %v410, %v590
    %v592 = vrcp.pop %v551
    %v593 = vmul.f32 %v412, %v592
    %v594 = vrcp.pop %v554
    %v595 = vmul.f32 %v414, %v594
    %v596 = vrcp.pop %v557
    %v597 = vmul.f32 %v416, %v596
    %618 = vrot.lane.b32.xlu0 %v559, 96
    %v619 = vpop.permute.xlu0 %618
    %620 = vrot.lane.b32.xlu0 %v561, 96
    %v621 = vpop.permute.xlu0 %620
    %622 = vrot.lane.b32.xlu0 %v563, 96
    %v623 = vpop.permute.xlu0 %622
    %624 = vrot.lane.b32.xlu0 %v565, 96
    %v625 = vpop.permute.xlu0 %624
    %626 = vrot.lane.b32.xlu0 %v567, 96
    %v627 = vpop.permute.xlu0 %626
    %628 = vrot.lane.b32.xlu0 %v569, 96
    %v629 = vpop.permute.xlu0 %628
    %630 = vrot.lane.b32.xlu0 %v571, 96
    %v631 = vpop.permute.xlu0 %630
    %632 = vrot.lane.b32.xlu0 %v573, 96
    %v633 = vpop.permute.xlu0 %632
    %634 = vrot.lane.b32.xlu0 %v575, 96
    %v635 = vpop.permute.xlu0 %634
    %636 = vrot.lane.b32.xlu0 %v577, 96
    %v637 = vpop.permute.xlu0 %636
    %638 = vrot.lane.b32.xlu0 %v579, 96
    %v639 = vpop.permute.xlu0 %638
    %640 = vrot.lane.b32.xlu0 %v581, 96
    %v641 = vpop.permute.xlu0 %640
    %642 = vrot.lane.b32.xlu0 %v583, 96
    %v643 = vpop.permute.xlu0 %642
    %644 = vrot.lane.b32.xlu0 %v585, 96
    %v645 = vpop.permute.xlu0 %644
    %646 = vrot.lane.b32.xlu0 %v587, 96
    %v647 = vpop.permute.xlu0 %646
    %648 = vrot.lane.b32.xlu0 %v589, 96
    %v649 = vpop.permute.xlu0 %648
    %650 = vrot.lane.b32.xlu0 %v591, 96
    %v651 = vpop.permute.xlu0 %650
    %652 = vrot.lane.b32.xlu0 %v593, 96
    %v653 = vpop.permute.xlu0 %652
    %654 = vrot.lane.b32.xlu0 %v595, 96
    %v655 = vpop.permute.xlu0 %654
    %656 = vrot.lane.b32.xlu0 %v597, 96
    %v657 = vpop.permute.xlu0 %656
    %678 = vst.msk [vmem:[%s7] sm:$0xff] %vm497, %v619
    %679 = vst.msk [vmem:[%s7 + $0x8] sm:$0xff] %vm497, %v621
    %680 = vst.msk [vmem:[%s7 + $0x10] sm:$0xff] %vm497, %v623
    %681 = vst.msk [vmem:[%s7 + $0x18] sm:$0xff] %vm497, %v625
    %682 = vst.msk [vmem:[%s7 + $0x20] sm:$0xff] %vm497, %v627
    %683 = vst.msk [vmem:[%s7 + $0x28] sm:$0xff] %vm497, %v629
    %684 = vst.msk [vmem:[%s7 + $0x30] sm:$0xff] %vm497, %v631
    %685 = vst.msk [vmem:[%s7 + $0x38] sm:$0xff] %vm497, %v633
    %686 = vst.msk [vmem:[%s7 + $0x40] sm:$0xff] %vm497, %v635
    %687 = vst.msk [vmem:[%s7 + $0x48] sm:$0xff] %vm497, %v637
    %688 = vst.msk [vmem:[%s7 + $0x50] sm:$0xff] %vm497, %v639
    %689 = vst.msk [vmem:[%s7 + $0x58] sm:$0xff] %vm497, %v641
    %690 = vst.msk [vmem:[%s7 + $0x60] sm:$0xff] %vm497, %v643
    %691 = vst.msk [vmem:[%s7 + $0x68] sm:$0xff] %vm497, %v645
    %692 = vst.msk [vmem:[%s7 + $0x70] sm:$0xff] %vm497, %v647
    %693 = vst.msk [vmem:[%s7 + $0x78] sm:$0xff] %vm497, %v649
    %694 = vst.msk [vmem:[%s7 + $0x80] sm:$0xff] %vm497, %v651
    %695 = vst.msk [vmem:[%s7 + $0x88] sm:$0xff] %vm497, %v653
    %696 = vst.msk [vmem:[%s7 + $0x90] sm:$0xff] %vm497, %v655
    %697 = vst.msk [vmem:[%s7 + $0x98] sm:$0xff] %vm497, %v657
    %vm698 = vcmask 326944
    %v699 = vsel %vm698, %v198, -inf
    %700 = vmax.xlane.f32.xlu0 %v699
    %v701 = vpop.xlane.xlu0 %700
    %v702 = vsel %vm698, %v201, -inf
    %703 = vmax.xlane.f32.xlu0 %v702
    %v704 = vpop.xlane.xlu0 %703
    %v705 = vsel %vm698, %v206, -inf
    %706 = vmax.xlane.f32.xlu0 %v705
    %v707 = vpop.xlane.xlu0 %706
    %v708 = vsel %vm698, %v209, -inf
    %709 = vmax.xlane.f32.xlu0 %v708
    %v710 = vpop.xlane.xlu0 %709
    %v711 = vsel %vm698, %v214, -inf
    %712 = vmax.xlane.f32.xlu0 %v711
    %v713 = vpop.xlane.xlu0 %712
    %v714 = vsel %vm698, %v217, -inf
    %715 = vmax.xlane.f32.xlu0 %v714
    %v716 = vpop.xlane.xlu0 %715
    %v717 = vsel %vm698, %v222, -inf
    %718 = vmax.xlane.f32.xlu0 %v717
    %v719 = vpop.xlane.xlu0 %718
    %v720 = vsel %vm698, %v225, -inf
    %721 = vmax.xlane.f32.xlu0 %v720
    %v722 = vpop.xlane.xlu0 %721
    %v723 = vsel %vm698, %v230, -inf
    %724 = vmax.xlane.f32.xlu0 %v723
    %v725 = vpop.xlane.xlu0 %724
    %v726 = vsel %vm698, %v233, -inf
    %727 = vmax.xlane.f32.xlu0 %v726
    %v728 = vpop.xlane.xlu0 %727
    %v729 = vsel %vm698, %v238, -inf
    %730 = vmax.xlane.f32.xlu0 %v729
    %v731 = vpop.xlane.xlu0 %730
    %v732 = vsel %vm698, %v241, -inf
    %733 = vmax.xlane.f32.xlu0 %v732
    %v734 = vpop.xlane.xlu0 %733
    %v735 = vsel %vm698, %v246, -inf
    %736 = vmax.xlane.f32.xlu0 %v735
    %v737 = vpop.xlane.xlu0 %736
    %v738 = vsel %vm698, %v249, -inf
    %739 = vmax.xlane.f32.xlu0 %v738
    %v740 = vpop.xlane.xlu0 %739
    %v741 = vsel %vm698, %v254, -inf
    %742 = vmax.xlane.f32.xlu0 %v741
    %v743 = vpop.xlane.xlu0 %742
    %v744 = vsel %vm698, %v257, -inf
    %745 = vmax.xlane.f32.xlu0 %v744
    %v746 = vpop.xlane.xlu0 %745
    %v747 = vsel %vm698, %v262, -inf
    %748 = vmax.xlane.f32.xlu0 %v747
    %v749 = vpop.xlane.xlu0 %748
    %v750 = vsel %vm698, %v265, -inf
    %751 = vmax.xlane.f32.xlu0 %v750
    %v752 = vpop.xlane.xlu0 %751
    %v753 = vsel %vm698, %v270, -inf
    %754 = vmax.xlane.f32.xlu0 %v753
    %v755 = vpop.xlane.xlu0 %754
    %v756 = vsel %vm698, %v273, -inf
    %757 = vmax.xlane.f32.xlu0 %v756
    %v758 = vpop.xlane.xlu0 %757
    %v759 = vsub.f32 %v198, %v701
    %v760 = vsub.f32 %v201, %v704
    %v761 = vsub.f32 %v206, %v707
    %v762 = vsub.f32 %v209, %v710
    %v763 = vsub.f32 %v214, %v713
    %v764 = vsub.f32 %v217, %v716
    %v765 = vsub.f32 %v222, %v719
    %v766 = vsub.f32 %v225, %v722
    %v767 = vsub.f32 %v230, %v725
    %v768 = vsub.f32 %v233, %v728
    %v769 = vsub.f32 %v238, %v731
    %v770 = vsub.f32 %v241, %v734
    %v771 = vsub.f32 %v246, %v737
    %v772 = vsub.f32 %v249, %v740
    %v773 = vsub.f32 %v254, %v743
    %v774 = vsub.f32 %v257, %v746
    %v775 = vsub.f32 %v262, %v749
    %v776 = vsub.f32 %v265, %v752
    %v777 = vsub.f32 %v270, %v755
    %v778 = vsub.f32 %v273, %v758
    %v779 = vmul.f32 %v759, 1.442695
    %v780 = vpow.pop %v779
    %v781 = vmul.f32 %v760, 1.442695
    %v782 = vpow.pop %v781
    %v783 = vmul.f32 %v761, 1.442695
    %v784 = vpow.pop %v783
    %v785 = vmul.f32 %v762, 1.442695
    %v786 = vpow.pop %v785
    %v787 = vmul.f32 %v763, 1.442695
    %v788 = vpow.pop %v787
    %v789 = vmul.f32 %v764, 1.442695
    %v790 = vpow.pop %v789
    %v791 = vmul.f32 %v765, 1.442695
    %v792 = vpow.pop %v791
    %v793 = vmul.f32 %v766, 1.442695
    %v794 = vpow.pop %v793
    %v795 = vmul.f32 %v767, 1.442695
    %v796 = vpow.pop %v795
    %v797 = vmul.f32 %v768, 1.442695
    %v798 = vpow.pop %v797
    %v799 = vmul.f32 %v769, 1.442695
    %v800 = vpow.pop %v799
    %v801 = vmul.f32 %v770, 1.442695
    %v802 = vpow.pop %v801
    %v803 = vmul.f32 %v771, 1.442695
    %v804 = vpow.pop %v803
    %v805 = vmul.f32 %v772, 1.442695
    %v806 = vpow.pop %v805
    %v807 = vmul.f32 %v773, 1.442695
    %v808 = vpow.pop %v807
    %v809 = vmul.f32 %v774, 1.442695
    %v810 = vpow.pop %v809
    %v811 = vmul.f32 %v775, 1.442695
    %v812 = vpow.pop %v811
    %v813 = vmul.f32 %v776, 1.442695
    %v814 = vpow.pop %v813
    %v815 = vmul.f32 %v777, 1.442695
    %v816 = vpow.pop %v815
    %v817 = vmul.f32 %v778, 1.442695
    %v818 = vpow.pop %v817
    %839 = vrot.lane.b32.xlu0 %v780, 92
    %v840 = vpop.permute.xlu0 %839
    %841 = vrot.lane.b32.xlu0 %v782, 92
    %v842 = vpop.permute.xlu0 %841
    %843 = vrot.lane.b32.xlu0 %v784, 92
    %v844 = vpop.permute.xlu0 %843
    %845 = vrot.lane.b32.xlu0 %v786, 92
    %v846 = vpop.permute.xlu0 %845
    %847 = vrot.lane.b32.xlu0 %v788, 92
    %v848 = vpop.permute.xlu0 %847
    %849 = vrot.lane.b32.xlu0 %v790, 92
    %v850 = vpop.permute.xlu0 %849
    %851 = vrot.lane.b32.xlu0 %v792, 92
    %v852 = vpop.permute.xlu0 %851
    %853 = vrot.lane.b32.xlu0 %v794, 92
    %v854 = vpop.permute.xlu0 %853
    %855 = vrot.lane.b32.xlu0 %v796, 92
    %v856 = vpop.permute.xlu0 %855
    %857 = vrot.lane.b32.xlu0 %v798, 92
    %v858 = vpop.permute.xlu0 %857
    %859 = vrot.lane.b32.xlu0 %v800, 92
    %v860 = vpop.permute.xlu0 %859
    %861 = vrot.lane.b32.xlu0 %v802, 92
    %v862 = vpop.permute.xlu0 %861
    %863 = vrot.lane.b32.xlu0 %v804, 92
    %v864 = vpop.permute.xlu0 %863
    %865 = vrot.lane.b32.xlu0 %v806, 92
    %v866 = vpop.permute.xlu0 %865
    %867 = vrot.lane.b32.xlu0 %v808, 92
    %v868 = vpop.permute.xlu0 %867
    %869 = vrot.lane.b32.xlu0 %v810, 92
    %v870 = vpop.permute.xlu0 %869
    %871 = vrot.lane.b32.xlu0 %v812, 92
    %v872 = vpop.permute.xlu0 %871
    %873 = vrot.lane.b32.xlu0 %v814, 92
    %v874 = vpop.permute.xlu0 %873
    %875 = vrot.lane.b32.xlu0 %v816, 92
    %v876 = vpop.permute.xlu0 %875
    %877 = vrot.lane.b32.xlu0 %v818, 92
    %v878 = vpop.permute.xlu0 %877
    %v899 = vsel %vm497, %v840, 0.0
    %900 = vadd.xlane.f32.xlu0 %v899
    %v901 = vpop.xlane.xlu0 %900
    %v902 = vsel %vm497, %v842, 0.0
    %903 = vadd.xlane.f32.xlu0 %v902
    %v904 = vpop.xlane.xlu0 %903
    %v905 = vsel %vm497, %v844, 0.0
    %906 = vadd.xlane.f32.xlu0 %v905
    %v907 = vpop.xlane.xlu0 %906
    %v908 = vsel %vm497, %v846, 0.0
    %909 = vadd.xlane.f32.xlu0 %v908
    %v910 = vpop.xlane.xlu0 %909
    %v911 = vsel %vm497, %v848, 0.0
    %912 = vadd.xlane.f32.xlu0 %v911
    %v913 = vpop.xlane.xlu0 %912
    %v914 = vsel %vm497, %v850, 0.0
    %915 = vadd.xlane.f32.xlu0 %v914
    %v916 = vpop.xlane.xlu0 %915
    %v917 = vsel %vm497, %v852, 0.0
    %918 = vadd.xlane.f32.xlu0 %v917
    %v919 = vpop.xlane.xlu0 %918
    %v920 = vsel %vm497, %v854, 0.0
    %921 = vadd.xlane.f32.xlu0 %v920
    %v922 = vpop.xlane.xlu0 %921
    %v923 = vsel %vm497, %v856, 0.0
    %924 = vadd.xlane.f32.xlu0 %v923
    %v925 = vpop.xlane.xlu0 %924
    %v926 = vsel %vm497, %v858, 0.0
    %927 = vadd.xlane.f32.xlu0 %v926
    %v928 = vpop.xlane.xlu0 %927
    %v929 = vsel %vm497, %v860, 0.0
    %930 = vadd.xlane.f32.xlu0 %v929
    %v931 = vpop.xlane.xlu0 %930
    %v932 = vsel %vm497, %v862, 0.0
    %933 = vadd.xlane.f32.xlu0 %v932
    %v934 = vpop.xlane.xlu0 %933
    %v935 = vsel %vm497, %v864, 0.0
    %936 = vadd.xlane.f32.xlu0 %v935
    %v937 = vpop.xlane.xlu0 %936
    %v938 = vsel %vm497, %v866, 0.0
    %939 = vadd.xlane.f32.xlu0 %v938
    %v940 = vpop.xlane.xlu0 %939
    %v941 = vsel %vm497, %v868, 0.0
    %942 = vadd.xlane.f32.xlu0 %v941
    %v943 = vpop.xlane.xlu0 %942
    %v944 = vsel %vm497, %v870, 0.0
    %945 = vadd.xlane.f32.xlu0 %v944
    %v946 = vpop.xlane.xlu0 %945
    %v947 = vsel %vm497, %v872, 0.0
    %948 = vadd.xlane.f32.xlu0 %v947
    %v949 = vpop.xlane.xlu0 %948
    %v950 = vsel %vm497, %v874, 0.0
    %951 = vadd.xlane.f32.xlu0 %v950
    %v952 = vpop.xlane.xlu0 %951
    %v953 = vsel %vm497, %v876, 0.0
    %954 = vadd.xlane.f32.xlu0 %v953
    %v955 = vpop.xlane.xlu0 %954
    %v956 = vsel %vm497, %v878, 0.0
    %957 = vadd.xlane.f32.xlu0 %v956
    %v958 = vpop.xlane.xlu0 %957
    %v959 = vrcp.pop %v901
    %v960 = vmul.f32 %v780, %v959
    %v961 = vrcp.pop %v904
    %v962 = vmul.f32 %v782, %v961
    %v963 = vrcp.pop %v907
    %v964 = vmul.f32 %v784, %v963
    %v965 = vrcp.pop %v910
    %v966 = vmul.f32 %v786, %v965
    %v967 = vrcp.pop %v913
    %v968 = vmul.f32 %v788, %v967
    %v969 = vrcp.pop %v916
    %v970 = vmul.f32 %v790, %v969
    %v971 = vrcp.pop %v919
    %v972 = vmul.f32 %v792, %v971
    %v973 = vrcp.pop %v922
    %v974 = vmul.f32 %v794, %v973
    %v975 = vrcp.pop %v925
    %v976 = vmul.f32 %v796, %v975
    %v977 = vrcp.pop %v928
    %v978 = vmul.f32 %v798, %v977
    %v979 = vrcp.pop %v931
    %v980 = vmul.f32 %v800, %v979
    %v981 = vrcp.pop %v934
    %v982 = vmul.f32 %v802, %v981
    %v983 = vrcp.pop %v937
    %v984 = vmul.f32 %v804, %v983
    %v985 = vrcp.pop %v940
    %v986 = vmul.f32 %v806, %v985
    %v987 = vrcp.pop %v943
    %v988 = vmul.f32 %v808, %v987
    %v989 = vrcp.pop %v946
    %v990 = vmul.f32 %v810, %v989
    %v991 = vrcp.pop %v949
    %v992 = vmul.f32 %v812, %v991
    %v993 = vrcp.pop %v952
    %v994 = vmul.f32 %v814, %v993
    %v995 = vrcp.pop %v955
    %v996 = vmul.f32 %v816, %v995
    %v997 = vrcp.pop %v958
    %v998 = vmul.f32 %v818, %v997
    %1019 = vrot.lane.b32.xlu0 %v960, 96
    %v1020 = vpop.permute.xlu0 %1019
    %1021 = vrot.lane.b32.xlu0 %v962, 96
    %v1022 = vpop.permute.xlu0 %1021
    %1023 = vrot.lane.b32.xlu0 %v964, 96
    %v1024 = vpop.permute.xlu0 %1023
    %1025 = vrot.lane.b32.xlu0 %v966, 96
    %v1026 = vpop.permute.xlu0 %1025
    %1027 = vrot.lane.b32.xlu0 %v968, 96
    %v1028 = vpop.permute.xlu0 %1027
    %1029 = vrot.lane.b32.xlu0 %v970, 96
    %v1030 = vpop.permute.xlu0 %1029
    %1031 = vrot.lane.b32.xlu0 %v972, 96
    %v1032 = vpop.permute.xlu0 %1031
    %1033 = vrot.lane.b32.xlu0 %v974, 96
    %v1034 = vpop.permute.xlu0 %1033
    %1035 = vrot.lane.b32.xlu0 %v976, 96
    %v1036 = vpop.permute.xlu0 %1035
    %1037 = vrot.lane.b32.xlu0 %v978, 96
    %v1038 = vpop.permute.xlu0 %1037
    %1039 = vrot.lane.b32.xlu0 %v980, 96
    %v1040 = vpop.permute.xlu0 %1039
    %1041 = vrot.lane.b32.xlu0 %v982, 96
    %v1042 = vpop.permute.xlu0 %1041
    %1043 = vrot.lane.b32.xlu0 %v984, 96
    %v1044 = vpop.permute.xlu0 %1043
    %1045 = vrot.lane.b32.xlu0 %v986, 96
    %v1046 = vpop.permute.xlu0 %1045
    %1047 = vrot.lane.b32.xlu0 %v988, 96
    %v1048 = vpop.permute.xlu0 %1047
    %1049 = vrot.lane.b32.xlu0 %v990, 96
    %v1050 = vpop.permute.xlu0 %1049
    %1051 = vrot.lane.b32.xlu0 %v992, 96
    %v1052 = vpop.permute.xlu0 %1051
    %1053 = vrot.lane.b32.xlu0 %v994, 96
    %v1054 = vpop.permute.xlu0 %1053
    %1055 = vrot.lane.b32.xlu0 %v996, 96
    %v1056 = vpop.permute.xlu0 %1055
    %1057 = vrot.lane.b32.xlu0 %v998, 96
    %v1058 = vpop.permute.xlu0 %1057
    %vm1079 = vcmask 64544
    %1080 = vst.msk [vmem:[%s7] sm:$0xff] %vm1079, %v1020
    %1081 = vst.msk [vmem:[%s7 + $0x8] sm:$0xff] %vm1079, %v1022
    %1082 = vst.msk [vmem:[%s7 + $0x10] sm:$0xff] %vm1079, %v1024
    %1083 = vst.msk [vmem:[%s7 + $0x18] sm:$0xff] %vm1079, %v1026
    %1084 = vst.msk [vmem:[%s7 + $0x20] sm:$0xff] %vm1079, %v1028
    %1085 = vst.msk [vmem:[%s7 + $0x28] sm:$0xff] %vm1079, %v1030
    %1086 = vst.msk [vmem:[%s7 + $0x30] sm:$0xff] %vm1079, %v1032
    %1087 = vst.msk [vmem:[%s7 + $0x38] sm:$0xff] %vm1079, %v1034
    %1088 = vst.msk [vmem:[%s7 + $0x40] sm:$0xff] %vm1079, %v1036
    %1089 = vst.msk [vmem:[%s7 + $0x48] sm:$0xff] %vm1079, %v1038
    %1090 = vst.msk [vmem:[%s7 + $0x50] sm:$0xff] %vm1079, %v1040
    %1091 = vst.msk [vmem:[%s7 + $0x58] sm:$0xff] %vm1079, %v1042
    %1092 = vst.msk [vmem:[%s7 + $0x60] sm:$0xff] %vm1079, %v1044
    %1093 = vst.msk [vmem:[%s7 + $0x68] sm:$0xff] %vm1079, %v1046
    %1094 = vst.msk [vmem:[%s7 + $0x70] sm:$0xff] %vm1079, %v1048
    %1095 = vst.msk [vmem:[%s7 + $0x78] sm:$0xff] %vm1079, %v1050
    %1096 = vst.msk [vmem:[%s7 + $0x80] sm:$0xff] %vm1079, %v1052
    %1097 = vst.msk [vmem:[%s7 + $0x88] sm:$0xff] %vm1079, %v1054
    %1098 = vst.msk [vmem:[%s7 + $0x90] sm:$0xff] %vm1079, %v1056
    %1099 = vst.msk [vmem:[%s7 + $0x98] sm:$0xff] %vm1079, %v1058
    %vm1100 = vcmask 359744
    %v1101 = vsel %vm1100, %v198, -inf
    %1102 = vmax.xlane.f32.xlu0 %v1101
    %v1103 = vpop.xlane.xlu0 %1102
    %v1104 = vsel %vm1100, %v201, -inf
    %1105 = vmax.xlane.f32.xlu0 %v1104
    %v1106 = vpop.xlane.xlu0 %1105
    %v1107 = vsel %vm1100, %v206, -inf
    %1108 = vmax.xlane.f32.xlu0 %v1107
    %v1109 = vpop.xlane.xlu0 %1108
    %v1110 = vsel %vm1100, %v209, -inf
    %1111 = vmax.xlane.f32.xlu0 %v1110
    %v1112 = vpop.xlane.xlu0 %1111
    %v1113 = vsel %vm1100, %v214, -inf
    %1114 = vmax.xlane.f32.xlu0 %v1113
    %v1115 = vpop.xlane.xlu0 %1114
    %v1116 = vsel %vm1100, %v217, -inf
    %1117 = vmax.xlane.f32.xlu0 %v1116
    %v1118 = vpop.xlane.xlu0 %1117
    %v1119 = vsel %vm1100, %v222, -inf
    %1120 = vmax.xlane.f32.xlu0 %v1119
    %v1121 = vpop.xlane.xlu0 %1120
    %v1122 = vsel %vm1100, %v225, -inf
    %1123 = vmax.xlane.f32.xlu0 %v1122
    %v1124 = vpop.xlane.xlu0 %1123
    %v1125 = vsel %vm1100, %v230, -inf
    %1126 = vmax.xlane.f32.xlu0 %v1125
    %v1127 = vpop.xlane.xlu0 %1126
    %v1128 = vsel %vm1100, %v233, -inf
    %1129 = vmax.xlane.f32.xlu0 %v1128
    %v1130 = vpop.xlane.xlu0 %1129
    %v1131 = vsel %vm1100, %v238, -inf
    %1132 = vmax.xlane.f32.xlu0 %v1131
    %v1133 = vpop.xlane.xlu0 %1132
    %v1134 = vsel %vm1100, %v241, -inf
    %1135 = vmax.xlane.f32.xlu0 %v1134
    %v1136 = vpop.xlane.xlu0 %1135
    %v1137 = vsel %vm1100, %v246, -inf
    %1138 = vmax.xlane.f32.xlu0 %v1137
    %v1139 = vpop.xlane.xlu0 %1138
    %v1140 = vsel %vm1100, %v249, -inf
    %1141 = vmax.xlane.f32.xlu0 %v1140
    %v1142 = vpop.xlane.xlu0 %1141
    %v1143 = vsel %vm1100, %v254, -inf
    %1144 = vmax.xlane.f32.xlu0 %v1143
    %v1145 = vpop.xlane.xlu0 %1144
    %v1146 = vsel %vm1100, %v257, -inf
    %1147 = vmax.xlane.f32.xlu0 %v1146
    %v1148 = vpop.xlane.xlu0 %1147
    %v1149 = vsel %vm1100, %v262, -inf
    %1150 = vmax.xlane.f32.xlu0 %v1149
    %v1151 = vpop.xlane.xlu0 %1150
    %v1152 = vsel %vm1100, %v265, -inf
    %1153 = vmax.xlane.f32.xlu0 %v1152
    %v1154 = vpop.xlane.xlu0 %1153
    %v1155 = vsel %vm1100, %v270, -inf
    %1156 = vmax.xlane.f32.xlu0 %v1155
    %v1157 = vpop.xlane.xlu0 %1156
    %v1158 = vsel %vm1100, %v273, -inf
    %1159 = vmax.xlane.f32.xlu0 %v1158
    %v1160 = vpop.xlane.xlu0 %1159
    %v1161 = vsub.f32 %v198, %v1103
    %v1162 = vsub.f32 %v201, %v1106
    %v1163 = vsub.f32 %v206, %v1109
    %v1164 = vsub.f32 %v209, %v1112
    %v1165 = vsub.f32 %v214, %v1115
    %v1166 = vsub.f32 %v217, %v1118
    %v1167 = vsub.f32 %v222, %v1121
    %v1168 = vsub.f32 %v225, %v1124
    %v1169 = vsub.f32 %v230, %v1127
    %v1170 = vsub.f32 %v233, %v1130
    %v1171 = vsub.f32 %v238, %v1133
    %v1172 = vsub.f32 %v241, %v1136
    %v1173 = vsub.f32 %v246, %v1139
    %v1174 = vsub.f32 %v249, %v1142
    %v1175 = vsub.f32 %v254, %v1145
    %v1176 = vsub.f32 %v257, %v1148
    %v1177 = vsub.f32 %v262, %v1151
    %v1178 = vsub.f32 %v265, %v1154
    %v1179 = vsub.f32 %v270, %v1157
    %v1180 = vsub.f32 %v273, %v1160
    %v1181 = vmul.f32 %v1161, 1.442695
    %v1182 = vpow.pop %v1181
    %v1183 = vmul.f32 %v1162, 1.442695
    %v1184 = vpow.pop %v1183
    %v1185 = vmul.f32 %v1163, 1.442695
    %v1186 = vpow.pop %v1185
    %v1187 = vmul.f32 %v1164, 1.442695
    %v1188 = vpow.pop %v1187
    %v1189 = vmul.f32 %v1165, 1.442695
    %v1190 = vpow.pop %v1189
    %v1191 = vmul.f32 %v1166, 1.442695
    %v1192 = vpow.pop %v1191
    %v1193 = vmul.f32 %v1167, 1.442695
    %v1194 = vpow.pop %v1193
    %v1195 = vmul.f32 %v1168, 1.442695
    %v1196 = vpow.pop %v1195
    %v1197 = vmul.f32 %v1169, 1.442695
    %v1198 = vpow.pop %v1197
    %v1199 = vmul.f32 %v1170, 1.442695
    %v1200 = vpow.pop %v1199
    %v1201 = vmul.f32 %v1171, 1.442695
    %v1202 = vpow.pop %v1201
    %v1203 = vmul.f32 %v1172, 1.442695
    %v1204 = vpow.pop %v1203
    %v1205 = vmul.f32 %v1173, 1.442695
    %v1206 = vpow.pop %v1205
    %v1207 = vmul.f32 %v1174, 1.442695
    %v1208 = vpow.pop %v1207
    %v1209 = vmul.f32 %v1175, 1.442695
    %v1210 = vpow.pop %v1209
    %v1211 = vmul.f32 %v1176, 1.442695
    %v1212 = vpow.pop %v1211
    %v1213 = vmul.f32 %v1177, 1.442695
    %v1214 = vpow.pop %v1213
    %v1215 = vmul.f32 %v1178, 1.442695
    %v1216 = vpow.pop %v1215
    %v1217 = vmul.f32 %v1179, 1.442695
    %v1218 = vpow.pop %v1217
    %v1219 = vmul.f32 %v1180, 1.442695
    %v1220 = vpow.pop %v1219
    %1241 = vrot.lane.b32.xlu0 %v1182, 88
    %v1242 = vpop.permute.xlu0 %1241
    %1243 = vrot.lane.b32.xlu0 %v1184, 88
    %v1244 = vpop.permute.xlu0 %1243
    %1245 = vrot.lane.b32.xlu0 %v1186, 88
    %v1246 = vpop.permute.xlu0 %1245
    %1247 = vrot.lane.b32.xlu0 %v1188, 88
    %v1248 = vpop.permute.xlu0 %1247
    %1249 = vrot.lane.b32.xlu0 %v1190, 88
    %v1250 = vpop.permute.xlu0 %1249
    %1251 = vrot.lane.b32.xlu0 %v1192, 88
    %v1252 = vpop.permute.xlu0 %1251
    %1253 = vrot.lane.b32.xlu0 %v1194, 88
    %v1254 = vpop.permute.xlu0 %1253
    %1255 = vrot.lane.b32.xlu0 %v1196, 88
    %v1256 = vpop.permute.xlu0 %1255
    %1257 = vrot.lane.b32.xlu0 %v1198, 88
    %v1258 = vpop.permute.xlu0 %1257
    %1259 = vrot.lane.b32.xlu0 %v1200, 88
    %v1260 = vpop.permute.xlu0 %1259
    %1261 = vrot.lane.b32.xlu0 %v1202, 88
    %v1262 = vpop.permute.xlu0 %1261
    %1263 = vrot.lane.b32.xlu0 %v1204, 88
    %v1264 = vpop.permute.xlu0 %1263
    %1265 = vrot.lane.b32.xlu0 %v1206, 88
    %v1266 = vpop.permute.xlu0 %1265
    %1267 = vrot.lane.b32.xlu0 %v1208, 88
    %v1268 = vpop.permute.xlu0 %1267
    %1269 = vrot.lane.b32.xlu0 %v1210, 88
    %v1270 = vpop.permute.xlu0 %1269
    %1271 = vrot.lane.b32.xlu0 %v1212, 88
    %v1272 = vpop.permute.xlu0 %1271
    %1273 = vrot.lane.b32.xlu0 %v1214, 88
    %v1274 = vpop.permute.xlu0 %1273
    %1275 = vrot.lane.b32.xlu0 %v1216, 88
    %v1276 = vpop.permute.xlu0 %1275
    %1277 = vrot.lane.b32.xlu0 %v1218, 88
    %v1278 = vpop.permute.xlu0 %1277
    %1279 = vrot.lane.b32.xlu0 %v1220, 88
    %v1280 = vpop.permute.xlu0 %1279
    %v1301 = vsel %vm497, %v1242, 0.0
    %1302 = vadd.xlane.f32.xlu0 %v1301
    %v1303 = vpop.xlane.xlu0 %1302
    %v1304 = vsel %vm497, %v1244, 0.0
    %1305 = vadd.xlane.f32.xlu0 %v1304
    %v1306 = vpop.xlane.xlu0 %1305
    %v1307 = vsel %vm497, %v1246, 0.0
    %1308 = vadd.xlane.f32.xlu0 %v1307
    %v1309 = vpop.xlane.xlu0 %1308
    %v1310 = vsel %vm497, %v1248, 0.0
    %1311 = vadd.xlane.f32.xlu0 %v1310
    %v1312 = vpop.xlane.xlu0 %1311
    %v1313 = vsel %vm497, %v1250, 0.0
    %1314 = vadd.xlane.f32.xlu0 %v1313
    %v1315 = vpop.xlane.xlu0 %1314
    %v1316 = vsel %vm497, %v1252, 0.0
    %1317 = vadd.xlane.f32.xlu0 %v1316
    %v1318 = vpop.xlane.xlu0 %1317
    %v1319 = vsel %vm497, %v1254, 0.0
    %1320 = vadd.xlane.f32.xlu0 %v1319
    %v1321 = vpop.xlane.xlu0 %1320
    %v1322 = vsel %vm497, %v1256, 0.0
    %1323 = vadd.xlane.f32.xlu0 %v1322
    %v1324 = vpop.xlane.xlu0 %1323
    %v1325 = vsel %vm497, %v1258, 0.0
    %1326 = vadd.xlane.f32.xlu0 %v1325
    %v1327 = vpop.xlane.xlu0 %1326
    %v1328 = vsel %vm497, %v1260, 0.0
    %1329 = vadd.xlane.f32.xlu0 %v1328
    %v1330 = vpop.xlane.xlu0 %1329
    %v1331 = vsel %vm497, %v1262, 0.0
    %1332 = vadd.xlane.f32.xlu0 %v1331
    %v1333 = vpop.xlane.xlu0 %1332
    %v1334 = vsel %vm497, %v1264, 0.0
    %1335 = vadd.xlane.f32.xlu0 %v1334
    %v1336 = vpop.xlane.xlu0 %1335
    %v1337 = vsel %vm497, %v1266, 0.0
    %1338 = vadd.xlane.f32.xlu0 %v1337
    %v1339 = vpop.xlane.xlu0 %1338
    %v1340 = vsel %vm497, %v1268, 0.0
    %1341 = vadd.xlane.f32.xlu0 %v1340
    %v1342 = vpop.xlane.xlu0 %1341
    %v1343 = vsel %vm497, %v1270, 0.0
    %1344 = vadd.xlane.f32.xlu0 %v1343
    %v1345 = vpop.xlane.xlu0 %1344
    %v1346 = vsel %vm497, %v1272, 0.0
    %1347 = vadd.xlane.f32.xlu0 %v1346
    %v1348 = vpop.xlane.xlu0 %1347
    %v1349 = vsel %vm497, %v1274, 0.0
    %1350 = vadd.xlane.f32.xlu0 %v1349
    %v1351 = vpop.xlane.xlu0 %1350
    %v1352 = vsel %vm497, %v1276, 0.0
    %1353 = vadd.xlane.f32.xlu0 %v1352
    %v1354 = vpop.xlane.xlu0 %1353
    %v1355 = vsel %vm497, %v1278, 0.0
    %1356 = vadd.xlane.f32.xlu0 %v1355
    %v1357 = vpop.xlane.xlu0 %1356
    %v1358 = vsel %vm497, %v1280, 0.0
    %1359 = vadd.xlane.f32.xlu0 %v1358
    %v1360 = vpop.xlane.xlu0 %1359
    %v1361 = vrcp.pop %v1303
    %v1362 = vmul.f32 %v1182, %v1361
    %v1363 = vrcp.pop %v1306
    %v1364 = vmul.f32 %v1184, %v1363
    %v1365 = vrcp.pop %v1309
    %v1366 = vmul.f32 %v1186, %v1365
    %v1367 = vrcp.pop %v1312
    %v1368 = vmul.f32 %v1188, %v1367
    %v1369 = vrcp.pop %v1315
    %v1370 = vmul.f32 %v1190, %v1369
    %v1371 = vrcp.pop %v1318
    %v1372 = vmul.f32 %v1192, %v1371
    %v1373 = vrcp.pop %v1321
    %v1374 = vmul.f32 %v1194, %v1373
    %v1375 = vrcp.pop %v1324
    %v1376 = vmul.f32 %v1196, %v1375
    %v1377 = vrcp.pop %v1327
    %v1378 = vmul.f32 %v1198, %v1377
    %v1379 = vrcp.pop %v1330
    %v1380 = vmul.f32 %v1200, %v1379
    %v1381 = vrcp.pop %v1333
    %v1382 = vmul.f32 %v1202, %v1381
    %v1383 = vrcp.pop %v1336
    %v1384 = vmul.f32 %v1204, %v1383
    %v1385 = vrcp.pop %v1339
    %v1386 = vmul.f32 %v1206, %v1385
    %v1387 = vrcp.pop %v1342
    %v1388 = vmul.f32 %v1208, %v1387
    %v1389 = vrcp.pop %v1345
    %v1390 = vmul.f32 %v1210, %v1389
    %v1391 = vrcp.pop %v1348
    %v1392 = vmul.f32 %v1212, %v1391
    %v1393 = vrcp.pop %v1351
    %v1394 = vmul.f32 %v1214, %v1393
    %v1395 = vrcp.pop %v1354
    %v1396 = vmul.f32 %v1216, %v1395
    %v1397 = vrcp.pop %v1357
    %v1398 = vmul.f32 %v1218, %v1397
    %v1399 = vrcp.pop %v1360
    %v1400 = vmul.f32 %v1220, %v1399
    %1421 = vrot.lane.b32.xlu0 %v1362, 96
    %v1422 = vpop.permute.xlu0 %1421
    %1423 = vrot.lane.b32.xlu0 %v1364, 96
    %v1424 = vpop.permute.xlu0 %1423
    %1425 = vrot.lane.b32.xlu0 %v1366, 96
    %v1426 = vpop.permute.xlu0 %1425
    %1427 = vrot.lane.b32.xlu0 %v1368, 96
    %v1428 = vpop.permute.xlu0 %1427
    %1429 = vrot.lane.b32.xlu0 %v1370, 96
    %v1430 = vpop.permute.xlu0 %1429
    %1431 = vrot.lane.b32.xlu0 %v1372, 96
    %v1432 = vpop.permute.xlu0 %1431
    %1433 = vrot.lane.b32.xlu0 %v1374, 96
    %v1434 = vpop.permute.xlu0 %1433
    %1435 = vrot.lane.b32.xlu0 %v1376, 96
    %v1436 = vpop.permute.xlu0 %1435
    %1437 = vrot.lane.b32.xlu0 %v1378, 96
    %v1438 = vpop.permute.xlu0 %1437
    %1439 = vrot.lane.b32.xlu0 %v1380, 96
    %v1440 = vpop.permute.xlu0 %1439
    %1441 = vrot.lane.b32.xlu0 %v1382, 96
    %v1442 = vpop.permute.xlu0 %1441
    %1443 = vrot.lane.b32.xlu0 %v1384, 96
    %v1444 = vpop.permute.xlu0 %1443
    %1445 = vrot.lane.b32.xlu0 %v1386, 96
    %v1446 = vpop.permute.xlu0 %1445
    %1447 = vrot.lane.b32.xlu0 %v1388, 96
    %v1448 = vpop.permute.xlu0 %1447
    %1449 = vrot.lane.b32.xlu0 %v1390, 96
    %v1450 = vpop.permute.xlu0 %1449
    %1451 = vrot.lane.b32.xlu0 %v1392, 96
    %v1452 = vpop.permute.xlu0 %1451
    %1453 = vrot.lane.b32.xlu0 %v1394, 96
    %v1454 = vpop.permute.xlu0 %1453
    %1455 = vrot.lane.b32.xlu0 %v1396, 96
    %v1456 = vpop.permute.xlu0 %1455
    %1457 = vrot.lane.b32.xlu0 %v1398, 96
    %v1458 = vpop.permute.xlu0 %1457
    %1459 = vrot.lane.b32.xlu0 %v1400, 96
    %v1460 = vpop.permute.xlu0 %1459
    %vm1481 = vcmask 97344
    %1482 = vst.msk [vmem:[%s7] sm:$0xff] %vm1481, %v1422
    %1483 = vst.msk [vmem:[%s7 + $0x8] sm:$0xff] %vm1481, %v1424
    %1484 = vst.msk [vmem:[%s7 + $0x10] sm:$0xff] %vm1481, %v1426
    %1485 = vst.msk [vmem:[%s7 + $0x18] sm:$0xff] %vm1481, %v1428
    %1486 = vst.msk [vmem:[%s7 + $0x20] sm:$0xff] %vm1481, %v1430
    %1487 = vst.msk [vmem:[%s7 + $0x28] sm:$0xff] %vm1481, %v1432
    %1488 = vst.msk [vmem:[%s7 + $0x30] sm:$0xff] %vm1481, %v1434
    %1489 = vst.msk [vmem:[%s7 + $0x38] sm:$0xff] %vm1481, %v1436
    %1490 = vst.msk [vmem:[%s7 + $0x40] sm:$0xff] %vm1481, %v1438
    %1491 = vst.msk [vmem:[%s7 + $0x48] sm:$0xff] %vm1481, %v1440
    %1492 = vst.msk [vmem:[%s7 + $0x50] sm:$0xff] %vm1481, %v1442
    %1493 = vst.msk [vmem:[%s7 + $0x58] sm:$0xff] %vm1481, %v1444
    %1494 = vst.msk [vmem:[%s7 + $0x60] sm:$0xff] %vm1481, %v1446
    %1495 = vst.msk [vmem:[%s7 + $0x68] sm:$0xff] %vm1481, %v1448
    %1496 = vst.msk [vmem:[%s7 + $0x70] sm:$0xff] %vm1481, %v1450
    %1497 = vst.msk [vmem:[%s7 + $0x78] sm:$0xff] %vm1481, %v1452
    %1498 = vst.msk [vmem:[%s7 + $0x80] sm:$0xff] %vm1481, %v1454
    %1499 = vst.msk [vmem:[%s7 + $0x88] sm:$0xff] %vm1481, %v1456
    %1500 = vst.msk [vmem:[%s7 + $0x90] sm:$0xff] %vm1481, %v1458
    %1501 = vst.msk [vmem:[%s7 + $0x98] sm:$0xff] %vm1481, %v1460
    %vm1502 = vcmask 392544
    %v1503 = vsel %vm1502, %v198, -inf
    %1504 = vmax.xlane.f32.xlu0 %v1503
    %v1505 = vpop.xlane.xlu0 %1504
    %v1506 = vsel %vm1502, %v201, -inf
    %1507 = vmax.xlane.f32.xlu0 %v1506
    %v1508 = vpop.xlane.xlu0 %1507
    %v1509 = vsel %vm1502, %v206, -inf
    %1510 = vmax.xlane.f32.xlu0 %v1509
    %v1511 = vpop.xlane.xlu0 %1510
    %v1512 = vsel %vm1502, %v209, -inf
    %1513 = vmax.xlane.f32.xlu0 %v1512
    %v1514 = vpop.xlane.xlu0 %1513
    %v1515 = vsel %vm1502, %v214, -inf
    %1516 = vmax.xlane.f32.xlu0 %v1515
    %v1517 = vpop.xlane.xlu0 %1516
    %v1518 = vsel %vm1502, %v217, -inf
    %1519 = vmax.xlane.f32.xlu0 %v1518
    %v1520 = vpop.xlane.xlu0 %1519
    %v1521 = vsel %vm1502, %v222, -inf
    %1522 = vmax.xlane.f32.xlu0 %v1521
    %v1523 = vpop.xlane.xlu0 %1522
    %v1524 = vsel %vm1502, %v225, -inf
    %1525 = vmax.xlane.f32.xlu0 %v1524
    %v1526 = vpop.xlane.xlu0 %1525
    %v1527 = vsel %vm1502, %v230, -inf
    %1528 = vmax.xlane.f32.xlu0 %v1527
    %v1529 = vpop.xlane.xlu0 %1528
    %v1530 = vsel %vm1502, %v233, -inf
    %1531 = vmax.xlane.f32.xlu0 %v1530
    %v1532 = vpop.xlane.xlu0 %1531
    %v1533 = vsel %vm1502, %v238, -inf
    %1534 = vmax.xlane.f32.xlu0 %v1533
    %v1535 = vpop.xlane.xlu0 %1534
    %v1536 = vsel %vm1502, %v241, -inf
    %1537 = vmax.xlane.f32.xlu0 %v1536
    %v1538 = vpop.xlane.xlu0 %1537
    %v1539 = vsel %vm1502, %v246, -inf
    %1540 = vmax.xlane.f32.xlu0 %v1539
    %v1541 = vpop.xlane.xlu0 %1540
    %v1542 = vsel %vm1502, %v249, -inf
    %1543 = vmax.xlane.f32.xlu0 %v1542
    %v1544 = vpop.xlane.xlu0 %1543
    %v1545 = vsel %vm1502, %v254, -inf
    %1546 = vmax.xlane.f32.xlu0 %v1545
    %v1547 = vpop.xlane.xlu0 %1546
    %v1548 = vsel %vm1502, %v257, -inf
    %1549 = vmax.xlane.f32.xlu0 %v1548
    %v1550 = vpop.xlane.xlu0 %1549
    %v1551 = vsel %vm1502, %v262, -inf
    %1552 = vmax.xlane.f32.xlu0 %v1551
    %v1553 = vpop.xlane.xlu0 %1552
    %v1554 = vsel %vm1502, %v265, -inf
    %1555 = vmax.xlane.f32.xlu0 %v1554
    %v1556 = vpop.xlane.xlu0 %1555
    %v1557 = vsel %vm1502, %v270, -inf
    %1558 = vmax.xlane.f32.xlu0 %v1557
    %v1559 = vpop.xlane.xlu0 %1558
    %v1560 = vsel %vm1502, %v273, -inf
    %1561 = vmax.xlane.f32.xlu0 %v1560
    %v1562 = vpop.xlane.xlu0 %1561
    %v1563 = vsub.f32 %v198, %v1505
    %v1564 = vsub.f32 %v201, %v1508
    %v1565 = vsub.f32 %v206, %v1511
    %v1566 = vsub.f32 %v209, %v1514
    %v1567 = vsub.f32 %v214, %v1517
    %v1568 = vsub.f32 %v217, %v1520
    %v1569 = vsub.f32 %v222, %v1523
    %v1570 = vsub.f32 %v225, %v1526
    %v1571 = vsub.f32 %v230, %v1529
    %v1572 = vsub.f32 %v233, %v1532
    %v1573 = vsub.f32 %v238, %v1535
    %v1574 = vsub.f32 %v241, %v1538
    %v1575 = vsub.f32 %v246, %v1541
    %v1576 = vsub.f32 %v249, %v1544
    %v1577 = vsub.f32 %v254, %v1547
    %v1578 = vsub.f32 %v257, %v1550
    %v1579 = vsub.f32 %v262, %v1553
    %v1580 = vsub.f32 %v265, %v1556
    %v1581 = vsub.f32 %v270, %v1559
    %v1582 = vsub.f32 %v273, %v1562
    %v1583 = vmul.f32 %v1563, 1.442695
    %v1584 = vpow.pop %v1583
    %v1585 = vmul.f32 %v1564, 1.442695
    %v1586 = vpow.pop %v1585
    %v1587 = vmul.f32 %v1565, 1.442695
    %v1588 = vpow.pop %v1587
    %v1589 = vmul.f32 %v1566, 1.442695
    %v1590 = vpow.pop %v1589
    %v1591 = vmul.f32 %v1567, 1.442695
    %v1592 = vpow.pop %v1591
    %v1593 = vmul.f32 %v1568, 1.442695
    %v1594 = vpow.pop %v1593
    %v1595 = vmul.f32 %v1569, 1.442695
    %v1596 = vpow.pop %v1595
    %v1597 = vmul.f32 %v1570, 1.442695
    %v1598 = vpow.pop %v1597
    %v1599 = vmul.f32 %v1571, 1.442695
    %v1600 = vpow.pop %v1599
    %v1601 = vmul.f32 %v1572, 1.442695
    %v1602 = vpow.pop %v1601
    %v1603 = vmul.f32 %v1573, 1.442695
    %v1604 = vpow.pop %v1603
    %v1605 = vmul.f32 %v1574, 1.442695
    %v1606 = vpow.pop %v1605
    %v1607 = vmul.f32 %v1575, 1.442695
    %v1608 = vpow.pop %v1607
    %v1609 = vmul.f32 %v1576, 1.442695
    %v1610 = vpow.pop %v1609
    %v1611 = vmul.f32 %v1577, 1.442695
    %v1612 = vpow.pop %v1611
    %v1613 = vmul.f32 %v1578, 1.442695
    %v1614 = vpow.pop %v1613
    %v1615 = vmul.f32 %v1579, 1.442695
    %v1616 = vpow.pop %v1615
    %v1617 = vmul.f32 %v1580, 1.442695
    %v1618 = vpow.pop %v1617
    %v1619 = vmul.f32 %v1581, 1.442695
    %v1620 = vpow.pop %v1619
    %v1621 = vmul.f32 %v1582, 1.442695
    %v1622 = vpow.pop %v1621
    %1643 = vrot.lane.b32.xlu0 %v1584, 84
    %v1644 = vpop.permute.xlu0 %1643
    %1645 = vrot.lane.b32.xlu0 %v1586, 84
    %v1646 = vpop.permute.xlu0 %1645
    %1647 = vrot.lane.b32.xlu0 %v1588, 84
    %v1648 = vpop.permute.xlu0 %1647
    %1649 = vrot.lane.b32.xlu0 %v1590, 84
    %v1650 = vpop.permute.xlu0 %1649
    %1651 = vrot.lane.b32.xlu0 %v1592, 84
    %v1652 = vpop.permute.xlu0 %1651
    %1653 = vrot.lane.b32.xlu0 %v1594, 84
    %v1654 = vpop.permute.xlu0 %1653
    %1655 = vrot.lane.b32.xlu0 %v1596, 84
    %v1656 = vpop.permute.xlu0 %1655
    %1657 = vrot.lane.b32.xlu0 %v1598, 84
    %v1658 = vpop.permute.xlu0 %1657
    %1659 = vrot.lane.b32.xlu0 %v1600, 84
    %v1660 = vpop.permute.xlu0 %1659
    %1661 = vrot.lane.b32.xlu0 %v1602, 84
    %v1662 = vpop.permute.xlu0 %1661
    %1663 = vrot.lane.b32.xlu0 %v1604, 84
    %v1664 = vpop.permute.xlu0 %1663
    %1665 = vrot.lane.b32.xlu0 %v1606, 84
    %v1666 = vpop.permute.xlu0 %1665
    %1667 = vrot.lane.b32.xlu0 %v1608, 84
    %v1668 = vpop.permute.xlu0 %1667
    %1669 = vrot.lane.b32.xlu0 %v1610, 84
    %v1670 = vpop.permute.xlu0 %1669
    %1671 = vrot.lane.b32.xlu0 %v1612, 84
    %v1672 = vpop.permute.xlu0 %1671
    %1673 = vrot.lane.b32.xlu0 %v1614, 84
    %v1674 = vpop.permute.xlu0 %1673
    %1675 = vrot.lane.b32.xlu0 %v1616, 84
    %v1676 = vpop.permute.xlu0 %1675
    %1677 = vrot.lane.b32.xlu0 %v1618, 84
    %v1678 = vpop.permute.xlu0 %1677
    %1679 = vrot.lane.b32.xlu0 %v1620, 84
    %v1680 = vpop.permute.xlu0 %1679
    %1681 = vrot.lane.b32.xlu0 %v1622, 84
    %v1682 = vpop.permute.xlu0 %1681
    %v1703 = vsel %vm497, %v1644, 0.0
    %1704 = vadd.xlane.f32.xlu0 %v1703
    %v1705 = vpop.xlane.xlu0 %1704
    %v1706 = vsel %vm497, %v1646, 0.0
    %1707 = vadd.xlane.f32.xlu0 %v1706
    %v1708 = vpop.xlane.xlu0 %1707
    %v1709 = vsel %vm497, %v1648, 0.0
    %1710 = vadd.xlane.f32.xlu0 %v1709
    %v1711 = vpop.xlane.xlu0 %1710
    %v1712 = vsel %vm497, %v1650, 0.0
    %1713 = vadd.xlane.f32.xlu0 %v1712
    %v1714 = vpop.xlane.xlu0 %1713
    %v1715 = vsel %vm497, %v1652, 0.0
    %1716 = vadd.xlane.f32.xlu0 %v1715
    %v1717 = vpop.xlane.xlu0 %1716
    %v1718 = vsel %vm497, %v1654, 0.0
    %1719 = vadd.xlane.f32.xlu0 %v1718
    %v1720 = vpop.xlane.xlu0 %1719
    %v1721 = vsel %vm497, %v1656, 0.0
    %1722 = vadd.xlane.f32.xlu0 %v1721
    %v1723 = vpop.xlane.xlu0 %1722
    %v1724 = vsel %vm497, %v1658, 0.0
    %1725 = vadd.xlane.f32.xlu0 %v1724
    %v1726 = vpop.xlane.xlu0 %1725
    %v1727 = vsel %vm497, %v1660, 0.0
    %1728 = vadd.xlane.f32.xlu0 %v1727
    %v1729 = vpop.xlane.xlu0 %1728
    %v1730 = vsel %vm497, %v1662, 0.0
    %1731 = vadd.xlane.f32.xlu0 %v1730
    %v1732 = vpop.xlane.xlu0 %1731
    %v1733 = vsel %vm497, %v1664, 0.0
    %1734 = vadd.xlane.f32.xlu0 %v1733
    %v1735 = vpop.xlane.xlu0 %1734
    %v1736 = vsel %vm497, %v1666, 0.0
    %1737 = vadd.xlane.f32.xlu0 %v1736
    %v1738 = vpop.xlane.xlu0 %1737
    %v1739 = vsel %vm497, %v1668, 0.0
    %1740 = vadd.xlane.f32.xlu0 %v1739
    %v1741 = vpop.xlane.xlu0 %1740
    %v1742 = vsel %vm497, %v1670, 0.0
    %1743 = vadd.xlane.f32.xlu0 %v1742
    %v1744 = vpop.xlane.xlu0 %1743
    %v1745 = vsel %vm497, %v1672, 0.0
    %1746 = vadd.xlane.f32.xlu0 %v1745
    %v1747 = vpop.xlane.xlu0 %1746
    %v1748 = vsel %vm497, %v1674, 0.0
    %1749 = vadd.xlane.f32.xlu0 %v1748
    %v1750 = vpop.xlane.xlu0 %1749
    %v1751 = vsel %vm497, %v1676, 0.0
    %1752 = vadd.xlane.f32.xlu0 %v1751
    %v1753 = vpop.xlane.xlu0 %1752
    %v1754 = vsel %vm497, %v1678, 0.0
    %1755 = vadd.xlane.f32.xlu0 %v1754
    %v1756 = vpop.xlane.xlu0 %1755
    %v1757 = vsel %vm497, %v1680, 0.0
    %1758 = vadd.xlane.f32.xlu0 %v1757
    %v1759 = vpop.xlane.xlu0 %1758
    %v1760 = vsel %vm497, %v1682, 0.0
    %1761 = vadd.xlane.f32.xlu0 %v1760
    %v1762 = vpop.xlane.xlu0 %1761
    %v1763 = vrcp.pop %v1705
    %v1764 = vmul.f32 %v1584, %v1763
    %v1765 = vrcp.pop %v1708
    %v1766 = vmul.f32 %v1586, %v1765
    %v1767 = vrcp.pop %v1711
    %v1768 = vmul.f32 %v1588, %v1767
    %v1769 = vrcp.pop %v1714
    %v1770 = vmul.f32 %v1590, %v1769
    %v1771 = vrcp.pop %v1717
    %v1772 = vmul.f32 %v1592, %v1771
    %v1773 = vrcp.pop %v1720
    %v1774 = vmul.f32 %v1594, %v1773
    %v1775 = vrcp.pop %v1723
    %v1776 = vmul.f32 %v1596, %v1775
    %v1777 = vrcp.pop %v1726
    %v1778 = vmul.f32 %v1598, %v1777
    %v1779 = vrcp.pop %v1729
    %v1780 = vmul.f32 %v1600, %v1779
    %v1781 = vrcp.pop %v1732
    %v1782 = vmul.f32 %v1602, %v1781
    %v1783 = vrcp.pop %v1735
    %v1784 = vmul.f32 %v1604, %v1783
    %v1785 = vrcp.pop %v1738
    %v1786 = vmul.f32 %v1606, %v1785
    %v1787 = vrcp.pop %v1741
    %v1788 = vmul.f32 %v1608, %v1787
    %v1789 = vrcp.pop %v1744
    %v1790 = vmul.f32 %v1610, %v1789
    %v1791 = vrcp.pop %v1747
    %v1792 = vmul.f32 %v1612, %v1791
    %v1793 = vrcp.pop %v1750
    %v1794 = vmul.f32 %v1614, %v1793
    %v1795 = vrcp.pop %v1753
    %v1796 = vmul.f32 %v1616, %v1795
    %v1797 = vrcp.pop %v1756
    %v1798 = vmul.f32 %v1618, %v1797
    %v1799 = vrcp.pop %v1759
    %v1800 = vmul.f32 %v1620, %v1799
    %v1801 = vrcp.pop %v1762
    %v1802 = vmul.f32 %v1622, %v1801
    %1823 = vrot.lane.b32.xlu0 %v1764, 96
    %v1824 = vpop.permute.xlu0 %1823
    %1825 = vrot.lane.b32.xlu0 %v1766, 96
    %v1826 = vpop.permute.xlu0 %1825
    %1827 = vrot.lane.b32.xlu0 %v1768, 96
    %v1828 = vpop.permute.xlu0 %1827
    %1829 = vrot.lane.b32.xlu0 %v1770, 96
    %v1830 = vpop.permute.xlu0 %1829
    %1831 = vrot.lane.b32.xlu0 %v1772, 96
    %v1832 = vpop.permute.xlu0 %1831
    %1833 = vrot.lane.b32.xlu0 %v1774, 96
    %v1834 = vpop.permute.xlu0 %1833
    %1835 = vrot.lane.b32.xlu0 %v1776, 96
    %v1836 = vpop.permute.xlu0 %1835
    %1837 = vrot.lane.b32.xlu0 %v1778, 96
    %v1838 = vpop.permute.xlu0 %1837
    %1839 = vrot.lane.b32.xlu0 %v1780, 96
    %v1840 = vpop.permute.xlu0 %1839
    %1841 = vrot.lane.b32.xlu0 %v1782, 96
    %v1842 = vpop.permute.xlu0 %1841
    %1843 = vrot.lane.b32.xlu0 %v1784, 96
    %v1844 = vpop.permute.xlu0 %1843
    %1845 = vrot.lane.b32.xlu0 %v1786, 96
    %v1846 = vpop.permute.xlu0 %1845
    %1847 = vrot.lane.b32.xlu0 %v1788, 96
    %v1848 = vpop.permute.xlu0 %1847
    %1849 = vrot.lane.b32.xlu0 %v1790, 96
    %v1850 = vpop.permute.xlu0 %1849
    %1851 = vrot.lane.b32.xlu0 %v1792, 96
    %v1852 = vpop.permute.xlu0 %1851
    %1853 = vrot.lane.b32.xlu0 %v1794, 96
    %v1854 = vpop.permute.xlu0 %1853
    %1855 = vrot.lane.b32.xlu0 %v1796, 96
    %v1856 = vpop.permute.xlu0 %1855
    %1857 = vrot.lane.b32.xlu0 %v1798, 96
    %v1858 = vpop.permute.xlu0 %1857
    %1859 = vrot.lane.b32.xlu0 %v1800, 96
    %v1860 = vpop.permute.xlu0 %1859
    %1861 = vrot.lane.b32.xlu0 %v1802, 96
    %v1862 = vpop.permute.xlu0 %1861
    %vm1883 = vcmask 130144
    %1884 = vst.msk [vmem:[%s7] sm:$0xff] %vm1883, %v1824
    %1885 = vst.msk [vmem:[%s7 + $0x8] sm:$0xff] %vm1883, %v1826
    %1886 = vst.msk [vmem:[%s7 + $0x10] sm:$0xff] %vm1883, %v1828
    %1887 = vst.msk [vmem:[%s7 + $0x18] sm:$0xff] %vm1883, %v1830
    %1888 = vst.msk [vmem:[%s7 + $0x20] sm:$0xff] %vm1883, %v1832
    %1889 = vst.msk [vmem:[%s7 + $0x28] sm:$0xff] %vm1883, %v1834
    %1890 = vst.msk [vmem:[%s7 + $0x30] sm:$0xff] %vm1883, %v1836
    %1891 = vst.msk [vmem:[%s7 + $0x38] sm:$0xff] %vm1883, %v1838
    %1892 = vst.msk [vmem:[%s7 + $0x40] sm:$0xff] %vm1883, %v1840
    %1893 = vst.msk [vmem:[%s7 + $0x48] sm:$0xff] %vm1883, %v1842
    %1894 = vst.msk [vmem:[%s7 + $0x50] sm:$0xff] %vm1883, %v1844
    %1895 = vst.msk [vmem:[%s7 + $0x58] sm:$0xff] %vm1883, %v1846
    %1896 = vst.msk [vmem:[%s7 + $0x60] sm:$0xff] %vm1883, %v1848
    %1897 = vst.msk [vmem:[%s7 + $0x68] sm:$0xff] %vm1883, %v1850
    %1898 = vst.msk [vmem:[%s7 + $0x70] sm:$0xff] %vm1883, %v1852
    %1899 = vst.msk [vmem:[%s7 + $0x78] sm:$0xff] %vm1883, %v1854
    %1900 = vst.msk [vmem:[%s7 + $0x80] sm:$0xff] %vm1883, %v1856
    %1901 = vst.msk [vmem:[%s7 + $0x88] sm:$0xff] %vm1883, %v1858
    %1902 = vst.msk [vmem:[%s7 + $0x90] sm:$0xff] %vm1883, %v1860
    %1903 = vst.msk [vmem:[%s7 + $0x98] sm:$0xff] %vm1883, %v1862
    %v1904 = vpack.c.bf16 %v40, %v39
    %v1905 = vpack.c.bf16 %v42, %v41
    %v1906 = vpack.c.bf16 %v44, %v43
    %v1907 = vpack.c.bf16 %v46, %v45
    %v1908 = vpack.c.bf16 %v48, %v47
    %v1909 = vpack.c.bf16 %v50, %v49
    %v1910 = vpack.c.bf16 %v52, %v51
    %v1911 = vpack.c.bf16 %v54, %v53
    %v1912 = vpack.c.bf16 %v56, %v55
    %v1913 = vpack.c.bf16 %v58, %v57
    %v1914 = vld [vmem:[%s4] sm:$0xf]
    %v1915 = vld [vmem:[%s4 + $0x4] sm:$0xf]
    %v1916 = vld [vmem:[%s4 + $0x8] sm:$0xf]
    %v1917 = vld [vmem:[%s4 + $0xc] sm:$0xf]
    %v1918 = vld [vmem:[#allocation2] sm:$0x1]
    %v1920 = vlaneseq
    %v1921 = vshrl.u32 %v1920, 7
    %v1922 = vsub.s32 0, %v1921
    %v1923 = vrot.slane %v1918, %v1922
    %v1929 = vunpack.c.l.b16 %v1914
    %v1930 = vunpack.c.l.b16 %v1915
    %v1931 = vunpack.c.l.b16 %v1916
    %v1932 = vunpack.c.l.b16 %v1917
    %v1933 = vpack.c.b16 %v1930, %v1929
    %v1934 = vpack.c.b16 %v1932, %v1931
    %v1938 = vsel %vm132, %v1904, 0
    %v1941 = vsel %vm132, %v1905, 0
    %v1944 = vsel %vm132, %v1906, 0
    %v1947 = vsel %vm132, %v1907, 0
    %v1950 = vsel %vm132, %v1908, 0
    %v1953 = vsel %vm132, %v1909, 0
    %v1956 = vsel %vm132, %v1910, 0
    %v1959 = vsel %vm132, %v1911, 0
    %v1962 = vsel %vm132, %v1912, 0
    %v1965 = vsel %vm132, %v1913, 0
    %1967 = vmatprep.subr.bf16.mxu0 0
    %1968 = vmatpush1.bf16.msra.mxu0 %v1933
    %1969 = vmatprep.subr.bf16.mxu0 0
    %1970 = vmatpush1.bf16.msra.mxu0 %v1934
    %1971 = vmatprep.subr.bf16.mxu0 0
    %1972 = vmatpush1.bf16.msra.mxu0 0
    %1973 = vmatprep.subr.bf16.mxu0 0
    %1974 = vmatpush1.bf16.msra.mxu0 0
    %1975 = vmatprep.subr.bf16.mxu0 0
    %1976 = vmatpush1.bf16.msra.mxu0 0
    %1977 = vmatprep.subr.bf16.mxu0 0
    %1978 = vmatpush1.bf16.msra.mxu0 0
    %1979 = vmatprep.subr.bf16.mxu0 0
    %1980 = vmatpush1.bf16.msra.mxu0 0
    %1981 = vmatprep.subr.bf16.mxu0 0
    %1982 = vmatpush1.bf16.msra.mxu0 0
    %1983 = vmatprep.subr.bf16.mxu0 0
    %1984 = vmatpush1.bf16.msra.mxu0 0
    %1985 = vmatprep.subr.bf16.mxu0 0
    %1986 = vmatpush1.bf16.msra.mxu0 0
    %1987 = vmatprep.subr.bf16.mxu0 0
    %1988 = vmatpush1.bf16.msra.mxu0 0
    %1989 = vmatprep.subr.bf16.mxu0 0
    %1990 = vmatpush1.bf16.msra.mxu0 0
    %1991 = vmatprep.subr.bf16.mxu0 0
    %1992 = vmatpush1.bf16.msra.mxu0 0
    %1993 = vmatprep.subr.bf16.mxu0 0
    %1994 = vmatpush1.bf16.msra.mxu0 0
    %1995 = vmatprep.subr.bf16.mxu0 0
    %1996 = vmatpush1.bf16.msra.mxu0 0
    %1997 = vmatprep.subr.bf16.mxu0 0
    %1998 = vmatpush1.bf16.msra.mxu0 0
    %1999 = vmatprep.mubr.bf16.mxu0 0
    %2000 = vmatmul.mubr.bf16.gmra.mrb[0].mxu0 %v1938
    %v2001 = vpop.f32.mrb[0].mxu0
    %v2002 = vadd.f32 %v1923, %v2001
    %v2003 = vpop.f32.mrb[0].mxu0
    %v2004 = vpop.f32.mrb[0].mxu0
    %v2005 = vadd.f32 %v1923, %v2004
    %v2006 = vpop.f32.mrb[0].mxu0
    %2007 = vmatprep.mubr.bf16.mxu0 0
    %2008 = vmatmul.mubr.bf16.gmra.mrb[0].mxu0 %v1941
    %v2009 = vpop.f32.mrb[0].mxu0
    %v2010 = vadd.f32 %v1923, %v2009
    %v2011 = vpop.f32.mrb[0].mxu0
    %v2012 = vpop.f32.mrb[0].mxu0
    %v2013 = vadd.f32 %v1923, %v2012
    %v2014 = vpop.f32.mrb[0].mxu0
    %2015 = vmatprep.mubr.bf16.mxu0 0
    %2016 = vmatmul.mubr.bf16.gmra.mrb[0].mxu0 %v1944
    %v2017 = vpop.f32.mrb[0].mxu0
    %v2018 = vadd.f32 %v1923, %v2017
    %v2019 = vpop.f32.mrb[0].mxu0
    %v2020 = vpop.f32.mrb[0].mxu0
    %v2021 = vadd.f32 %v1923, %v2020
    %v2022 = vpop.f32.mrb[0].mxu0
    %2023 = vmatprep.mubr.bf16.mxu0 0
    %2024 = vmatmul.mubr.bf16.gmra.mrb[0].mxu0 %v1947
    %v2025 = vpop.f32.mrb[0].mxu0
    %v2026 = vadd.f32 %v1923, %v2025
    %v2027 = vpop.f32.mrb[0].mxu0
    %v2028 = vpop.f32.mrb[0].mxu0
    %v2029 = vadd.f32 %v1923, %v2028
    %v2030 = vpop.f32.mrb[0].mxu0
    %2031 = vmatprep.mubr.bf16.mxu0 0
    %2032 = vmatmul.mubr.bf16.gmra.mrb[0].mxu0 %v1950
    %v2033 = vpop.f32.mrb[0].mxu0
    %v2034 = vadd.f32 %v1923, %v2033
    %v2035 = vpop.f32.mrb[0].mxu0
    %v2036 = vpop.f32.mrb[0].mxu0
    %v2037 = vadd.f32 %v1923, %v2036
    %v2038 = vpop.f32.mrb[0].mxu0
    %2039 = vmatprep.mubr.bf16.mxu0 0
    %2040 = vmatmul.mubr.bf16.gmra.mrb[0].mxu0 %v1953
    %v2041 = vpop.f32.mrb[0].mxu0
    %v2042 = vadd.f32 %v1923, %v2041
    %v2043 = vpop.f32.mrb[0].mxu0
    %v2044 = vpop.f32.mrb[0].mxu0
    %v2045 = vadd.f32 %v1923, %v2044
    %v2046 = vpop.f32.mrb[0].mxu0
    %2047 = vmatprep.mubr.bf16.mxu0 0
    %2048 = vmatmul.mubr.bf16.gmra.mrb[0].mxu0 %v1956
    %v2049 = vpop.f32.mrb[0].mxu0
    %v2050 = vadd.f32 %v1923, %v2049
    %v2051 = vpop.f32.mrb[0].mxu0
    %v2052 = vpop.f32.mrb[0].mxu0
    %v2053 = vadd.f32 %v1923, %v2052
    %v2054 = vpop.f32.mrb[0].mxu0
    %2055 = vmatprep.mubr.bf16.mxu0 0
    %2056 = vmatmul.mubr.bf16.gmra.mrb[0].mxu0 %v1959
    %v2057 = vpop.f32.mrb[0].mxu0
    %v2058 = vadd.f32 %v1923, %v2057
    %v2059 = vpop.f32.mrb[0].mxu0
    %v2060 = vpop.f32.mrb[0].mxu0
    %v2061 = vadd.f32 %v1923, %v2060
    %v2062 = vpop.f32.mrb[0].mxu0
    %2063 = vmatprep.mubr.bf16.mxu0 0
    %2064 = vmatmul.mubr.bf16.gmra.mrb[0].mxu0 %v1962
    %v2065 = vpop.f32.mrb[0].mxu0
    %v2066 = vadd.f32 %v1923, %v2065
    %v2067 = vpop.f32.mrb[0].mxu0
    %v2068 = vpop.f32.mrb[0].mxu0
    %v2069 = vadd.f32 %v1923, %v2068
    %v2070 = vpop.f32.mrb[0].mxu0
    %2071 = vmatprep.mubr.bf16.mxu0 0
    %2072 = vmatmul.mubr.bf16.gmra.mrb[0].mxu0 %v1965
    %v2073 = vpop.f32.mrb[0].mxu0
    %v2074 = vadd.f32 %v1923, %v2073
    %v2075 = vpop.f32.mrb[0].mxu0
    %v2076 = vpop.f32.mrb[0].mxu0
    %v2077 = vadd.f32 %v1923, %v2076
    %v2078 = vpop.f32.mrb[0].mxu0
    %2079 = vdwg.mxu0
    %2080 = vst.msk [vmem:[%s8] sm:$0xff] %vm132, %v2002
    %2081 = vst.msk [vmem:[%s8 + $0x8] sm:$0xff] %vm132, %v2005
    %2082 = vst.msk [vmem:[%s8 + $0x10] sm:$0xff] %vm132, %v2010
    %2083 = vst.msk [vmem:[%s8 + $0x18] sm:$0xff] %vm132, %v2013
    %2084 = vst.msk [vmem:[%s8 + $0x20] sm:$0xff] %vm132, %v2018
    %2085 = vst.msk [vmem:[%s8 + $0x28] sm:$0xff] %vm132, %v2021
    %2086 = vst.msk [vmem:[%s8 + $0x30] sm:$0xff] %vm132, %v2026
    %2087 = vst.msk [vmem:[%s8 + $0x38] sm:$0xff] %vm132, %v2029
    %2088 = vst.msk [vmem:[%s8 + $0x40] sm:$0xff] %vm132, %v2034
    %2089 = vst.msk [vmem:[%s8 + $0x48] sm:$0xff] %vm132, %v2037
    %2090 = vst.msk [vmem:[%s8 + $0x50] sm:$0xff] %vm132, %v2042
    %2091 = vst.msk [vmem:[%s8 + $0x58] sm:$0xff] %vm132, %v2045
    %2092 = vst.msk [vmem:[%s8 + $0x60] sm:$0xff] %vm132, %v2050
    %2093 = vst.msk [vmem:[%s8 + $0x68] sm:$0xff] %vm132, %v2053
    %2094 = vst.msk [vmem:[%s8 + $0x70] sm:$0xff] %vm132, %v2058
    %2095 = vst.msk [vmem:[%s8 + $0x78] sm:$0xff] %vm132, %v2061
    %2096 = vst.msk [vmem:[%s8 + $0x80] sm:$0xff] %vm132, %v2066
    %2097 = vst.msk [vmem:[%s8 + $0x88] sm:$0xff] %vm132, %v2069
    %2098 = vst.msk [vmem:[%s8 + $0x90] sm:$0xff] %vm132, %v2074
    %2099 = vst.msk [vmem:[%s8 + $0x98] sm:$0xff] %vm132, %v2077
    // Predicated region
    $region30: #{deformable_encoder_forward.6} parent=1 // pred_check
      _
    $region31: #{deformable_encoder_forward.6} parent=1 // pred_check_branch
      %2101 = sbr.rel (0) target = $region33
    $region32: #{deformable_encoder_forward.6} parent=1 // pred_region
      _
    $region33: #{deformable_encoder_forward.6} parent=1 // pred_fallthru
      _
    // Predicated region
    $region34: #{deformable_encoder_forward.6} parent=1 // pred_check
      _
    $region35: #{deformable_encoder_forward.6} parent=1 // pred_check_branch
      %2103 = sbr.rel (0) target = $region37
    $region36: #{deformable_encoder_forward.6} parent=1 // pred_region
      _
    $region37: #{deformable_encoder_forward.6} parent=1 // pred_fallthru
      _
    // Predicated region
    $region38: #{deformable_encoder_forward.6} parent=1 // pred_check
      _
    $region39: #{deformable_encoder_forward.6} parent=1 // pred_check_branch
      %2105 = sbr.rel (0) target = $region41
    $region40: #{deformable_encoder_forward.6} parent=1 // pred_region
      _
    $region41: #{deformable_encoder_forward.6} parent=1 // pred_fallthru
      _
    // Predicated region
    $region42: #{deformable_encoder_forward.6} parent=1 // pred_check
      _
    $region43: #{deformable_encoder_forward.6} parent=1 // pred_check_branch
      %2107 = sbr.rel (0) target = $region45
    $region44: #{deformable_encoder_forward.6} parent=1 // pred_region
      _
    $region45: #{deformable_encoder_forward.6} parent=1 // pred_fallthru
      _
    // Predicated region
    $region46: #{deformable_encoder_forward.6} parent=1 // pred_check
      _
    $region47: #{deformable_encoder_forward.6} parent=1 // pred_check_branch
      %2109 = sbr.rel (0) target = $region49
    $region48: #{deformable_encoder_forward.6} parent=1 // pred_region
      _
    $region49: #{deformable_encoder_forward.6} parent=1 // pred_fallthru
      _
    // Predicated region
    $region50: #{deformable_encoder_forward.6} parent=1 // pred_check
      _
    $region51: #{deformable_encoder_forward.6} parent=1 // pred_check_branch
      %2111 = sbr.rel (0) target = $region53
    $region52: #{deformable_encoder_forward.6} parent=1 // pred_region
      _
    $region53: #{deformable_encoder_forward.6} parent=1 // pred_fallthru
      _
    %2112 = vsyncpa [#allocation3], 1

// kernel: deformable_encoder_forward.7
$region0: #{deformable_encoder_forward.7}
  #allocation0 [shape = 'u32[]', space=smem, size = 0x4, offset = 0x4, fixed_abs, tag = 'smem constant byte address 0x4 - core index']
  #allocation1 [shape = 'u32[144,128]{1,0:T(1,128)}', space=vmem, size = 0x12000, scoped, tag = 'internal scratch']
  %s0 = inlined_call_operand.vmem [shape: f32[160,32], index: 0, kind: input, shape index: {}]
  %s1 = inlined_call_operand.vmem [shape: f32[160,32], index: 1, kind: input, shape index: {}]
  %s2 = inlined_call_operand.vmem [shape: bf16[32,32], index: 2, kind: input, shape index: {}]
  %s3 = inlined_call_operand.vmem [shape: f32[1,32], index: 3, kind: input, shape index: {}]
  %s4 = inlined_call_operand.vmem [shape: f32[1,32], index: 4, kind: input, shape index: {}]
  %s5 = inlined_call_operand.vmem [shape: f32[1,32], index: 5, kind: input, shape index: {}]
  %s6 = inlined_call_operand.vmem [shape: f32[160,32], index: 6, kind: output, shape index: {}]
  %s7 = sld [smem:[#allocation0]]
  $region34: #{deformable_encoder_forward.7} parent=0
    _
  %s9 = ssub.s32 1, %s7
  %s10 = scalar_select 0, %s9, %s7
  // Predicated region
  $region2: #{deformable_encoder_forward.7} parent=0 // pred_check
    _
  $region3: #{deformable_encoder_forward.7} parent=0 // pred_check_branch
    %12 = sbr.rel (0) target = $region5
  $region4: #{deformable_encoder_forward.7} parent=0 // pred_region
    _
  $region5: #{deformable_encoder_forward.7} parent=0 // pred_fallthru
    _
  // Predicated region
  $region6: #{deformable_encoder_forward.7} parent=0 // pred_check
    _
  $region7: #{deformable_encoder_forward.7} parent=0 // pred_check_branch
    %14 = sbr.rel (0) target = $region9
  $region8: #{deformable_encoder_forward.7} parent=0 // pred_region
    _
  $region9: #{deformable_encoder_forward.7} parent=0 // pred_fallthru
    _
  // Predicated region
  $region10: #{deformable_encoder_forward.7} parent=0 // pred_check
    _
  $region11: #{deformable_encoder_forward.7} parent=0 // pred_check_branch
    %16 = sbr.rel (0) target = $region13
  $region12: #{deformable_encoder_forward.7} parent=0 // pred_region
    _
  $region13: #{deformable_encoder_forward.7} parent=0 // pred_fallthru
    _
  // Predicated region
  $region14: #{deformable_encoder_forward.7} parent=0 // pred_check
    _
  $region15: #{deformable_encoder_forward.7} parent=0 // pred_check_branch
    %18 = sbr.rel (0) target = $region17
  $region16: #{deformable_encoder_forward.7} parent=0 // pred_region
    _
  $region17: #{deformable_encoder_forward.7} parent=0 // pred_fallthru
    _
  // Predicated region
  $region18: #{deformable_encoder_forward.7} parent=0 // pred_check
    _
  $region19: #{deformable_encoder_forward.7} parent=0 // pred_check_branch
    %20 = sbr.rel (0) target = $region21
  $region20: #{deformable_encoder_forward.7} parent=0 // pred_region
    _
  $region21: #{deformable_encoder_forward.7} parent=0 // pred_fallthru
    _
  // Predicated region
  $region22: #{deformable_encoder_forward.7} parent=0 // pred_check
    _
  $region23: #{deformable_encoder_forward.7} parent=0 // pred_check_branch
    %22 = sbr.rel (0) target = $region25
  $region24: #{deformable_encoder_forward.7} parent=0 // pred_region
    _
  $region25: #{deformable_encoder_forward.7} parent=0 // pred_fallthru
    _
  %v24 = vld [vmem:[%s0] sm:$0xff]
  %v25 = vld [vmem:[%s0 + $0x8] sm:$0xff]
  %v26 = vld [vmem:[%s0 + $0x10] sm:$0xff]
  %v27 = vld [vmem:[%s0 + $0x18] sm:$0xff]
  %v28 = vld [vmem:[%s0 + $0x20] sm:$0xff]
  %v29 = vld [vmem:[%s0 + $0x28] sm:$0xff]
  %v30 = vld [vmem:[%s0 + $0x30] sm:$0xff]
  %v31 = vld [vmem:[%s0 + $0x38] sm:$0xff]
  %v32 = vld [vmem:[%s0 + $0x40] sm:$0xff]
  %v33 = vld [vmem:[%s0 + $0x48] sm:$0xff]
  %v34 = vld [vmem:[%s0 + $0x50] sm:$0xff]
  %v35 = vld [vmem:[%s0 + $0x58] sm:$0xff]
  %v36 = vld [vmem:[%s0 + $0x60] sm:$0xff]
  %v37 = vld [vmem:[%s0 + $0x68] sm:$0xff]
  %v38 = vld [vmem:[%s0 + $0x70] sm:$0xff]
  %v39 = vld [vmem:[%s0 + $0x78] sm:$0xff]
  %v40 = vld [vmem:[%s0 + $0x80] sm:$0xff]
  %v41 = vld [vmem:[%s0 + $0x88] sm:$0xff]
  %v42 = vld [vmem:[%s0 + $0x90] sm:$0xff]
  %v43 = vld [vmem:[%s0 + $0x98] sm:$0xff]
  %v44 = vpack.c.bf16 %v25, %v24
  %v45 = vpack.c.bf16 %v27, %v26
  %v46 = vpack.c.bf16 %v29, %v28
  %v47 = vpack.c.bf16 %v31, %v30
  %v48 = vpack.c.bf16 %v33, %v32
  %v49 = vpack.c.bf16 %v35, %v34
  %v50 = vpack.c.bf16 %v37, %v36
  %v51 = vpack.c.bf16 %v39, %v38
  %v52 = vpack.c.bf16 %v41, %v40
  %v53 = vpack.c.bf16 %v43, %v42
  %v54 = vld [vmem:[%s2] sm:$0xf]
  %v55 = vld [vmem:[%s2 + $0x4] sm:$0xf]
  %v56 = vld [vmem:[%s2 + $0x8] sm:$0xf]
  %v57 = vld [vmem:[%s2 + $0xc] sm:$0xf]
  %v58 = vld [vmem:[%s3] sm:$0x1]
  %v60 = vlaneseq
  %v61 = vshrl.u32 %v60, 7
  %v62 = vsub.s32 0, %v61
  %v63 = vrot.slane %v58, %v62
  %v69 = vunpack.c.l.b16 %v54
  %v70 = vunpack.c.l.b16 %v55
  %v71 = vunpack.c.l.b16 %v56
  %v72 = vunpack.c.l.b16 %v57
  %v73 = vpack.c.b16 %v70, %v69
  %v74 = vpack.c.b16 %v72, %v71
  %vm77 = vcmask 261120
  %v79 = vsel %vm77, %v44, 0
  %v82 = vsel %vm77, %v45, 0
  %v85 = vsel %vm77, %v46, 0
  %v88 = vsel %vm77, %v47, 0
  %v91 = vsel %vm77, %v48, 0
  %v94 = vsel %vm77, %v49, 0
  %v97 = vsel %vm77, %v50, 0
  %v100 = vsel %vm77, %v51, 0
  %v103 = vsel %vm77, %v52, 0
  %v106 = vsel %vm77, %v53, 0
  %108 = vmatprep.subr.bf16.mxu0 0
  %109 = vmatpush1.bf16.msra.mxu0 %v73
  %110 = vmatprep.subr.bf16.mxu0 0
  %111 = vmatpush1.bf16.msra.mxu0 %v74
  %112 = vmatprep.subr.bf16.mxu0 0
  %113 = vmatpush1.bf16.msra.mxu0 0
  %114 = vmatprep.subr.bf16.mxu0 0
  %115 = vmatpush1.bf16.msra.mxu0 0
  %116 = vmatprep.subr.bf16.mxu0 0
  %117 = vmatpush1.bf16.msra.mxu0 0
  %118 = vmatprep.subr.bf16.mxu0 0
  %119 = vmatpush1.bf16.msra.mxu0 0
  %120 = vmatprep.subr.bf16.mxu0 0
  %121 = vmatpush1.bf16.msra.mxu0 0
  %122 = vmatprep.subr.bf16.mxu0 0
  %123 = vmatpush1.bf16.msra.mxu0 0
  %124 = vmatprep.subr.bf16.mxu0 0
  %125 = vmatpush1.bf16.msra.mxu0 0
  %126 = vmatprep.subr.bf16.mxu0 0
  %127 = vmatpush1.bf16.msra.mxu0 0
  %128 = vmatprep.subr.bf16.mxu0 0
  %129 = vmatpush1.bf16.msra.mxu0 0
  %130 = vmatprep.subr.bf16.mxu0 0
  %131 = vmatpush1.bf16.msra.mxu0 0
  %132 = vmatprep.subr.bf16.mxu0 0
  %133 = vmatpush1.bf16.msra.mxu0 0
  %134 = vmatprep.subr.bf16.mxu0 0
  %135 = vmatpush1.bf16.msra.mxu0 0
  %136 = vmatprep.subr.bf16.mxu0 0
  %137 = vmatpush1.bf16.msra.mxu0 0
  %138 = vmatprep.subr.bf16.mxu0 0
  %139 = vmatpush1.bf16.msra.mxu0 0
  %140 = vmatprep.mubr.bf16.mxu0 0
  %141 = vmatmul.mubr.bf16.gmra.mrb[0].mxu0 %v79
  %v142 = vpop.f32.mrb[0].mxu0
  %v143 = vadd.f32 %v63, %v142
  %v144 = vpop.f32.mrb[0].mxu0
  %v145 = vpop.f32.mrb[0].mxu0
  %v146 = vadd.f32 %v63, %v145
  %v147 = vpop.f32.mrb[0].mxu0
  %148 = vmatprep.mubr.bf16.mxu0 0
  %149 = vmatmul.mubr.bf16.gmra.mrb[0].mxu0 %v82
  %v150 = vpop.f32.mrb[0].mxu0
  %v151 = vadd.f32 %v63, %v150
  %v152 = vpop.f32.mrb[0].mxu0
  %v153 = vpop.f32.mrb[0].mxu0
  %v154 = vadd.f32 %v63, %v153
  %v155 = vpop.f32.mrb[0].mxu0
  %156 = vmatprep.mubr.bf16.mxu0 0
  %157 = vmatmul.mubr.bf16.gmra.mrb[0].mxu0 %v85
  %v158 = vpop.f32.mrb[0].mxu0
  %v159 = vadd.f32 %v63, %v158
  %v160 = vpop.f32.mrb[0].mxu0
  %v161 = vpop.f32.mrb[0].mxu0
  %v162 = vadd.f32 %v63, %v161
  %v163 = vpop.f32.mrb[0].mxu0
  %164 = vmatprep.mubr.bf16.mxu0 0
  %165 = vmatmul.mubr.bf16.gmra.mrb[0].mxu0 %v88
  %v166 = vpop.f32.mrb[0].mxu0
  %v167 = vadd.f32 %v63, %v166
  %v168 = vpop.f32.mrb[0].mxu0
  %v169 = vpop.f32.mrb[0].mxu0
  %v170 = vadd.f32 %v63, %v169
  %v171 = vpop.f32.mrb[0].mxu0
  %172 = vmatprep.mubr.bf16.mxu0 0
  %173 = vmatmul.mubr.bf16.gmra.mrb[0].mxu0 %v91
  %v174 = vpop.f32.mrb[0].mxu0
  %v175 = vadd.f32 %v63, %v174
  %v176 = vpop.f32.mrb[0].mxu0
  %v177 = vpop.f32.mrb[0].mxu0
  %v178 = vadd.f32 %v63, %v177
  %v179 = vpop.f32.mrb[0].mxu0
  %180 = vmatprep.mubr.bf16.mxu0 0
  %181 = vmatmul.mubr.bf16.gmra.mrb[0].mxu0 %v94
  %v182 = vpop.f32.mrb[0].mxu0
  %v183 = vadd.f32 %v63, %v182
  %v184 = vpop.f32.mrb[0].mxu0
  %v185 = vpop.f32.mrb[0].mxu0
  %v186 = vadd.f32 %v63, %v185
  %v187 = vpop.f32.mrb[0].mxu0
  %188 = vmatprep.mubr.bf16.mxu0 0
  %189 = vmatmul.mubr.bf16.gmra.mrb[0].mxu0 %v97
  %v190 = vpop.f32.mrb[0].mxu0
  %v191 = vadd.f32 %v63, %v190
  %v192 = vpop.f32.mrb[0].mxu0
  %v193 = vpop.f32.mrb[0].mxu0
  %v194 = vadd.f32 %v63, %v193
  %v195 = vpop.f32.mrb[0].mxu0
  %196 = vmatprep.mubr.bf16.mxu0 0
  %197 = vmatmul.mubr.bf16.gmra.mrb[0].mxu0 %v100
  %v198 = vpop.f32.mrb[0].mxu0
  %v199 = vadd.f32 %v63, %v198
  %v200 = vpop.f32.mrb[0].mxu0
  %v201 = vpop.f32.mrb[0].mxu0
  %v202 = vadd.f32 %v63, %v201
  %v203 = vpop.f32.mrb[0].mxu0
  %204 = vmatprep.mubr.bf16.mxu0 0
  %205 = vmatmul.mubr.bf16.gmra.mrb[0].mxu0 %v103
  %v206 = vpop.f32.mrb[0].mxu0
  %v207 = vadd.f32 %v63, %v206
  %v208 = vpop.f32.mrb[0].mxu0
  %v209 = vpop.f32.mrb[0].mxu0
  %v210 = vadd.f32 %v63, %v209
  %v211 = vpop.f32.mrb[0].mxu0
  %212 = vmatprep.mubr.bf16.mxu0 0
  %213 = vmatmul.mubr.bf16.gmra.mrb[0].mxu0 %v106
  %v214 = vpop.f32.mrb[0].mxu0
  %v215 = vadd.f32 %v63, %v214
  %v216 = vpop.f32.mrb[0].mxu0
  %v217 = vpop.f32.mrb[0].mxu0
  %v218 = vadd.f32 %v63, %v217
  %v219 = vpop.f32.mrb[0].mxu0
  %220 = vdwg.mxu0
  %v221 = vld [vmem:[%s1] sm:$0xff]
  %v222 = vld [vmem:[%s1 + $0x8] sm:$0xff]
  %v223 = vld [vmem:[%s1 + $0x10] sm:$0xff]
  %v224 = vld [vmem:[%s1 + $0x18] sm:$0xff]
  %v225 = vld [vmem:[%s1 + $0x20] sm:$0xff]
  %v226 = vld [vmem:[%s1 + $0x28] sm:$0xff]
  %v227 = vld [vmem:[%s1 + $0x30] sm:$0xff]
  %v228 = vld [vmem:[%s1 + $0x38] sm:$0xff]
  %v229 = vld [vmem:[%s1 + $0x40] sm:$0xff]
  %v230 = vld [vmem:[%s1 + $0x48] sm:$0xff]
  %v231 = vld [vmem:[%s1 + $0x50] sm:$0xff]
  %v232 = vld [vmem:[%s1 + $0x58] sm:$0xff]
  %v233 = vld [vmem:[%s1 + $0x60] sm:$0xff]
  %v234 = vld [vmem:[%s1 + $0x68] sm:$0xff]
  %v235 = vld [vmem:[%s1 + $0x70] sm:$0xff]
  %v236 = vld [vmem:[%s1 + $0x78] sm:$0xff]
  %v237 = vld [vmem:[%s1 + $0x80] sm:$0xff]
  %v238 = vld [vmem:[%s1 + $0x88] sm:$0xff]
  %v239 = vld [vmem:[%s1 + $0x90] sm:$0xff]
  %v240 = vld [vmem:[%s1 + $0x98] sm:$0xff]
  %v241 = vadd.f32 %v143, %v221
  %v242 = vadd.f32 %v146, %v222
  %v243 = vadd.f32 %v151, %v223
  %v244 = vadd.f32 %v154, %v224
  %v245 = vadd.f32 %v159, %v225
  %v246 = vadd.f32 %v162, %v226
  %v247 = vadd.f32 %v167, %v227
  %v248 = vadd.f32 %v170, %v228
  %v249 = vadd.f32 %v175, %v229
  %v250 = vadd.f32 %v178, %v230
  %v251 = vadd.f32 %v183, %v231
  %v252 = vadd.f32 %v186, %v232
  %v253 = vadd.f32 %v191, %v233
  %v254 = vadd.f32 %v194, %v234
  %v255 = vadd.f32 %v199, %v235
  %v256 = vadd.f32 %v202, %v236
  %v257 = vadd.f32 %v207, %v237
  %v258 = vadd.f32 %v210, %v238
  %v259 = vadd.f32 %v215, %v239
  %v260 = vadd.f32 %v218, %v240
  %v261 = vsel %vm77, %v241, 0.0
  %262 = vadd.xlane.f32.xlu0 %v261
  %v263 = vpop.xlane.xlu0 %262
  %v264 = vsel %vm77, %v242, 0.0
  %265 = vadd.xlane.f32.xlu0 %v264
  %v266 = vpop.xlane.xlu0 %265
  %v267 = vsel %vm77, %v243, 0.0
  %268 = vadd.xlane.f32.xlu0 %v267
  %v269 = vpop.xlane.xlu0 %268
  %v270 = vsel %vm77, %v244, 0.0
  %271 = vadd.xlane.f32.xlu0 %v270
  %v272 = vpop.xlane.xlu0 %271
  %v273 = vsel %vm77, %v245, 0.0
  %274 = vadd.xlane.f32.xlu0 %v273
  %v275 = vpop.xlane.xlu0 %274
  %v276 = vsel %vm77, %v246, 0.0
  %277 = vadd.xlane.f32.xlu0 %v276
  %v278 = vpop.xlane.xlu0 %277
  %v279 = vsel %vm77, %v247, 0.0
  %280 = vadd.xlane.f32.xlu0 %v279
  %v281 = vpop.xlane.xlu0 %280
  %v282 = vsel %vm77, %v248, 0.0
  %283 = vadd.xlane.f32.xlu0 %v282
  %v284 = vpop.xlane.xlu0 %283
  %v285 = vsel %vm77, %v249, 0.0
  %286 = vadd.xlane.f32.xlu0 %v285
  %v287 = vpop.xlane.xlu0 %286
  %v288 = vsel %vm77, %v250, 0.0
  %289 = vadd.xlane.f32.xlu0 %v288
  %v290 = vpop.xlane.xlu0 %289
  %v291 = vsel %vm77, %v251, 0.0
  %292 = vadd.xlane.f32.xlu0 %v291
  %v293 = vpop.xlane.xlu0 %292
  %v294 = vsel %vm77, %v252, 0.0
  %295 = vadd.xlane.f32.xlu0 %v294
  %v296 = vpop.xlane.xlu0 %295
  %v297 = vsel %vm77, %v253, 0.0
  %298 = vadd.xlane.f32.xlu0 %v297
  %v299 = vpop.xlane.xlu0 %298
  %v300 = vsel %vm77, %v254, 0.0
  %301 = vadd.xlane.f32.xlu0 %v300
  %v302 = vpop.xlane.xlu0 %301
  %v303 = vsel %vm77, %v255, 0.0
  %304 = vadd.xlane.f32.xlu0 %v303
  %v305 = vpop.xlane.xlu0 %304
  %v306 = vsel %vm77, %v256, 0.0
  %307 = vadd.xlane.f32.xlu0 %v306
  %v308 = vpop.xlane.xlu0 %307
  %v309 = vsel %vm77, %v257, 0.0
  %310 = vadd.xlane.f32.xlu0 %v309
  %v311 = vpop.xlane.xlu0 %310
  %v312 = vsel %vm77, %v258, 0.0
  %313 = vadd.xlane.f32.xlu0 %v312
  %v314 = vpop.xlane.xlu0 %313
  %v315 = vsel %vm77, %v259, 0.0
  %316 = vadd.xlane.f32.xlu0 %v315
  %v317 = vpop.xlane.xlu0 %316
  %v318 = vsel %vm77, %v260, 0.0
  %319 = vadd.xlane.f32.xlu0 %v318
  %v320 = vpop.xlane.xlu0 %319
  %v321 = vrcp.pop 32.0
  %v322 = vmul.f32 %v263, %v321
  %v323 = vmul.f32 %v266, %v321
  %v324 = vmul.f32 %v269, %v321
  %v325 = vmul.f32 %v272, %v321
  %v326 = vmul.f32 %v275, %v321
  %v327 = vmul.f32 %v278, %v321
  %v328 = vmul.f32 %v281, %v321
  %v329 = vmul.f32 %v284, %v321
  %v330 = vmul.f32 %v287, %v321
  %v331 = vmul.f32 %v290, %v321
  %v332 = vmul.f32 %v293, %v321
  %v333 = vmul.f32 %v296, %v321
  %v334 = vmul.f32 %v299, %v321
  %v335 = vmul.f32 %v302, %v321
  %v336 = vmul.f32 %v305, %v321
  %v337 = vmul.f32 %v308, %v321
  %v338 = vmul.f32 %v311, %v321
  %v339 = vmul.f32 %v314, %v321
  %v340 = vmul.f32 %v317, %v321
  %v341 = vmul.f32 %v320, %v321
  %v342 = vsub.f32 %v241, %v322
  %v343 = vsub.f32 %v242, %v323
  %v344 = vsub.f32 %v243, %v324
  %v345 = vsub.f32 %v244, %v325
  %v346 = vsub.f32 %v245, %v326
  %v347 = vsub.f32 %v246, %v327
  %v348 = vsub.f32 %v247, %v328
  %v349 = vsub.f32 %v248, %v329
  %v350 = vsub.f32 %v249, %v330
  %v351 = vsub.f32 %v250, %v331
  %v352 = vsub.f32 %v251, %v332
  %v353 = vsub.f32 %v252, %v333
  %v354 = vsub.f32 %v253, %v334
  %v355 = vsub.f32 %v254, %v335
  %v356 = vsub.f32 %v255, %v336
  %v357 = vsub.f32 %v256, %v337
  %v358 = vsub.f32 %v257, %v338
  %v359 = vsub.f32 %v258, %v339
  %v360 = vsub.f32 %v259, %v340
  %v361 = vsub.f32 %v260, %v341
  %v362 = vmul.f32 %v342, %v342
  %v363 = vmul.f32 %v343, %v343
  %v364 = vmul.f32 %v344, %v344
  %v365 = vmul.f32 %v345, %v345
  %v366 = vmul.f32 %v346, %v346
  %v367 = vmul.f32 %v347, %v347
  %v368 = vmul.f32 %v348, %v348
  %v369 = vmul.f32 %v349, %v349
  %v370 = vmul.f32 %v350, %v350
  %v371 = vmul.f32 %v351, %v351
  %v372 = vmul.f32 %v352, %v352
  %v373 = vmul.f32 %v353, %v353
  %v374 = vmul.f32 %v354, %v354
  %v375 = vmul.f32 %v355, %v355
  %v376 = vmul.f32 %v356, %v356
  %v377 = vmul.f32 %v357, %v357
  %v378 = vmul.f32 %v358, %v358
  %v379 = vmul.f32 %v359, %v359
  %v380 = vmul.f32 %v360, %v360
  %v381 = vmul.f32 %v361, %v361
  %v382 = vsel %vm77, %v362, 0.0
  %383 = vadd.xlane.f32.xlu0 %v382
  %v384 = vpop.xlane.xlu0 %383
  %v385 = vsel %vm77, %v363, 0.0
  %386 = vadd.xlane.f32.xlu0 %v385
  %v387 = vpop.xlane.xlu0 %386
  %v388 = vsel %vm77, %v364, 0.0
  %389 = vadd.xlane.f32.xlu0 %v388
  %v390 = vpop.xlane.xlu0 %389
  %v391 = vsel %vm77, %v365, 0.0
  %392 = vadd.xlane.f32.xlu0 %v391
  %v393 = vpop.xlane.xlu0 %392
  %v394 = vsel %vm77, %v366, 0.0
  %395 = vadd.xlane.f32.xlu0 %v394
  %v396 = vpop.xlane.xlu0 %395
  %v397 = vsel %vm77, %v367, 0.0
  %398 = vadd.xlane.f32.xlu0 %v397
  %v399 = vpop.xlane.xlu0 %398
  %v400 = vsel %vm77, %v368, 0.0
  %401 = vadd.xlane.f32.xlu0 %v400
  %v402 = vpop.xlane.xlu0 %401
  %v403 = vsel %vm77, %v369, 0.0
  %404 = vadd.xlane.f32.xlu0 %v403
  %v405 = vpop.xlane.xlu0 %404
  %v406 = vsel %vm77, %v370, 0.0
  %407 = vadd.xlane.f32.xlu0 %v406
  %v408 = vpop.xlane.xlu0 %407
  %v409 = vsel %vm77, %v371, 0.0
  %410 = vadd.xlane.f32.xlu0 %v409
  %v411 = vpop.xlane.xlu0 %410
  %v412 = vsel %vm77, %v372, 0.0
  %413 = vadd.xlane.f32.xlu0 %v412
  %v414 = vpop.xlane.xlu0 %413
  %v415 = vsel %vm77, %v373, 0.0
  %416 = vadd.xlane.f32.xlu0 %v415
  %v417 = vpop.xlane.xlu0 %416
  %v418 = vsel %vm77, %v374, 0.0
  %419 = vadd.xlane.f32.xlu0 %v418
  %v420 = vpop.xlane.xlu0 %419
  %v421 = vsel %vm77, %v375, 0.0
  %422 = vadd.xlane.f32.xlu0 %v421
  %v423 = vpop.xlane.xlu0 %422
  %v424 = vsel %vm77, %v376, 0.0
  %425 = vadd.xlane.f32.xlu0 %v424
  %v426 = vpop.xlane.xlu0 %425
  %v427 = vsel %vm77, %v377, 0.0
  %428 = vadd.xlane.f32.xlu0 %v427
  %v429 = vpop.xlane.xlu0 %428
  %v430 = vsel %vm77, %v378, 0.0
  %431 = vadd.xlane.f32.xlu0 %v430
  %v432 = vpop.xlane.xlu0 %431
  %v433 = vsel %vm77, %v379, 0.0
  %434 = vadd.xlane.f32.xlu0 %v433
  %v435 = vpop.xlane.xlu0 %434
  %v436 = vsel %vm77, %v380, 0.0
  %437 = vadd.xlane.f32.xlu0 %v436
  %v438 = vpop.xlane.xlu0 %437
  %v439 = vsel %vm77, %v381, 0.0
  %440 = vadd.xlane.f32.xlu0 %v439
  %v441 = vpop.xlane.xlu0 %440
  %v442 = vmul.f32 %v384, %v321
  %v443 = vmul.f32 %v387, %v321
  %v444 = vmul.f32 %v390, %v321
  %v445 = vmul.f32 %v393, %v321
  %v446 = vmul.f32 %v396, %v321
  %v447 = vmul.f32 %v399, %v321
  %v448 = vmul.f32 %v402, %v321
  %v449 = vmul.f32 %v405, %v321
  %v450 = vmul.f32 %v408, %v321
  %v451 = vmul.f32 %v411, %v321
  %v452 = vmul.f32 %v414, %v321
  %v453 = vmul.f32 %v417, %v321
  %v454 = vmul.f32 %v420, %v321
  %v455 = vmul.f32 %v423, %v321
  %v456 = vmul.f32 %v426, %v321
  %v457 = vmul.f32 %v429, %v321
  %v458 = vmul.f32 %v432, %v321
  %v459 = vmul.f32 %v435, %v321
  %v460 = vmul.f32 %v438, %v321
  %v461 = vmul.f32 %v441, %v321
  %v462 = vadd.f32 %v442, 1e-05
  %v463 = vadd.f32 %v443, 1e-05
  %v464 = vadd.f32 %v444, 1e-05
  %v465 = vadd.f32 %v445, 1e-05
  %v466 = vadd.f32 %v446, 1e-05
  %v467 = vadd.f32 %v447, 1e-05
  %v468 = vadd.f32 %v448, 1e-05
  %v469 = vadd.f32 %v449, 1e-05
  %v470 = vadd.f32 %v450, 1e-05
  %v471 = vadd.f32 %v451, 1e-05
  %v472 = vadd.f32 %v452, 1e-05
  %v473 = vadd.f32 %v453, 1e-05
  %v474 = vadd.f32 %v454, 1e-05
  %v475 = vadd.f32 %v455, 1e-05
  %v476 = vadd.f32 %v456, 1e-05
  %v477 = vadd.f32 %v457, 1e-05
  %v478 = vadd.f32 %v458, 1e-05
  %v479 = vadd.f32 %v459, 1e-05
  %v480 = vadd.f32 %v460, 1e-05
  %v481 = vadd.f32 %v461, 1e-05
  %v482 = vrsqrt.pop %v462
  %v483 = vrsqrt.pop %v463
  %v484 = vrsqrt.pop %v464
  %v485 = vrsqrt.pop %v465
  %v486 = vrsqrt.pop %v466
  %v487 = vrsqrt.pop %v467
  %v488 = vrsqrt.pop %v468
  %v489 = vrsqrt.pop %v469
  %v490 = vrsqrt.pop %v470
  %v491 = vrsqrt.pop %v471
  %v492 = vrsqrt.pop %v472
  %v493 = vrsqrt.pop %v473
  %v494 = vrsqrt.pop %v474
  %v495 = vrsqrt.pop %v475
  %v496 = vrsqrt.pop %v476
  %v497 = vrsqrt.pop %v477
  %v498 = vrsqrt.pop %v478
  %v499 = vrsqrt.pop %v479
  %v500 = vrsqrt.pop %v480
  %v501 = vrsqrt.pop %v481
  %v502 = vmul.f32 %v342, %v482
  %v503 = vmul.f32 %v343, %v483
  %v504 = vmul.f32 %v344, %v484
  %v505 = vmul.f32 %v345, %v485
  %v506 = vmul.f32 %v346, %v486
  %v507 = vmul.f32 %v347, %v487
  %v508 = vmul.f32 %v348, %v488
  %v509 = vmul.f32 %v349, %v489
  %v510 = vmul.f32 %v350, %v490
  %v511 = vmul.f32 %v351, %v491
  %v512 = vmul.f32 %v352, %v492
  %v513 = vmul.f32 %v353, %v493
  %v514 = vmul.f32 %v354, %v494
  %v515 = vmul.f32 %v355, %v495
  %v516 = vmul.f32 %v356, %v496
  %v517 = vmul.f32 %v357, %v497
  %v518 = vmul.f32 %v358, %v498
  %v519 = vmul.f32 %v359, %v499
  %v520 = vmul.f32 %v360, %v500
  %v521 = vmul.f32 %v361, %v501
  %v522 = vld [vmem:[%s4] sm:$0x1]
  %v524 = vlaneseq
  %v525 = vshrl.u32 %v524, 7
  %v526 = vsub.s32 0, %v525
  %v527 = vrot.slane %v522, %v526
  %v529 = vmul.f32 %v502, %v527
  %v530 = vmul.f32 %v503, %v527
  %v531 = vmul.f32 %v504, %v527
  %v532 = vmul.f32 %v505, %v527
  %v533 = vmul.f32 %v506, %v527
  %v534 = vmul.f32 %v507, %v527
  %v535 = vmul.f32 %v508, %v527
  %v536 = vmul.f32 %v509, %v527
  %v537 = vmul.f32 %v510, %v527
  %v538 = vmul.f32 %v511, %v527
  %v539 = vmul.f32 %v512, %v527
  %v540 = vmul.f32 %v513, %v527
  %v541 = vmul.f32 %v514, %v527
  %v542 = vmul.f32 %v515, %v527
  %v543 = vmul.f32 %v516, %v527
  %v544 = vmul.f32 %v517, %v527
  %v545 = vmul.f32 %v518, %v527
  %v546 = vmul.f32 %v519, %v527
  %v547 = vmul.f32 %v520, %v527
  %v548 = vmul.f32 %v521, %v527
  %v549 = vld [vmem:[%s5] sm:$0x1]
  %v551 = vlaneseq
  %v552 = vshrl.u32 %v551, 7
  %v553 = vsub.s32 0, %v552
  %v554 = vrot.slane %v549, %v553
  %v556 = vadd.f32 %v529, %v554
  %v557 = vadd.f32 %v530, %v554
  %v558 = vadd.f32 %v531, %v554
  %v559 = vadd.f32 %v532, %v554
  %v560 = vadd.f32 %v533, %v554
  %v561 = vadd.f32 %v534, %v554
  %v562 = vadd.f32 %v535, %v554
  %v563 = vadd.f32 %v536, %v554
  %v564 = vadd.f32 %v537, %v554
  %v565 = vadd.f32 %v538, %v554
  %v566 = vadd.f32 %v539, %v554
  %v567 = vadd.f32 %v540, %v554
  %v568 = vadd.f32 %v541, %v554
  %v569 = vadd.f32 %v542, %v554
  %v570 = vadd.f32 %v543, %v554
  %v571 = vadd.f32 %v544, %v554
  %v572 = vadd.f32 %v545, %v554
  %v573 = vadd.f32 %v546, %v554
  %v574 = vadd.f32 %v547, %v554
  %v575 = vadd.f32 %v548, %v554
  %576 = vst.msk [vmem:[%s6] sm:$0xff] %vm77, %v556
  %577 = vst.msk [vmem:[%s6 + $0x8] sm:$0xff] %vm77, %v557
  %578 = vst.msk [vmem:[%s6 + $0x10] sm:$0xff] %vm77, %v558
  %579 = vst.msk [vmem:[%s6 + $0x18] sm:$0xff] %vm77, %v559
  %580 = vst.msk [vmem:[%s6 + $0x20] sm:$0xff] %vm77, %v560
  %581 = vst.msk [vmem:[%s6 + $0x28] sm:$0xff] %vm77, %v561
  %582 = vst.msk [vmem:[%s6 + $0x30] sm:$0xff] %vm77, %v562
  %583 = vst.msk [vmem:[%s6 + $0x38] sm:$0xff] %vm77, %v563
  %584 = vst.msk [vmem:[%s6 + $0x40] sm:$0xff] %vm77, %v564
  %585 = vst.msk [vmem:[%s6 + $0x48] sm:$0xff] %vm77, %v565
  %586 = vst.msk [vmem:[%s6 + $0x50] sm:$0xff] %vm77, %v566
  %587 = vst.msk [vmem:[%s6 + $0x58] sm:$0xff] %vm77, %v567
  %588 = vst.msk [vmem:[%s6 + $0x60] sm:$0xff] %vm77, %v568
  %589 = vst.msk [vmem:[%s6 + $0x68] sm:$0xff] %vm77, %v569
  %590 = vst.msk [vmem:[%s6 + $0x70] sm:$0xff] %vm77, %v570
  %591 = vst.msk [vmem:[%s6 + $0x78] sm:$0xff] %vm77, %v571
  %592 = vst.msk [vmem:[%s6 + $0x80] sm:$0xff] %vm77, %v572
  %593 = vst.msk [vmem:[%s6 + $0x88] sm:$0xff] %vm77, %v573
  %594 = vst.msk [vmem:[%s6 + $0x90] sm:$0xff] %vm77, %v574
  %595 = vst.msk [vmem:[%s6 + $0x98] sm:$0xff] %vm77, %v575
  // Predicated region
  $region26: #{deformable_encoder_forward.7} parent=0 // pred_check
    _
  $region27: #{deformable_encoder_forward.7} parent=0 // pred_check_branch
    %597 = sbr.rel (0) target = $region29
  $region28: #{deformable_encoder_forward.7} parent=0 // pred_region
    _
  $region29: #{deformable_encoder_forward.7} parent=0 // pred_fallthru
    _
  // Predicated region
  $region30: #{deformable_encoder_forward.7} parent=0 // pred_check
    _
  $region31: #{deformable_encoder_forward.7} parent=0 // pred_check_branch
    %599 = sbr.rel (0) target = $region33
  $region32: #{deformable_encoder_forward.7} parent=0 // pred_region
    _
  $region33: #{deformable_encoder_forward.7} parent=0 // pred_fallthru
    _

// kernel: deformable_encoder_forward.8
$region0: #{deformable_encoder_forward.8}
  #allocation0 [shape = 'u32[]', space=smem, size = 0x4, offset = 0x4, fixed_abs, tag = 'smem constant byte address 0x4 - core index']
  #allocation1 [shape = 'u32[144,128]{1,0:T(1,128)}', space=vmem, size = 0x12000, scoped, tag = 'internal scratch']
  %s0 = inlined_call_operand.vmem [shape: f32[160,32], index: 0, kind: input, shape index: {}]
  %s1 = inlined_call_operand.vmem [shape: bf16[32,64], index: 1, kind: input, shape index: {}]
  %s2 = inlined_call_operand.vmem [shape: f32[1,64], index: 2, kind: input, shape index: {}]
  %s3 = inlined_call_operand.vmem [shape: bf16[64,32], index: 3, kind: input, shape index: {}]
  %s4 = inlined_call_operand.vmem [shape: f32[1,32], index: 4, kind: input, shape index: {}]
  %s5 = inlined_call_operand.vmem [shape: f32[1,32], index: 5, kind: input, shape index: {}]
  %s6 = inlined_call_operand.vmem [shape: f32[1,32], index: 6, kind: input, shape index: {}]
  %s7 = inlined_call_operand.vmem [shape: f32[160,32], index: 7, kind: output, shape index: {}]
  %s8 = sld [smem:[#allocation0]]
  $region38: #{deformable_encoder_forward.8} parent=0
    _
  %s10 = ssub.s32 1, %s8
  %s11 = scalar_select 0, %s10, %s8
  // Predicated region
  $region2: #{deformable_encoder_forward.8} parent=0 // pred_check
    _
  $region3: #{deformable_encoder_forward.8} parent=0 // pred_check_branch
    %13 = sbr.rel (0) target = $region5
  $region4: #{deformable_encoder_forward.8} parent=0 // pred_region
    _
  $region5: #{deformable_encoder_forward.8} parent=0 // pred_fallthru
    _
  // Predicated region
  $region6: #{deformable_encoder_forward.8} parent=0 // pred_check
    _
  $region7: #{deformable_encoder_forward.8} parent=0 // pred_check_branch
    %15 = sbr.rel (0) target = $region9
  $region8: #{deformable_encoder_forward.8} parent=0 // pred_region
    _
  $region9: #{deformable_encoder_forward.8} parent=0 // pred_fallthru
    _
  // Predicated region
  $region10: #{deformable_encoder_forward.8} parent=0 // pred_check
    _
  $region11: #{deformable_encoder_forward.8} parent=0 // pred_check_branch
    %17 = sbr.rel (0) target = $region13
  $region12: #{deformable_encoder_forward.8} parent=0 // pred_region
    _
  $region13: #{deformable_encoder_forward.8} parent=0 // pred_fallthru
    _
  // Predicated region
  $region14: #{deformable_encoder_forward.8} parent=0 // pred_check
    _
  $region15: #{deformable_encoder_forward.8} parent=0 // pred_check_branch
    %19 = sbr.rel (0) target = $region17
  $region16: #{deformable_encoder_forward.8} parent=0 // pred_region
    _
  $region17: #{deformable_encoder_forward.8} parent=0 // pred_fallthru
    _
  // Predicated region
  $region18: #{deformable_encoder_forward.8} parent=0 // pred_check
    _
  $region19: #{deformable_encoder_forward.8} parent=0 // pred_check_branch
    %21 = sbr.rel (0) target = $region21
  $region20: #{deformable_encoder_forward.8} parent=0 // pred_region
    _
  $region21: #{deformable_encoder_forward.8} parent=0 // pred_fallthru
    _
  // Predicated region
  $region22: #{deformable_encoder_forward.8} parent=0 // pred_check
    _
  $region23: #{deformable_encoder_forward.8} parent=0 // pred_check_branch
    %23 = sbr.rel (0) target = $region25
  $region24: #{deformable_encoder_forward.8} parent=0 // pred_region
    _
  $region25: #{deformable_encoder_forward.8} parent=0 // pred_fallthru
    _
  // Predicated region
  $region26: #{deformable_encoder_forward.8} parent=0 // pred_check
    _
  $region27: #{deformable_encoder_forward.8} parent=0 // pred_check_branch
    %25 = sbr.rel (0) target = $region29
  $region28: #{deformable_encoder_forward.8} parent=0 // pred_region
    _
  $region29: #{deformable_encoder_forward.8} parent=0 // pred_fallthru
    _
  %v27 = vld [vmem:[%s0] sm:$0xff]
  %v28 = vld [vmem:[%s0 + $0x8] sm:$0xff]
  %v29 = vld [vmem:[%s0 + $0x10] sm:$0xff]
  %v30 = vld [vmem:[%s0 + $0x18] sm:$0xff]
  %v31 = vld [vmem:[%s0 + $0x20] sm:$0xff]
  %v32 = vld [vmem:[%s0 + $0x28] sm:$0xff]
  %v33 = vld [vmem:[%s0 + $0x30] sm:$0xff]
  %v34 = vld [vmem:[%s0 + $0x38] sm:$0xff]
  %v35 = vld [vmem:[%s0 + $0x40] sm:$0xff]
  %v36 = vld [vmem:[%s0 + $0x48] sm:$0xff]
  %v37 = vld [vmem:[%s0 + $0x50] sm:$0xff]
  %v38 = vld [vmem:[%s0 + $0x58] sm:$0xff]
  %v39 = vld [vmem:[%s0 + $0x60] sm:$0xff]
  %v40 = vld [vmem:[%s0 + $0x68] sm:$0xff]
  %v41 = vld [vmem:[%s0 + $0x70] sm:$0xff]
  %v42 = vld [vmem:[%s0 + $0x78] sm:$0xff]
  %v43 = vld [vmem:[%s0 + $0x80] sm:$0xff]
  %v44 = vld [vmem:[%s0 + $0x88] sm:$0xff]
  %v45 = vld [vmem:[%s0 + $0x90] sm:$0xff]
  %v46 = vld [vmem:[%s0 + $0x98] sm:$0xff]
  %v47 = vpack.c.bf16 %v28, %v27
  %v48 = vpack.c.bf16 %v30, %v29
  %v49 = vpack.c.bf16 %v32, %v31
  %v50 = vpack.c.bf16 %v34, %v33
  %v51 = vpack.c.bf16 %v36, %v35
  %v52 = vpack.c.bf16 %v38, %v37
  %v53 = vpack.c.bf16 %v40, %v39
  %v54 = vpack.c.bf16 %v42, %v41
  %v55 = vpack.c.bf16 %v44, %v43
  %v56 = vpack.c.bf16 %v46, %v45
  %v57 = vld [vmem:[%s1] sm:$0xf]
  %v58 = vld [vmem:[%s1 + $0x4] sm:$0xf]
  %v59 = vld [vmem:[%s1 + $0x8] sm:$0xf]
  %v60 = vld [vmem:[%s1 + $0xc] sm:$0xf]
  %v61 = vld [vmem:[%s2] sm:$0x1]
  %v63 = vlaneseq
  %v64 = vshrl.u32 %v63, 7
  %v65 = vsub.s32 0, %v64
  %v66 = vrot.slane %v61, %v65
  %v72 = vunpack.c.l.b16 %v57
  %v73 = vunpack.c.l.b16 %v58
  %v74 = vunpack.c.l.b16 %v59
  %v75 = vunpack.c.l.b16 %v60
  %v76 = vpack.c.b16 %v73, %v72
  %v77 = vpack.c.b16 %v75, %v74
  %vm80 = vcmask 261120
  %v82 = vsel %vm80, %v47, 0
  %v85 = vsel %vm80, %v48, 0
  %v88 = vsel %vm80, %v49, 0
  %v91 = vsel %vm80, %v50, 0
  %v94 = vsel %vm80, %v51, 0
  %v97 = vsel %vm80, %v52, 0
  %v100 = vsel %vm80, %v53, 0
  %v103 = vsel %vm80, %v54, 0
  %v106 = vsel %vm80, %v55, 0
  %v109 = vsel %vm80, %v56, 0
  %111 = vmatprep.subr.bf16.mxu0 0
  %112 = vmatpush1.bf16.msra.mxu0 %v76
  %113 = vmatprep.subr.bf16.mxu0 0
  %114 = vmatpush1.bf16.msra.mxu0 %v77
  %115 = vmatprep.subr.bf16.mxu0 0
  %116 = vmatpush1.bf16.msra.mxu0 0
  %117 = vmatprep.subr.bf16.mxu0 0
  %118 = vmatpush1.bf16.msra.mxu0 0
  %119 = vmatprep.subr.bf16.mxu0 0
  %120 = vmatpush1.bf16.msra.mxu0 0
  %121 = vmatprep.subr.bf16.mxu0 0
  %122 = vmatpush1.bf16.msra.mxu0 0
  %123 = vmatprep.subr.bf16.mxu0 0
  %124 = vmatpush1.bf16.msra.mxu0 0
  %125 = vmatprep.subr.bf16.mxu0 0
  %126 = vmatpush1.bf16.msra.mxu0 0
  %127 = vmatprep.subr.bf16.mxu0 0
  %128 = vmatpush1.bf16.msra.mxu0 0
  %129 = vmatprep.subr.bf16.mxu0 0
  %130 = vmatpush1.bf16.msra.mxu0 0
  %131 = vmatprep.subr.bf16.mxu0 0
  %132 = vmatpush1.bf16.msra.mxu0 0
  %133 = vmatprep.subr.bf16.mxu0 0
  %134 = vmatpush1.bf16.msra.mxu0 0
  %135 = vmatprep.subr.bf16.mxu0 0
  %136 = vmatpush1.bf16.msra.mxu0 0
  %137 = vmatprep.subr.bf16.mxu0 0
  %138 = vmatpush1.bf16.msra.mxu0 0
  %139 = vmatprep.subr.bf16.mxu0 0
  %140 = vmatpush1.bf16.msra.mxu0 0
  %141 = vmatprep.subr.bf16.mxu0 0
  %142 = vmatpush1.bf16.msra.mxu0 0
  %143 = vmatprep.mubr.bf16.mxu0 0
  %144 = vmatmul.mubr.bf16.gmra.mrb[0].mxu0 %v82
  %v145 = vpop.f32.mrb[0].mxu0
  %v146 = vadd.f32 %v66, %v145
  %v147 = vpop.f32.mrb[0].mxu0
  %v148 = vpop.f32.mrb[0].mxu0
  %v149 = vadd.f32 %v66, %v148
  %v150 = vpop.f32.mrb[0].mxu0
  %151 = vmatprep.mubr.bf16.mxu0 0
  %152 = vmatmul.mubr.bf16.gmra.mrb[0].mxu0 %v85
  %v153 = vpop.f32.mrb[0].mxu0
  %v154 = vadd.f32 %v66, %v153
  %v155 = vpop.f32.mrb[0].mxu0
  %v156 = vpop.f32.mrb[0].mxu0
  %v157 = vadd.f32 %v66, %v156
  %v158 = vpop.f32.mrb[0].mxu0
  %159 = vmatprep.mubr.bf16.mxu0 0
  %160 = vmatmul.mubr.bf16.gmra.mrb[0].mxu0 %v88
  %v161 = vpop.f32.mrb[0].mxu0
  %v162 = vadd.f32 %v66, %v161
  %v163 = vpop.f32.mrb[0].mxu0
  %v164 = vpop.f32.mrb[0].mxu0
  %v165 = vadd.f32 %v66, %v164
  %v166 = vpop.f32.mrb[0].mxu0
  %167 = vmatprep.mubr.bf16.mxu0 0
  %168 = vmatmul.mubr.bf16.gmra.mrb[0].mxu0 %v91
  %v169 = vpop.f32.mrb[0].mxu0
  %v170 = vadd.f32 %v66, %v169
  %v171 = vpop.f32.mrb[0].mxu0
  %v172 = vpop.f32.mrb[0].mxu0
  %v173 = vadd.f32 %v66, %v172
  %v174 = vpop.f32.mrb[0].mxu0
  %175 = vmatprep.mubr.bf16.mxu0 0
  %176 = vmatmul.mubr.bf16.gmra.mrb[0].mxu0 %v94
  %v177 = vpop.f32.mrb[0].mxu0
  %v178 = vadd.f32 %v66, %v177
  %v179 = vpop.f32.mrb[0].mxu0
  %v180 = vpop.f32.mrb[0].mxu0
  %v181 = vadd.f32 %v66, %v180
  %v182 = vpop.f32.mrb[0].mxu0
  %183 = vmatprep.mubr.bf16.mxu0 0
  %184 = vmatmul.mubr.bf16.gmra.mrb[0].mxu0 %v97
  %v185 = vpop.f32.mrb[0].mxu0
  %v186 = vadd.f32 %v66, %v185
  %v187 = vpop.f32.mrb[0].mxu0
  %v188 = vpop.f32.mrb[0].mxu0
  %v189 = vadd.f32 %v66, %v188
  %v190 = vpop.f32.mrb[0].mxu0
  %191 = vmatprep.mubr.bf16.mxu0 0
  %192 = vmatmul.mubr.bf16.gmra.mrb[0].mxu0 %v100
  %v193 = vpop.f32.mrb[0].mxu0
  %v194 = vadd.f32 %v66, %v193
  %v195 = vpop.f32.mrb[0].mxu0
  %v196 = vpop.f32.mrb[0].mxu0
  %v197 = vadd.f32 %v66, %v196
  %v198 = vpop.f32.mrb[0].mxu0
  %199 = vmatprep.mubr.bf16.mxu0 0
  %200 = vmatmul.mubr.bf16.gmra.mrb[0].mxu0 %v103
  %v201 = vpop.f32.mrb[0].mxu0
  %v202 = vadd.f32 %v66, %v201
  %v203 = vpop.f32.mrb[0].mxu0
  %v204 = vpop.f32.mrb[0].mxu0
  %v205 = vadd.f32 %v66, %v204
  %v206 = vpop.f32.mrb[0].mxu0
  %207 = vmatprep.mubr.bf16.mxu0 0
  %208 = vmatmul.mubr.bf16.gmra.mrb[0].mxu0 %v106
  %v209 = vpop.f32.mrb[0].mxu0
  %v210 = vadd.f32 %v66, %v209
  %v211 = vpop.f32.mrb[0].mxu0
  %v212 = vpop.f32.mrb[0].mxu0
  %v213 = vadd.f32 %v66, %v212
  %v214 = vpop.f32.mrb[0].mxu0
  %215 = vmatprep.mubr.bf16.mxu0 0
  %216 = vmatmul.mubr.bf16.gmra.mrb[0].mxu0 %v109
  %v217 = vpop.f32.mrb[0].mxu0
  %v218 = vadd.f32 %v66, %v217
  %v219 = vpop.f32.mrb[0].mxu0
  %v220 = vpop.f32.mrb[0].mxu0
  %v221 = vadd.f32 %v66, %v220
  %v222 = vpop.f32.mrb[0].mxu0
  %223 = vdwg.mxu0
  %v224 = vmax.f32 %v146, 0.0
  %v225 = vmax.f32 %v149, 0.0
  %v226 = vmax.f32 %v154, 0.0
  %v227 = vmax.f32 %v157, 0.0
  %v228 = vmax.f32 %v162, 0.0
  %v229 = vmax.f32 %v165, 0.0
  %v230 = vmax.f32 %v170, 0.0
  %v231 = vmax.f32 %v173, 0.0
  %v232 = vmax.f32 %v178, 0.0
  %v233 = vmax.f32 %v181, 0.0
  %v234 = vmax.f32 %v186, 0.0
  %v235 = vmax.f32 %v189, 0.0
  %v236 = vmax.f32 %v194, 0.0
  %v237 = vmax.f32 %v197, 0.0
  %v238 = vmax.f32 %v202, 0.0
  %v239 = vmax.f32 %v205, 0.0
  %v240 = vmax.f32 %v210, 0.0
  %v241 = vmax.f32 %v213, 0.0
  %v242 = vmax.f32 %v218, 0.0
  %v243 = vmax.f32 %v221, 0.0
  %v244 = vpack.c.bf16 %v225, %v224
  %v245 = vpack.c.bf16 %v227, %v226
  %v246 = vpack.c.bf16 %v229, %v228
  %v247 = vpack.c.bf16 %v231, %v230
  %v248 = vpack.c.bf16 %v233, %v232
  %v249 = vpack.c.bf16 %v235, %v234
  %v250 = vpack.c.bf16 %v237, %v236
  %v251 = vpack.c.bf16 %v239, %v238
  %v252 = vpack.c.bf16 %v241, %v240
  %v253 = vpack.c.bf16 %v243, %v242
  %v254 = vld [vmem:[%s3] sm:$0xf]
  %v255 = vld [vmem:[%s3 + $0x4] sm:$0xf]
  %v256 = vld [vmem:[%s3 + $0x8] sm:$0xf]
  %v257 = vld [vmem:[%s3 + $0xc] sm:$0xf]
  %v258 = vld [vmem:[%s3 + $0x10] sm:$0xf]
  %v259 = vld [vmem:[%s3 + $0x14] sm:$0xf]
  %v260 = vld [vmem:[%s3 + $0x18] sm:$0xf]
  %v261 = vld [vmem:[%s3 + $0x1c] sm:$0xf]
  %v262 = vld [vmem:[%s4] sm:$0x1]
  %v264 = vlaneseq
  %v265 = vshrl.u32 %v264, 7
  %v266 = vsub.s32 0, %v265
  %v267 = vrot.slane %v262, %v266
  %v277 = vunpack.c.l.b16 %v254
  %v278 = vunpack.c.l.b16 %v255
  %v279 = vunpack.c.l.b16 %v256
  %v280 = vunpack.c.l.b16 %v257
  %v281 = vunpack.c.l.b16 %v258
  %v282 = vunpack.c.l.b16 %v259
  %v283 = vunpack.c.l.b16 %v260
  %v284 = vunpack.c.l.b16 %v261
  %v285 = vpack.c.b16 %v278, %v277
  %v286 = vpack.c.b16 %v280, %v279
  %v287 = vpack.c.b16 %v282, %v281
  %v288 = vpack.c.b16 %v284, %v283
  %vm293 = vcmask 523264
  %v295 = vsel %vm293, %v244, 0
  %v298 = vsel %vm293, %v245, 0
  %v301 = vsel %vm293, %v246, 0
  %v304 = vsel %vm293, %v247, 0
  %v307 = vsel %vm293, %v248, 0
  %v310 = vsel %vm293, %v249, 0
  %v313 = vsel %vm293, %v250, 0
  %v316 = vsel %vm293, %v251, 0
  %v319 = vsel %vm293, %v252, 0
  %v322 = vsel %vm293, %v253, 0
  %324 = vmatprep.subr.bf16.mxu0 0
  %325 = vmatpush1.bf16.msra.mxu0 %v285
  %326 = vmatprep.subr.bf16.mxu0 0
  %327 = vmatpush1.bf16.msra.mxu0 %v286
  %328 = vmatprep.subr.bf16.mxu0 0
  %329 = vmatpush1.bf16.msra.mxu0 %v287
  %330 = vmatprep.subr.bf16.mxu0 0
  %331 = vmatpush1.bf16.msra.mxu0 %v288
  %332 = vmatprep.subr.bf16.mxu0 0
  %333 = vmatpush1.bf16.msra.mxu0 0
  %334 = vmatprep.subr.bf16.mxu0 0
  %335 = vmatpush1.bf16.msra.mxu0 0
  %336 = vmatprep.subr.bf16.mxu0 0
  %337 = vmatpush1.bf16.msra.mxu0 0
  %338 = vmatprep.subr.bf16.mxu0 0
  %339 = vmatpush1.bf16.msra.mxu0 0
  %340 = vmatprep.subr.bf16.mxu0 0
  %341 = vmatpush1.bf16.msra.mxu0 0
  %342 = vmatprep.subr.bf16.mxu0 0
  %343 = vmatpush1.bf16.msra.mxu0 0
  %344 = vmatprep.subr.bf16.mxu0 0
  %345 = vmatpush1.bf16.msra.mxu0 0
  %346 = vmatprep.subr.bf16.mxu0 0
  %347 = vmatpush1.bf16.msra.mxu0 0
  %348 = vmatprep.subr.bf16.mxu0 0
  %349 = vmatpush1.bf16.msra.mxu0 0
  %350 = vmatprep.subr.bf16.mxu0 0
  %351 = vmatpush1.bf16.msra.mxu0 0
  %352 = vmatprep.subr.bf16.mxu0 0
  %353 = vmatpush1.bf16.msra.mxu0 0
  %354 = vmatprep.subr.bf16.mxu0 0
  %355 = vmatpush1.bf16.msra.mxu0 0
  %356 = vmatprep.mubr.bf16.mxu0 0
  %357 = vmatmul.mubr.bf16.gmra.mrb[0].mxu0 %v295
  %v358 = vpop.f32.mrb[0].mxu0
  %v359 = vadd.f32 %v267, %v358
  %v360 = vpop.f32.mrb[0].mxu0
  %v361 = vpop.f32.mrb[0].mxu0
  %v362 = vadd.f32 %v267, %v361
  %v363 = vpop.f32.mrb[0].mxu0
  %364 = vmatprep.mubr.bf16.mxu0 0
  %365 = vmatmul.mubr.bf16.gmra.mrb[0].mxu0 %v298
  %v366 = vpop.f32.mrb[0].mxu0
  %v367 = vadd.f32 %v267, %v366
  %v368 = vpop.f32.mrb[0].mxu0
  %v369 = vpop.f32.mrb[0].mxu0
  %v370 = vadd.f32 %v267, %v369
  %v371 = vpop.f32.mrb[0].mxu0
  %372 = vmatprep.mubr.bf16.mxu0 0
  %373 = vmatmul.mubr.bf16.gmra.mrb[0].mxu0 %v301
  %v374 = vpop.f32.mrb[0].mxu0
  %v375 = vadd.f32 %v267, %v374
  %v376 = vpop.f32.mrb[0].mxu0
  %v377 = vpop.f32.mrb[0].mxu0
  %v378 = vadd.f32 %v267, %v377
  %v379 = vpop.f32.mrb[0].mxu0
  %380 = vmatprep.mubr.bf16.mxu0 0
  %381 = vmatmul.mubr.bf16.gmra.mrb[0].mxu0 %v304
  %v382 = vpop.f32.mrb[0].mxu0
  %v383 = vadd.f32 %v267, %v382
  %v384 = vpop.f32.mrb[0].mxu0
  %v385 = vpop.f32.mrb[0].mxu0
  %v386 = vadd.f32 %v267, %v385
  %v387 = vpop.f32.mrb[0].mxu0
  %388 = vmatprep.mubr.bf16.mxu0 0
  %389 = vmatmul.mubr.bf16.gmra.mrb[0].mxu0 %v307
  %v390 = vpop.f32.mrb[0].mxu0
  %v391 = vadd.f32 %v267, %v390
  %v392 = vpop.f32.mrb[0].mxu0
  %v393 = vpop.f32.mrb[0].mxu0
  %v394 = vadd.f32 %v267, %v393
  %v395 = vpop.f32.mrb[0].mxu0
  %396 = vmatprep.mubr.bf16.mxu0 0
  %397 = vmatmul.mubr.bf16.gmra.mrb[0].mxu0 %v310
  %v398 = vpop.f32.mrb[0].mxu0
  %v399 = vadd.f32 %v267, %v398
  %v400 = vpop.f32.mrb[0].mxu0
  %v401 = vpop.f32.mrb[0].mxu0
  %v402 = vadd.f32 %v267, %v401
  %v403 = vpop.f32.mrb[0].mxu0
  %404 = vmatprep.mubr.bf16.mxu0 0
  %405 = vmatmul.mubr.bf16.gmra.mrb[0].mxu0 %v313
  %v406 = vpop.f32.mrb[0].mxu0
  %v407 = vadd.f32 %v267, %v406
  %v408 = vpop.f32.mrb[0].mxu0
  %v409 = vpop.f32.mrb[0].mxu0
  %v410 = vadd.f32 %v267, %v409
  %v411 = vpop.f32.mrb[0].mxu0
  %412 = vmatprep.mubr.bf16.mxu0 0
  %413 = vmatmul.mubr.bf16.gmra.mrb[0].mxu0 %v316
  %v414 = vpop.f32.mrb[0].mxu0
  %v415 = vadd.f32 %v267, %v414
  %v416 = vpop.f32.mrb[0].mxu0
  %v417 = vpop.f32.mrb[0].mxu0
  %v418 = vadd.f32 %v267, %v417
  %v419 = vpop.f32.mrb[0].mxu0
  %420 = vmatprep.mubr.bf16.mxu0 0
  %421 = vmatmul.mubr.bf16.gmra.mrb[0].mxu0 %v319
  %v422 = vpop.f32.mrb[0].mxu0
  %v423 = vadd.f32 %v267, %v422
  %v424 = vpop.f32.mrb[0].mxu0
  %v425 = vpop.f32.mrb[0].mxu0
  %v426 = vadd.f32 %v267, %v425
  %v427 = vpop.f32.mrb[0].mxu0
  %428 = vmatprep.mubr.bf16.mxu0 0
  %429 = vmatmul.mubr.bf16.gmra.mrb[0].mxu0 %v322
  %v430 = vpop.f32.mrb[0].mxu0
  %v431 = vadd.f32 %v267, %v430
  %v432 = vpop.f32.mrb[0].mxu0
  %v433 = vpop.f32.mrb[0].mxu0
  %v434 = vadd.f32 %v267, %v433
  %v435 = vpop.f32.mrb[0].mxu0
  %436 = vdwg.mxu0
  %v437 = vadd.f32 %v27, %v359
  %v438 = vadd.f32 %v28, %v362
  %v439 = vadd.f32 %v29, %v367
  %v440 = vadd.f32 %v30, %v370
  %v441 = vadd.f32 %v31, %v375
  %v442 = vadd.f32 %v32, %v378
  %v443 = vadd.f32 %v33, %v383
  %v444 = vadd.f32 %v34, %v386
  %v445 = vadd.f32 %v35, %v391
  %v446 = vadd.f32 %v36, %v394
  %v447 = vadd.f32 %v37, %v399
  %v448 = vadd.f32 %v38, %v402
  %v449 = vadd.f32 %v39, %v407
  %v450 = vadd.f32 %v40, %v410
  %v451 = vadd.f32 %v41, %v415
  %v452 = vadd.f32 %v42, %v418
  %v453 = vadd.f32 %v43, %v423
  %v454 = vadd.f32 %v44, %v426
  %v455 = vadd.f32 %v45, %v431
  %v456 = vadd.f32 %v46, %v434
  %v457 = vsel %vm80, %v437, 0.0
  %458 = vadd.xlane.f32.xlu0 %v457
  %v459 = vpop.xlane.xlu0 %458
  %v460 = vsel %vm80, %v438, 0.0
  %461 = vadd.xlane.f32.xlu0 %v460
  %v462 = vpop.xlane.xlu0 %461
  %v463 = vsel %vm80, %v439, 0.0
  %464 = vadd.xlane.f32.xlu0 %v463
  %v465 = vpop.xlane.xlu0 %464
  %v466 = vsel %vm80, %v440, 0.0
  %467 = vadd.xlane.f32.xlu0 %v466
  %v468 = vpop.xlane.xlu0 %467
  %v469 = vsel %vm80, %v441, 0.0
  %470 = vadd.xlane.f32.xlu0 %v469
  %v471 = vpop.xlane.xlu0 %470
  %v472 = vsel %vm80, %v442, 0.0
  %473 = vadd.xlane.f32.xlu0 %v472
  %v474 = vpop.xlane.xlu0 %473
  %v475 = vsel %vm80, %v443, 0.0
  %476 = vadd.xlane.f32.xlu0 %v475
  %v477 = vpop.xlane.xlu0 %476
  %v478 = vsel %vm80, %v444, 0.0
  %479 = vadd.xlane.f32.xlu0 %v478
  %v480 = vpop.xlane.xlu0 %479
  %v481 = vsel %vm80, %v445, 0.0
  %482 = vadd.xlane.f32.xlu0 %v481
  %v483 = vpop.xlane.xlu0 %482
  %v484 = vsel %vm80, %v446, 0.0
  %485 = vadd.xlane.f32.xlu0 %v484
  %v486 = vpop.xlane.xlu0 %485
  %v487 = vsel %vm80, %v447, 0.0
  %488 = vadd.xlane.f32.xlu0 %v487
  %v489 = vpop.xlane.xlu0 %488
  %v490 = vsel %vm80, %v448, 0.0
  %491 = vadd.xlane.f32.xlu0 %v490
  %v492 = vpop.xlane.xlu0 %491
  %v493 = vsel %vm80, %v449, 0.0
  %494 = vadd.xlane.f32.xlu0 %v493
  %v495 = vpop.xlane.xlu0 %494
  %v496 = vsel %vm80, %v450, 0.0
  %497 = vadd.xlane.f32.xlu0 %v496
  %v498 = vpop.xlane.xlu0 %497
  %v499 = vsel %vm80, %v451, 0.0
  %500 = vadd.xlane.f32.xlu0 %v499
  %v501 = vpop.xlane.xlu0 %500
  %v502 = vsel %vm80, %v452, 0.0
  %503 = vadd.xlane.f32.xlu0 %v502
  %v504 = vpop.xlane.xlu0 %503
  %v505 = vsel %vm80, %v453, 0.0
  %506 = vadd.xlane.f32.xlu0 %v505
  %v507 = vpop.xlane.xlu0 %506
  %v508 = vsel %vm80, %v454, 0.0
  %509 = vadd.xlane.f32.xlu0 %v508
  %v510 = vpop.xlane.xlu0 %509
  %v511 = vsel %vm80, %v455, 0.0
  %512 = vadd.xlane.f32.xlu0 %v511
  %v513 = vpop.xlane.xlu0 %512
  %v514 = vsel %vm80, %v456, 0.0
  %515 = vadd.xlane.f32.xlu0 %v514
  %v516 = vpop.xlane.xlu0 %515
  %v517 = vrcp.pop 32.0
  %v518 = vmul.f32 %v459, %v517
  %v519 = vmul.f32 %v462, %v517
  %v520 = vmul.f32 %v465, %v517
  %v521 = vmul.f32 %v468, %v517
  %v522 = vmul.f32 %v471, %v517
  %v523 = vmul.f32 %v474, %v517
  %v524 = vmul.f32 %v477, %v517
  %v525 = vmul.f32 %v480, %v517
  %v526 = vmul.f32 %v483, %v517
  %v527 = vmul.f32 %v486, %v517
  %v528 = vmul.f32 %v489, %v517
  %v529 = vmul.f32 %v492, %v517
  %v530 = vmul.f32 %v495, %v517
  %v531 = vmul.f32 %v498, %v517
  %v532 = vmul.f32 %v501, %v517
  %v533 = vmul.f32 %v504, %v517
  %v534 = vmul.f32 %v507, %v517
  %v535 = vmul.f32 %v510, %v517
  %v536 = vmul.f32 %v513, %v517
  %v537 = vmul.f32 %v516, %v517
  %v538 = vsub.f32 %v437, %v518
  %v539 = vsub.f32 %v438, %v519
  %v540 = vsub.f32 %v439, %v520
  %v541 = vsub.f32 %v440, %v521
  %v542 = vsub.f32 %v441, %v522
  %v543 = vsub.f32 %v442, %v523
  %v544 = vsub.f32 %v443, %v524
  %v545 = vsub.f32 %v444, %v525
  %v546 = vsub.f32 %v445, %v526
  %v547 = vsub.f32 %v446, %v527
  %v548 = vsub.f32 %v447, %v528
  %v549 = vsub.f32 %v448, %v529
  %v550 = vsub.f32 %v449, %v530
  %v551 = vsub.f32 %v450, %v531
  %v552 = vsub.f32 %v451, %v532
  %v553 = vsub.f32 %v452, %v533
  %v554 = vsub.f32 %v453, %v534
  %v555 = vsub.f32 %v454, %v535
  %v556 = vsub.f32 %v455, %v536
  %v557 = vsub.f32 %v456, %v537
  %v558 = vmul.f32 %v538, %v538
  %v559 = vmul.f32 %v539, %v539
  %v560 = vmul.f32 %v540, %v540
  %v561 = vmul.f32 %v541, %v541
  %v562 = vmul.f32 %v542, %v542
  %v563 = vmul.f32 %v543, %v543
  %v564 = vmul.f32 %v544, %v544
  %v565 = vmul.f32 %v545, %v545
  %v566 = vmul.f32 %v546, %v546
  %v567 = vmul.f32 %v547, %v547
  %v568 = vmul.f32 %v548, %v548
  %v569 = vmul.f32 %v549, %v549
  %v570 = vmul.f32 %v550, %v550
  %v571 = vmul.f32 %v551, %v551
  %v572 = vmul.f32 %v552, %v552
  %v573 = vmul.f32 %v553, %v553
  %v574 = vmul.f32 %v554, %v554
  %v575 = vmul.f32 %v555, %v555
  %v576 = vmul.f32 %v556, %v556
  %v577 = vmul.f32 %v557, %v557
  %v578 = vsel %vm80, %v558, 0.0
  %579 = vadd.xlane.f32.xlu0 %v578
  %v580 = vpop.xlane.xlu0 %579
  %v581 = vsel %vm80, %v559, 0.0
  %582 = vadd.xlane.f32.xlu0 %v581
  %v583 = vpop.xlane.xlu0 %582
  %v584 = vsel %vm80, %v560, 0.0
  %585 = vadd.xlane.f32.xlu0 %v584
  %v586 = vpop.xlane.xlu0 %585
  %v587 = vsel %vm80, %v561, 0.0
  %588 = vadd.xlane.f32.xlu0 %v587
  %v589 = vpop.xlane.xlu0 %588
  %v590 = vsel %vm80, %v562, 0.0
  %591 = vadd.xlane.f32.xlu0 %v590
  %v592 = vpop.xlane.xlu0 %591
  %v593 = vsel %vm80, %v563, 0.0
  %594 = vadd.xlane.f32.xlu0 %v593
  %v595 = vpop.xlane.xlu0 %594
  %v596 = vsel %vm80, %v564, 0.0
  %597 = vadd.xlane.f32.xlu0 %v596
  %v598 = vpop.xlane.xlu0 %597
  %v599 = vsel %vm80, %v565, 0.0
  %600 = vadd.xlane.f32.xlu0 %v599
  %v601 = vpop.xlane.xlu0 %600
  %v602 = vsel %vm80, %v566, 0.0
  %603 = vadd.xlane.f32.xlu0 %v602
  %v604 = vpop.xlane.xlu0 %603
  %v605 = vsel %vm80, %v567, 0.0
  %606 = vadd.xlane.f32.xlu0 %v605
  %v607 = vpop.xlane.xlu0 %606
  %v608 = vsel %vm80, %v568, 0.0
  %609 = vadd.xlane.f32.xlu0 %v608
  %v610 = vpop.xlane.xlu0 %609
  %v611 = vsel %vm80, %v569, 0.0
  %612 = vadd.xlane.f32.xlu0 %v611
  %v613 = vpop.xlane.xlu0 %612
  %v614 = vsel %vm80, %v570, 0.0
  %615 = vadd.xlane.f32.xlu0 %v614
  %v616 = vpop.xlane.xlu0 %615
  %v617 = vsel %vm80, %v571, 0.0
  %618 = vadd.xlane.f32.xlu0 %v617
  %v619 = vpop.xlane.xlu0 %618
  %v620 = vsel %vm80, %v572, 0.0
  %621 = vadd.xlane.f32.xlu0 %v620
  %v622 = vpop.xlane.xlu0 %621
  %v623 = vsel %vm80, %v573, 0.0
  %624 = vadd.xlane.f32.xlu0 %v623
  %v625 = vpop.xlane.xlu0 %624
  %v626 = vsel %vm80, %v574, 0.0
  %627 = vadd.xlane.f32.xlu0 %v626
  %v628 = vpop.xlane.xlu0 %627
  %v629 = vsel %vm80, %v575, 0.0
  %630 = vadd.xlane.f32.xlu0 %v629
  %v631 = vpop.xlane.xlu0 %630
  %v632 = vsel %vm80, %v576, 0.0
  %633 = vadd.xlane.f32.xlu0 %v632
  %v634 = vpop.xlane.xlu0 %633
  %v635 = vsel %vm80, %v577, 0.0
  %636 = vadd.xlane.f32.xlu0 %v635
  %v637 = vpop.xlane.xlu0 %636
  %v638 = vmul.f32 %v580, %v517
  %v639 = vmul.f32 %v583, %v517
  %v640 = vmul.f32 %v586, %v517
  %v641 = vmul.f32 %v589, %v517
  %v642 = vmul.f32 %v592, %v517
  %v643 = vmul.f32 %v595, %v517
  %v644 = vmul.f32 %v598, %v517
  %v645 = vmul.f32 %v601, %v517
  %v646 = vmul.f32 %v604, %v517
  %v647 = vmul.f32 %v607, %v517
  %v648 = vmul.f32 %v610, %v517
  %v649 = vmul.f32 %v613, %v517
  %v650 = vmul.f32 %v616, %v517
  %v651 = vmul.f32 %v619, %v517
  %v652 = vmul.f32 %v622, %v517
  %v653 = vmul.f32 %v625, %v517
  %v654 = vmul.f32 %v628, %v517
  %v655 = vmul.f32 %v631, %v517
  %v656 = vmul.f32 %v634, %v517
  %v657 = vmul.f32 %v637, %v517
  %v658 = vadd.f32 %v638, 1e-05
  %v659 = vadd.f32 %v639, 1e-05
  %v660 = vadd.f32 %v640, 1e-05
  %v661 = vadd.f32 %v641, 1e-05
  %v662 = vadd.f32 %v642, 1e-05
  %v663 = vadd.f32 %v643, 1e-05
  %v664 = vadd.f32 %v644, 1e-05
  %v665 = vadd.f32 %v645, 1e-05
  %v666 = vadd.f32 %v646, 1e-05
  %v667 = vadd.f32 %v647, 1e-05
  %v668 = vadd.f32 %v648, 1e-05
  %v669 = vadd.f32 %v649, 1e-05
  %v670 = vadd.f32 %v650, 1e-05
  %v671 = vadd.f32 %v651, 1e-05
  %v672 = vadd.f32 %v652, 1e-05
  %v673 = vadd.f32 %v653, 1e-05
  %v674 = vadd.f32 %v654, 1e-05
  %v675 = vadd.f32 %v655, 1e-05
  %v676 = vadd.f32 %v656, 1e-05
  %v677 = vadd.f32 %v657, 1e-05
  %v678 = vrsqrt.pop %v658
  %v679 = vrsqrt.pop %v659
  %v680 = vrsqrt.pop %v660
  %v681 = vrsqrt.pop %v661
  %v682 = vrsqrt.pop %v662
  %v683 = vrsqrt.pop %v663
  %v684 = vrsqrt.pop %v664
  %v685 = vrsqrt.pop %v665
  %v686 = vrsqrt.pop %v666
  %v687 = vrsqrt.pop %v667
  %v688 = vrsqrt.pop %v668
  %v689 = vrsqrt.pop %v669
  %v690 = vrsqrt.pop %v670
  %v691 = vrsqrt.pop %v671
  %v692 = vrsqrt.pop %v672
  %v693 = vrsqrt.pop %v673
  %v694 = vrsqrt.pop %v674
  %v695 = vrsqrt.pop %v675
  %v696 = vrsqrt.pop %v676
  %v697 = vrsqrt.pop %v677
  %v698 = vmul.f32 %v538, %v678
  %v699 = vmul.f32 %v539, %v679
  %v700 = vmul.f32 %v540, %v680
  %v701 = vmul.f32 %v541, %v681
  %v702 = vmul.f32 %v542, %v682
  %v703 = vmul.f32 %v543, %v683
  %v704 = vmul.f32 %v544, %v684
  %v705 = vmul.f32 %v545, %v685
  %v706 = vmul.f32 %v546, %v686
  %v707 = vmul.f32 %v547, %v687
  %v708 = vmul.f32 %v548, %v688
  %v709 = vmul.f32 %v549, %v689
  %v710 = vmul.f32 %v550, %v690
  %v711 = vmul.f32 %v551, %v691
  %v712 = vmul.f32 %v552, %v692
  %v713 = vmul.f32 %v553, %v693
  %v714 = vmul.f32 %v554, %v694
  %v715 = vmul.f32 %v555, %v695
  %v716 = vmul.f32 %v556, %v696
  %v717 = vmul.f32 %v557, %v697
  %v718 = vld [vmem:[%s5] sm:$0x1]
  %v720 = vlaneseq
  %v721 = vshrl.u32 %v720, 7
  %v722 = vsub.s32 0, %v721
  %v723 = vrot.slane %v718, %v722
  %v725 = vmul.f32 %v698, %v723
  %v726 = vmul.f32 %v699, %v723
  %v727 = vmul.f32 %v700, %v723
  %v728 = vmul.f32 %v701, %v723
  %v729 = vmul.f32 %v702, %v723
  %v730 = vmul.f32 %v703, %v723
  %v731 = vmul.f32 %v704, %v723
  %v732 = vmul.f32 %v705, %v723
  %v733 = vmul.f32 %v706, %v723
  %v734 = vmul.f32 %v707, %v723
  %v735 = vmul.f32 %v708, %v723
  %v736 = vmul.f32 %v709, %v723
  %v737 = vmul.f32 %v710, %v723
  %v738 = vmul.f32 %v711, %v723
  %v739 = vmul.f32 %v712, %v723
  %v740 = vmul.f32 %v713, %v723
  %v741 = vmul.f32 %v714, %v723
  %v742 = vmul.f32 %v715, %v723
  %v743 = vmul.f32 %v716, %v723
  %v744 = vmul.f32 %v717, %v723
  %v745 = vld [vmem:[%s6] sm:$0x1]
  %v747 = vlaneseq
  %v748 = vshrl.u32 %v747, 7
  %v749 = vsub.s32 0, %v748
  %v750 = vrot.slane %v745, %v749
  %v752 = vadd.f32 %v725, %v750
  %v753 = vadd.f32 %v726, %v750
  %v754 = vadd.f32 %v727, %v750
  %v755 = vadd.f32 %v728, %v750
  %v756 = vadd.f32 %v729, %v750
  %v757 = vadd.f32 %v730, %v750
  %v758 = vadd.f32 %v731, %v750
  %v759 = vadd.f32 %v732, %v750
  %v760 = vadd.f32 %v733, %v750
  %v761 = vadd.f32 %v734, %v750
  %v762 = vadd.f32 %v735, %v750
  %v763 = vadd.f32 %v736, %v750
  %v764 = vadd.f32 %v737, %v750
  %v765 = vadd.f32 %v738, %v750
  %v766 = vadd.f32 %v739, %v750
  %v767 = vadd.f32 %v740, %v750
  %v768 = vadd.f32 %v741, %v750
  %v769 = vadd.f32 %v742, %v750
  %v770 = vadd.f32 %v743, %v750
  %v771 = vadd.f32 %v744, %v750
  %772 = vst.msk [vmem:[%s7] sm:$0xff] %vm80, %v752
  %773 = vst.msk [vmem:[%s7 + $0x8] sm:$0xff] %vm80, %v753
  %774 = vst.msk [vmem:[%s7 + $0x10] sm:$0xff] %vm80, %v754
  %775 = vst.msk [vmem:[%s7 + $0x18] sm:$0xff] %vm80, %v755
  %776 = vst.msk [vmem:[%s7 + $0x20] sm:$0xff] %vm80, %v756
  %777 = vst.msk [vmem:[%s7 + $0x28] sm:$0xff] %vm80, %v757
  %778 = vst.msk [vmem:[%s7 + $0x30] sm:$0xff] %vm80, %v758
  %779 = vst.msk [vmem:[%s7 + $0x38] sm:$0xff] %vm80, %v759
  %780 = vst.msk [vmem:[%s7 + $0x40] sm:$0xff] %vm80, %v760
  %781 = vst.msk [vmem:[%s7 + $0x48] sm:$0xff] %vm80, %v761
  %782 = vst.msk [vmem:[%s7 + $0x50] sm:$0xff] %vm80, %v762
  %783 = vst.msk [vmem:[%s7 + $0x58] sm:$0xff] %vm80, %v763
  %784 = vst.msk [vmem:[%s7 + $0x60] sm:$0xff] %vm80, %v764
  %785 = vst.msk [vmem:[%s7 + $0x68] sm:$0xff] %vm80, %v765
  %786 = vst.msk [vmem:[%s7 + $0x70] sm:$0xff] %vm80, %v766
  %787 = vst.msk [vmem:[%s7 + $0x78] sm:$0xff] %vm80, %v767
  %788 = vst.msk [vmem:[%s7 + $0x80] sm:$0xff] %vm80, %v768
  %789 = vst.msk [vmem:[%s7 + $0x88] sm:$0xff] %vm80, %v769
  %790 = vst.msk [vmem:[%s7 + $0x90] sm:$0xff] %vm80, %v770
  %791 = vst.msk [vmem:[%s7 + $0x98] sm:$0xff] %vm80, %v771
  // Predicated region
  $region30: #{deformable_encoder_forward.8} parent=0 // pred_check
    _
  $region31: #{deformable_encoder_forward.8} parent=0 // pred_check_branch
    %793 = sbr.rel (0) target = $region33
  $region32: #{deformable_encoder_forward.8} parent=0 // pred_region
    _
  $region33: #{deformable_encoder_forward.8} parent=0 // pred_fallthru
    _
  // Predicated region
  $region34: #{deformable_encoder_forward.8} parent=0 // pred_check
    _
  $region35: #{deformable_encoder_forward.8} parent=0 // pred_check_branch
    %795 = sbr.rel (0) target = $region37
  $region36: #{deformable_encoder_forward.8} parent=0 // pred_region
    _
  $region37: #{deformable_encoder_forward.8} parent=0 // pred_fallthru
    _

// kernel: deformable_encoder_forward.9
$region0: #{deformable_encoder_forward.9}
  #allocation0 [shape = 'u32[]', space=smem, size = 0x4, offset = 0x4, fixed_abs, tag = 'smem constant byte address 0x4 - core index']
  #allocation1 [shape = 'u32[144,128]{1,0:T(1,128)}', space=vmem, size = 0x12000, scoped, tag = 'internal scratch']
  %s0 = inlined_call_operand.vmem [shape: f32[160,32], index: 0, kind: input, shape index: {}]
  %s1 = inlined_call_operand.vmem [shape: f32[160,32], index: 1, kind: input, shape index: {}]
  %s2 = inlined_call_operand.vmem [shape: bf16[32,48], index: 2, kind: input, shape index: {}]
  %s3 = inlined_call_operand.vmem [shape: f32[1,48], index: 3, kind: input, shape index: {}]
  %s4 = inlined_call_operand.vmem [shape: bf16[32,32], index: 4, kind: input, shape index: {}]
  %s5 = inlined_call_operand.vmem [shape: f32[1,32], index: 5, kind: input, shape index: {}]
  %s6 = inlined_call_operand.vmem [shape: f32[160,32], index: 6, kind: output, shape index: {0}]
  %s7 = inlined_call_operand.vmem [shape: f32[160,16], index: 7, kind: output, shape index: {1}]
  %s8 = inlined_call_operand.vmem [shape: f32[160,32], index: 8, kind: output, shape index: {2}]
  %9 = xla_tuple %s6, %s7, %s8
  %s10 = sld [smem:[#allocation0]]
  $region50: #{deformable_encoder_forward.9} parent=0
    _
  %s12 = ssub.s32 1, %s10
  %s13 = scalar_select 0, %s12, %s10
  // Predicated region
  $region2: #{deformable_encoder_forward.9} parent=0 // pred_check
    _
  $region3: #{deformable_encoder_forward.9} parent=0 // pred_check_branch
    %15 = sbr.rel (0) target = $region5
  $region4: #{deformable_encoder_forward.9} parent=0 // pred_region
    _
  $region5: #{deformable_encoder_forward.9} parent=0 // pred_fallthru
    _
  // Predicated region
  $region6: #{deformable_encoder_forward.9} parent=0 // pred_check
    _
  $region7: #{deformable_encoder_forward.9} parent=0 // pred_check_branch
    %17 = sbr.rel (0) target = $region9
  $region8: #{deformable_encoder_forward.9} parent=0 // pred_region
    _
  $region9: #{deformable_encoder_forward.9} parent=0 // pred_fallthru
    _
  // Predicated region
  $region10: #{deformable_encoder_forward.9} parent=0 // pred_check
    _
  $region11: #{deformable_encoder_forward.9} parent=0 // pred_check_branch
    %19 = sbr.rel (0) target = $region13
  $region12: #{deformable_encoder_forward.9} parent=0 // pred_region
    _
  $region13: #{deformable_encoder_forward.9} parent=0 // pred_fallthru
    _
  // Predicated region
  $region14: #{deformable_encoder_forward.9} parent=0 // pred_check
    _
  $region15: #{deformable_encoder_forward.9} parent=0 // pred_check_branch
    %21 = sbr.rel (0) target = $region17
  $region16: #{deformable_encoder_forward.9} parent=0 // pred_region
    _
  $region17: #{deformable_encoder_forward.9} parent=0 // pred_fallthru
    _
  // Predicated region
  $region18: #{deformable_encoder_forward.9} parent=0 // pred_check
    _
  $region19: #{deformable_encoder_forward.9} parent=0 // pred_check_branch
    %23 = sbr.rel (0) target = $region21
  $region20: #{deformable_encoder_forward.9} parent=0 // pred_region
    _
  $region21: #{deformable_encoder_forward.9} parent=0 // pred_fallthru
    _
  // Predicated region
  $region22: #{deformable_encoder_forward.9} parent=0 // pred_check
    _
  $region23: #{deformable_encoder_forward.9} parent=0 // pred_check_branch
    %25 = sbr.rel (0) target = $region25
  $region24: #{deformable_encoder_forward.9} parent=0 // pred_region
    _
  $region25: #{deformable_encoder_forward.9} parent=0 // pred_fallthru
    _
  %v27 = vld [vmem:[%s0] sm:$0xff]
  %v28 = vld [vmem:[%s0 + $0x8] sm:$0xff]
  %v29 = vld [vmem:[%s0 + $0x10] sm:$0xff]
  %v30 = vld [vmem:[%s0 + $0x18] sm:$0xff]
  %v31 = vld [vmem:[%s0 + $0x20] sm:$0xff]
  %v32 = vld [vmem:[%s0 + $0x28] sm:$0xff]
  %v33 = vld [vmem:[%s0 + $0x30] sm:$0xff]
  %v34 = vld [vmem:[%s0 + $0x38] sm:$0xff]
  %v35 = vld [vmem:[%s0 + $0x40] sm:$0xff]
  %v36 = vld [vmem:[%s0 + $0x48] sm:$0xff]
  %v37 = vld [vmem:[%s0 + $0x50] sm:$0xff]
  %v38 = vld [vmem:[%s0 + $0x58] sm:$0xff]
  %v39 = vld [vmem:[%s0 + $0x60] sm:$0xff]
  %v40 = vld [vmem:[%s0 + $0x68] sm:$0xff]
  %v41 = vld [vmem:[%s0 + $0x70] sm:$0xff]
  %v42 = vld [vmem:[%s0 + $0x78] sm:$0xff]
  %v43 = vld [vmem:[%s0 + $0x80] sm:$0xff]
  %v44 = vld [vmem:[%s0 + $0x88] sm:$0xff]
  %v45 = vld [vmem:[%s0 + $0x90] sm:$0xff]
  %v46 = vld [vmem:[%s0 + $0x98] sm:$0xff]
  %v47 = vld [vmem:[%s1] sm:$0xff]
  %v48 = vld [vmem:[%s1 + $0x8] sm:$0xff]
  %v49 = vld [vmem:[%s1 + $0x10] sm:$0xff]
  %v50 = vld [vmem:[%s1 + $0x18] sm:$0xff]
  %v51 = vld [vmem:[%s1 + $0x20] sm:$0xff]
  %v52 = vld [vmem:[%s1 + $0x28] sm:$0xff]
  %v53 = vld [vmem:[%s1 + $0x30] sm:$0xff]
  %v54 = vld [vmem:[%s1 + $0x38] sm:$0xff]
  %v55 = vld [vmem:[%s1 + $0x40] sm:$0xff]
  %v56 = vld [vmem:[%s1 + $0x48] sm:$0xff]
  %v57 = vld [vmem:[%s1 + $0x50] sm:$0xff]
  %v58 = vld [vmem:[%s1 + $0x58] sm:$0xff]
  %v59 = vld [vmem:[%s1 + $0x60] sm:$0xff]
  %v60 = vld [vmem:[%s1 + $0x68] sm:$0xff]
  %v61 = vld [vmem:[%s1 + $0x70] sm:$0xff]
  %v62 = vld [vmem:[%s1 + $0x78] sm:$0xff]
  %v63 = vld [vmem:[%s1 + $0x80] sm:$0xff]
  %v64 = vld [vmem:[%s1 + $0x88] sm:$0xff]
  %v65 = vld [vmem:[%s1 + $0x90] sm:$0xff]
  %v66 = vld [vmem:[%s1 + $0x98] sm:$0xff]
  %v67 = vadd.f32 %v27, %v47
  %v68 = vadd.f32 %v28, %v48
  %v69 = vadd.f32 %v29, %v49
  %v70 = vadd.f32 %v30, %v50
  %v71 = vadd.f32 %v31, %v51
  %v72 = vadd.f32 %v32, %v52
  %v73 = vadd.f32 %v33, %v53
  %v74 = vadd.f32 %v34, %v54
  %v75 = vadd.f32 %v35, %v55
  %v76 = vadd.f32 %v36, %v56
  %v77 = vadd.f32 %v37, %v57
  %v78 = vadd.f32 %v38, %v58
  %v79 = vadd.f32 %v39, %v59
  %v80 = vadd.f32 %v40, %v60
  %v81 = vadd.f32 %v41, %v61
  %v82 = vadd.f32 %v42, %v62
  %v83 = vadd.f32 %v43, %v63
  %v84 = vadd.f32 %v44, %v64
  %v85 = vadd.f32 %v45, %v65
  %v86 = vadd.f32 %v46, %v66
  %v87 = vpack.c.bf16 %v68, %v67
  %v88 = vpack.c.bf16 %v70, %v69
  %v89 = vpack.c.bf16 %v72, %v71
  %v90 = vpack.c.bf16 %v74, %v73
  %v91 = vpack.c.bf16 %v76, %v75
  %v92 = vpack.c.bf16 %v78, %v77
  %v93 = vpack.c.bf16 %v80, %v79
  %v94 = vpack.c.bf16 %v82, %v81
  %v95 = vpack.c.bf16 %v84, %v83
  %v96 = vpack.c.bf16 %v86, %v85
  %v97 = vld [vmem:[%s2] sm:$0xf]
  %v98 = vld [vmem:[%s2 + $0x4] sm:$0xf]
  %v99 = vld [vmem:[%s2 + $0x8] sm:$0xf]
  %v100 = vld [vmem:[%s2 + $0xc] sm:$0xf]
  %v101 = vld [vmem:[%s3] sm:$0x1]
  %v103 = vlaneseq
  %v104 = vshrl.u32 %v103, 7
  %v105 = vsub.s32 0, %v104
  %v106 = vrot.slane %v101, %v105
  %v112 = vunpack.c.l.b16 %v97
  %v113 = vunpack.c.l.b16 %v98
  %v114 = vunpack.c.l.b16 %v99
  %v115 = vunpack.c.l.b16 %v100
  %v116 = vpack.c.b16 %v113, %v112
  %v117 = vpack.c.b16 %v115, %v114
  %vm120 = vcmask 261120
  %v122 = vsel %vm120, %v87, 0
  %v125 = vsel %vm120, %v88, 0
  %v128 = vsel %vm120, %v89, 0
  %v131 = vsel %vm120, %v90, 0
  %v134 = vsel %vm120, %v91, 0
  %v137 = vsel %vm120, %v92, 0
  %v140 = vsel %vm120, %v93, 0
  %v143 = vsel %vm120, %v94, 0
  %v146 = vsel %vm120, %v95, 0
  %v149 = vsel %vm120, %v96, 0
  %151 = vmatprep.subr.bf16.mxu0 0
  %152 = vmatpush1.bf16.msra.mxu0 %v116
  %153 = vmatprep.subr.bf16.mxu0 0
  %154 = vmatpush1.bf16.msra.mxu0 %v117
  %155 = vmatprep.subr.bf16.mxu0 0
  %156 = vmatpush1.bf16.msra.mxu0 0
  %157 = vmatprep.subr.bf16.mxu0 0
  %158 = vmatpush1.bf16.msra.mxu0 0
  %159 = vmatprep.subr.bf16.mxu0 0
  %160 = vmatpush1.bf16.msra.mxu0 0
  %161 = vmatprep.subr.bf16.mxu0 0
  %162 = vmatpush1.bf16.msra.mxu0 0
  %163 = vmatprep.subr.bf16.mxu0 0
  %164 = vmatpush1.bf16.msra.mxu0 0
  %165 = vmatprep.subr.bf16.mxu0 0
  %166 = vmatpush1.bf16.msra.mxu0 0
  %167 = vmatprep.subr.bf16.mxu0 0
  %168 = vmatpush1.bf16.msra.mxu0 0
  %169 = vmatprep.subr.bf16.mxu0 0
  %170 = vmatpush1.bf16.msra.mxu0 0
  %171 = vmatprep.subr.bf16.mxu0 0
  %172 = vmatpush1.bf16.msra.mxu0 0
  %173 = vmatprep.subr.bf16.mxu0 0
  %174 = vmatpush1.bf16.msra.mxu0 0
  %175 = vmatprep.subr.bf16.mxu0 0
  %176 = vmatpush1.bf16.msra.mxu0 0
  %177 = vmatprep.subr.bf16.mxu0 0
  %178 = vmatpush1.bf16.msra.mxu0 0
  %179 = vmatprep.subr.bf16.mxu0 0
  %180 = vmatpush1.bf16.msra.mxu0 0
  %181 = vmatprep.subr.bf16.mxu0 0
  %182 = vmatpush1.bf16.msra.mxu0 0
  %183 = vmatprep.mubr.bf16.mxu0 0
  %184 = vmatmul.mubr.bf16.gmra.mrb[0].mxu0 %v122
  %v185 = vpop.f32.mrb[0].mxu0
  %v186 = vadd.f32 %v106, %v185
  %v187 = vpop.f32.mrb[0].mxu0
  %v188 = vpop.f32.mrb[0].mxu0
  %v189 = vadd.f32 %v106, %v188
  %v190 = vpop.f32.mrb[0].mxu0
  %191 = vmatprep.mubr.bf16.mxu0 0
  %192 = vmatmul.mubr.bf16.gmra.mrb[0].mxu0 %v125
  %v193 = vpop.f32.mrb[0].mxu0
  %v194 = vadd.f32 %v106, %v193
  %v195 = vpop.f32.mrb[0].mxu0
  %v196 = vpop.f32.mrb[0].mxu0
  %v197 = vadd.f32 %v106, %v196
  %v198 = vpop.f32.mrb[0].mxu0
  %199 = vmatprep.mubr.bf16.mxu0 0
  %200 = vmatmul.mubr.bf16.gmra.mrb[0].mxu0 %v128
  %v201 = vpop.f32.mrb[0].mxu0
  %v202 = vadd.f32 %v106, %v201
  %v203 = vpop.f32.mrb[0].mxu0
  %v204 = vpop.f32.mrb[0].mxu0
  %v205 = vadd.f32 %v106, %v204
  %v206 = vpop.f32.mrb[0].mxu0
  %207 = vmatprep.mubr.bf16.mxu0 0
  %208 = vmatmul.mubr.bf16.gmra.mrb[0].mxu0 %v131
  %v209 = vpop.f32.mrb[0].mxu0
  %v210 = vadd.f32 %v106, %v209
  %v211 = vpop.f32.mrb[0].mxu0
  %v212 = vpop.f32.mrb[0].mxu0
  %v213 = vadd.f32 %v106, %v212
  %v214 = vpop.f32.mrb[0].mxu0
  %215 = vmatprep.mubr.bf16.mxu0 0
  %216 = vmatmul.mubr.bf16.gmra.mrb[0].mxu0 %v134
  %v217 = vpop.f32.mrb[0].mxu0
  %v218 = vadd.f32 %v106, %v217
  %v219 = vpop.f32.mrb[0].mxu0
  %v220 = vpop.f32.mrb[0].mxu0
  %v221 = vadd.f32 %v106, %v220
  %v222 = vpop.f32.mrb[0].mxu0
  %223 = vmatprep.mubr.bf16.mxu0 0
  %224 = vmatmul.mubr.bf16.gmra.mrb[0].mxu0 %v137
  %v225 = vpop.f32.mrb[0].mxu0
  %v226 = vadd.f32 %v106, %v225
  %v227 = vpop.f32.mrb[0].mxu0
  %v228 = vpop.f32.mrb[0].mxu0
  %v229 = vadd.f32 %v106, %v228
  %v230 = vpop.f32.mrb[0].mxu0
  %231 = vmatprep.mubr.bf16.mxu0 0
  %232 = vmatmul.mubr.bf16.gmra.mrb[0].mxu0 %v140
  %v233 = vpop.f32.mrb[0].mxu0
  %v234 = vadd.f32 %v106, %v233
  %v235 = vpop.f32.mrb[0].mxu0
  %v236 = vpop.f32.mrb[0].mxu0
  %v237 = vadd.f32 %v106, %v236
  %v238 = vpop.f32.mrb[0].mxu0
  %239 = vmatprep.mubr.bf16.mxu0 0
  %240 = vmatmul.mubr.bf16.gmra.mrb[0].mxu0 %v143
  %v241 = vpop.f32.mrb[0].mxu0
  %v242 = vadd.f32 %v106, %v241
  %v243 = vpop.f32.mrb[0].mxu0
  %v244 = vpop.f32.mrb[0].mxu0
  %v245 = vadd.f32 %v106, %v244
  %v246 = vpop.f32.mrb[0].mxu0
  %247 = vmatprep.mubr.bf16.mxu0 0
  %248 = vmatmul.mubr.bf16.gmra.mrb[0].mxu0 %v146
  %v249 = vpop.f32.mrb[0].mxu0
  %v250 = vadd.f32 %v106, %v249
  %v251 = vpop.f32.mrb[0].mxu0
  %v252 = vpop.f32.mrb[0].mxu0
  %v253 = vadd.f32 %v106, %v252
  %v254 = vpop.f32.mrb[0].mxu0
  %255 = vmatprep.mubr.bf16.mxu0 0
  %256 = vmatmul.mubr.bf16.gmra.mrb[0].mxu0 %v149
  %v257 = vpop.f32.mrb[0].mxu0
  %v258 = vadd.f32 %v106, %v257
  %v259 = vpop.f32.mrb[0].mxu0
  %v260 = vpop.f32.mrb[0].mxu0
  %v261 = vadd.f32 %v106, %v260
  %v262 = vpop.f32.mrb[0].mxu0
  %263 = vdwg.mxu0
  %264 = vst.msk [vmem:[%s6] sm:$0xff] %vm120, %v186
  %265 = vst.msk [vmem:[%s6 + $0x8] sm:$0xff] %vm120, %v189
  %266 = vst.msk [vmem:[%s6 + $0x10] sm:$0xff] %vm120, %v194
  %267 = vst.msk [vmem:[%s6 + $0x18] sm:$0xff] %vm120, %v197
  %268 = vst.msk [vmem:[%s6 + $0x20] sm:$0xff] %vm120, %v202
  %269 = vst.msk [vmem:[%s6 + $0x28] sm:$0xff] %vm120, %v205
  %270 = vst.msk [vmem:[%s6 + $0x30] sm:$0xff] %vm120, %v210
  %271 = vst.msk [vmem:[%s6 + $0x38] sm:$0xff] %vm120, %v213
  %272 = vst.msk [vmem:[%s6 + $0x40] sm:$0xff] %vm120, %v218
  %273 = vst.msk [vmem:[%s6 + $0x48] sm:$0xff] %vm120, %v221
  %274 = vst.msk [vmem:[%s6 + $0x50] sm:$0xff] %vm120, %v226
  %275 = vst.msk [vmem:[%s6 + $0x58] sm:$0xff] %vm120, %v229
  %276 = vst.msk [vmem:[%s6 + $0x60] sm:$0xff] %vm120, %v234
  %277 = vst.msk [vmem:[%s6 + $0x68] sm:$0xff] %vm120, %v237
  %278 = vst.msk [vmem:[%s6 + $0x70] sm:$0xff] %vm120, %v242
  %279 = vst.msk [vmem:[%s6 + $0x78] sm:$0xff] %vm120, %v245
  %280 = vst.msk [vmem:[%s6 + $0x80] sm:$0xff] %vm120, %v250
  %281 = vst.msk [vmem:[%s6 + $0x88] sm:$0xff] %vm120, %v253
  %282 = vst.msk [vmem:[%s6 + $0x90] sm:$0xff] %vm120, %v258
  %283 = vst.msk [vmem:[%s6 + $0x98] sm:$0xff] %vm120, %v261
  %vm284 = vcmask 294144
  %v285 = vsel %vm284, %v186, -inf
  %286 = vmax.xlane.f32.xlu0 %v285
  %v287 = vpop.xlane.xlu0 %286
  %v288 = vsel %vm284, %v189, -inf
  %289 = vmax.xlane.f32.xlu0 %v288
  %v290 = vpop.xlane.xlu0 %289
  %v291 = vsel %vm284, %v194, -inf
  %292 = vmax.xlane.f32.xlu0 %v291
  %v293 = vpop.xlane.xlu0 %292
  %v294 = vsel %vm284, %v197, -inf
  %295 = vmax.xlane.f32.xlu0 %v294
  %v296 = vpop.xlane.xlu0 %295
  %v297 = vsel %vm284, %v202, -inf
  %298 = vmax.xlane.f32.xlu0 %v297
  %v299 = vpop.xlane.xlu0 %298
  %v300 = vsel %vm284, %v205, -inf
  %301 = vmax.xlane.f32.xlu0 %v300
  %v302 = vpop.xlane.xlu0 %301
  %v303 = vsel %vm284, %v210, -inf
  %304 = vmax.xlane.f32.xlu0 %v303
  %v305 = vpop.xlane.xlu0 %304
  %v306 = vsel %vm284, %v213, -inf
  %307 = vmax.xlane.f32.xlu0 %v306
  %v308 = vpop.xlane.xlu0 %307
  %v309 = vsel %vm284, %v218, -inf
  %310 = vmax.xlane.f32.xlu0 %v309
  %v311 = vpop.xlane.xlu0 %310
  %v312 = vsel %vm284, %v221, -inf
  %313 = vmax.xlane.f32.xlu0 %v312
  %v314 = vpop.xlane.xlu0 %313
  %v315 = vsel %vm284, %v226, -inf
  %316 = vmax.xlane.f32.xlu0 %v315
  %v317 = vpop.xlane.xlu0 %316
  %v318 = vsel %vm284, %v229, -inf
  %319 = vmax.xlane.f32.xlu0 %v318
  %v320 = vpop.xlane.xlu0 %319
  %v321 = vsel %vm284, %v234, -inf
  %322 = vmax.xlane.f32.xlu0 %v321
  %v323 = vpop.xlane.xlu0 %322
  %v324 = vsel %vm284, %v237, -inf
  %325 = vmax.xlane.f32.xlu0 %v324
  %v326 = vpop.xlane.xlu0 %325
  %v327 = vsel %vm284, %v242, -inf
  %328 = vmax.xlane.f32.xlu0 %v327
  %v329 = vpop.xlane.xlu0 %328
  %v330 = vsel %vm284, %v245, -inf
  %331 = vmax.xlane.f32.xlu0 %v330
  %v332 = vpop.xlane.xlu0 %331
  %v333 = vsel %vm284, %v250, -inf
  %334 = vmax.xlane.f32.xlu0 %v333
  %v335 = vpop.xlane.xlu0 %334
  %v336 = vsel %vm284, %v253, -inf
  %337 = vmax.xlane.f32.xlu0 %v336
  %v338 = vpop.xlane.xlu0 %337
  %v339 = vsel %vm284, %v258, -inf
  %340 = vmax.xlane.f32.xlu0 %v339
  %v341 = vpop.xlane.xlu0 %340
  %v342 = vsel %vm284, %v261, -inf
  %343 = vmax.xlane.f32.xlu0 %v342
  %v344 = vpop.xlane.xlu0 %343
  %v345 = vsub.f32 %v186, %v287
  %v346 = vsub.f32 %v189, %v290
  %v347 = vsub.f32 %v194, %v293
  %v348 = vsub.f32 %v197, %v296
  %v349 = vsub.f32 %v202, %v299
  %v350 = vsub.f32 %v205, %v302
  %v351 = vsub.f32 %v210, %v305
  %v352 = vsub.f32 %v213, %v308
  %v353 = vsub.f32 %v218, %v311
  %v354 = vsub.f32 %v221, %v314
  %v355 = vsub.f32 %v226, %v317
  %v356 = vsub.f32 %v229, %v320
  %v357 = vsub.f32 %v234, %v323
  %v358 = vsub.f32 %v237, %v326
  %v359 = vsub.f32 %v242, %v329
  %v360 = vsub.f32 %v245, %v332
  %v361 = vsub.f32 %v250, %v335
  %v362 = vsub.f32 %v253, %v338
  %v363 = vsub.f32 %v258, %v341
  %v364 = vsub.f32 %v261, %v344
  %v365 = vmul.f32 %v345, 1.442695
  %v366 = vpow.pop %v365
  %v367 = vmul.f32 %v346, 1.442695
  %v368 = vpow.pop %v367
  %v369 = vmul.f32 %v347, 1.442695
  %v370 = vpow.pop %v369
  %v371 = vmul.f32 %v348, 1.442695
  %v372 = vpow.pop %v371
  %v373 = vmul.f32 %v349, 1.442695
  %v374 = vpow.pop %v373
  %v375 = vmul.f32 %v350, 1.442695
  %v376 = vpow.pop %v375
  %v377 = vmul.f32 %v351, 1.442695
  %v378 = vpow.pop %v377
  %v379 = vmul.f32 %v352, 1.442695
  %v380 = vpow.pop %v379
  %v381 = vmul.f32 %v353, 1.442695
  %v382 = vpow.pop %v381
  %v383 = vmul.f32 %v354, 1.442695
  %v384 = vpow.pop %v383
  %v385 = vmul.f32 %v355, 1.442695
  %v386 = vpow.pop %v385
  %v387 = vmul.f32 %v356, 1.442695
  %v388 = vpow.pop %v387
  %v389 = vmul.f32 %v357, 1.442695
  %v390 = vpow.pop %v389
  %v391 = vmul.f32 %v358, 1.442695
  %v392 = vpow.pop %v391
  %v393 = vmul.f32 %v359, 1.442695
  %v394 = vpow.pop %v393
  %v395 = vmul.f32 %v360, 1.442695
  %v396 = vpow.pop %v395
  %v397 = vmul.f32 %v361, 1.442695
  %v398 = vpow.pop %v397
  %v399 = vmul.f32 %v362, 1.442695
  %v400 = vpow.pop %v399
  %v401 = vmul.f32 %v363, 1.442695
  %v402 = vpow.pop %v401
  %v403 = vmul.f32 %v364, 1.442695
  %v404 = vpow.pop %v403
  %425 = vrot.lane.b32.xlu0 %v366, 96
  %v426 = vpop.permute.xlu0 %425
  %427 = vrot.lane.b32.xlu0 %v368, 96
  %v428 = vpop.permute.xlu0 %427
  %429 = vrot.lane.b32.xlu0 %v370, 96
  %v430 = vpop.permute.xlu0 %429
  %431 = vrot.lane.b32.xlu0 %v372, 96
  %v432 = vpop.permute.xlu0 %431
  %433 = vrot.lane.b32.xlu0 %v374, 96
  %v434 = vpop.permute.xlu0 %433
  %435 = vrot.lane.b32.xlu0 %v376, 96
  %v436 = vpop.permute.xlu0 %435
  %437 = vrot.lane.b32.xlu0 %v378, 96
  %v438 = vpop.permute.xlu0 %437
  %439 = vrot.lane.b32.xlu0 %v380, 96
  %v440 = vpop.permute.xlu0 %439
  %441 = vrot.lane.b32.xlu0 %v382, 96
  %v442 = vpop.permute.xlu0 %441
  %443 = vrot.lane.b32.xlu0 %v384, 96
  %v444 = vpop.permute.xlu0 %443
  %445 = vrot.lane.b32.xlu0 %v386, 96
  %v446 = vpop.permute.xlu0 %445
  %447 = vrot.lane.b32.xlu0 %v388, 96
  %v448 = vpop.permute.xlu0 %447
  %449 = vrot.lane.b32.xlu0 %v390, 96
  %v450 = vpop.permute.xlu0 %449
  %451 = vrot.lane.b32.xlu0 %v392, 96
  %v452 = vpop.permute.xlu0 %451
  %453 = vrot.lane.b32.xlu0 %v394, 96
  %v454 = vpop.permute.xlu0 %453
  %455 = vrot.lane.b32.xlu0 %v396, 96
  %v456 = vpop.permute.xlu0 %455
  %457 = vrot.lane.b32.xlu0 %v398, 96
  %v458 = vpop.permute.xlu0 %457
  %459 = vrot.lane.b32.xlu0 %v400, 96
  %v460 = vpop.permute.xlu0 %459
  %461 = vrot.lane.b32.xlu0 %v402, 96
  %v462 = vpop.permute.xlu0 %461
  %463 = vrot.lane.b32.xlu0 %v404, 96
  %v464 = vpop.permute.xlu0 %463
  %vm485 = vcmask 31744
  %v486 = vsel %vm485, %v426, 0.0
  %487 = vadd.xlane.f32.xlu0 %v486
  %v488 = vpop.xlane.xlu0 %487
  %v489 = vsel %vm485, %v428, 0.0
  %490 = vadd.xlane.f32.xlu0 %v489
  %v491 = vpop.xlane.xlu0 %490
  %v492 = vsel %vm485, %v430, 0.0
  %493 = vadd.xlane.f32.xlu0 %v492
  %v494 = vpop.xlane.xlu0 %493
  %v495 = vsel %vm485, %v432, 0.0
  %496 = vadd.xlane.f32.xlu0 %v495
  %v497 = vpop.xlane.xlu0 %496
  %v498 = vsel %vm485, %v434, 0.0
  %499 = vadd.xlane.f32.xlu0 %v498
  %v500 = vpop.xlane.xlu0 %499
  %v501 = vsel %vm485, %v436, 0.0
  %502 = vadd.xlane.f32.xlu0 %v501
  %v503 = vpop.xlane.xlu0 %502
  %v504 = vsel %vm485, %v438, 0.0
  %505 = vadd.xlane.f32.xlu0 %v504
  %v506 = vpop.xlane.xlu0 %505
  %v507 = vsel %vm485, %v440, 0.0
  %508 = vadd.xlane.f32.xlu0 %v507
  %v509 = vpop.xlane.xlu0 %508
  %v510 = vsel %vm485, %v442, 0.0
  %511 = vadd.xlane.f32.xlu0 %v510
  %v512 = vpop.xlane.xlu0 %511
  %v513 = vsel %vm485, %v444, 0.0
  %514 = vadd.xlane.f32.xlu0 %v513
  %v515 = vpop.xlane.xlu0 %514
  %v516 = vsel %vm485, %v446, 0.0
  %517 = vadd.xlane.f32.xlu0 %v516
  %v518 = vpop.xlane.xlu0 %517
  %v519 = vsel %vm485, %v448, 0.0
  %520 = vadd.xlane.f32.xlu0 %v519
  %v521 = vpop.xlane.xlu0 %520
  %v522 = vsel %vm485, %v450, 0.0
  %523 = vadd.xlane.f32.xlu0 %v522
  %v524 = vpop.xlane.xlu0 %523
  %v525 = vsel %vm485, %v452, 0.0
  %526 = vadd.xlane.f32.xlu0 %v525
  %v527 = vpop.xlane.xlu0 %526
  %v528 = vsel %vm485, %v454, 0.0
  %529 = vadd.xlane.f32.xlu0 %v528
  %v530 = vpop.xlane.xlu0 %529
  %v531 = vsel %vm485, %v456, 0.0
  %532 = vadd.xlane.f32.xlu0 %v531
  %v533 = vpop.xlane.xlu0 %532
  %v534 = vsel %vm485, %v458, 0.0
  %535 = vadd.xlane.f32.xlu0 %v534
  %v536 = vpop.xlane.xlu0 %535
  %v537 = vsel %vm485, %v460, 0.0
  %538 = vadd.xlane.f32.xlu0 %v537
  %v539 = vpop.xlane.xlu0 %538
  %v540 = vsel %vm485, %v462, 0.0
  %541 = vadd.xlane.f32.xlu0 %v540
  %v542 = vpop.xlane.xlu0 %541
  %v543 = vsel %vm485, %v464, 0.0
  %544 = vadd.xlane.f32.xlu0 %v543
  %v545 = vpop.xlane.xlu0 %544
  %v546 = vrcp.pop %v488
  %v547 = vmul.f32 %v366, %v546
  %v548 = vrcp.pop %v491
  %v549 = vmul.f32 %v368, %v548
  %v550 = vrcp.pop %v494
  %v551 = vmul.f32 %v370, %v550
  %v552 = vrcp.pop %v497
  %v553 = vmul.f32 %v372, %v552
  %v554 = vrcp.pop %v500
  %v555 = vmul.f32 %v374, %v554
  %v556 = vrcp.pop %v503
  %v557 = vmul.f32 %v376, %v556
  %v558 = vrcp.pop %v506
  %v559 = vmul.f32 %v378, %v558
  %v560 = vrcp.pop %v509
  %v561 = vmul.f32 %v380, %v560
  %v562 = vrcp.pop %v512
  %v563 = vmul.f32 %v382, %v562
  %v564 = vrcp.pop %v515
  %v565 = vmul.f32 %v384, %v564
  %v566 = vrcp.pop %v518
  %v567 = vmul.f32 %v386, %v566
  %v568 = vrcp.pop %v521
  %v569 = vmul.f32 %v388, %v568
  %v570 = vrcp.pop %v524
  %v571 = vmul.f32 %v390, %v570
  %v572 = vrcp.pop %v527
  %v573 = vmul.f32 %v392, %v572
  %v574 = vrcp.pop %v530
  %v575 = vmul.f32 %v394, %v574
  %v576 = vrcp.pop %v533
  %v577 = vmul.f32 %v396, %v576
  %v578 = vrcp.pop %v536
  %v579 = vmul.f32 %v398, %v578
  %v580 = vrcp.pop %v539
  %v581 = vmul.f32 %v400, %v580
  %v582 = vrcp.pop %v542
  %v583 = vmul.f32 %v402, %v582
  %v584 = vrcp.pop %v545
  %v585 = vmul.f32 %v404, %v584
  %606 = vrot.lane.b32.xlu0 %v547, 96
  %v607 = vpop.permute.xlu0 %606
  %608 = vrot.lane.b32.xlu0 %v549, 96
  %v609 = vpop.permute.xlu0 %608
  %610 = vrot.lane.b32.xlu0 %v551, 96
  %v611 = vpop.permute.xlu0 %610
  %612 = vrot.lane.b32.xlu0 %v553, 96
  %v613 = vpop.permute.xlu0 %612
  %614 = vrot.lane.b32.xlu0 %v555, 96
  %v615 = vpop.permute.xlu0 %614
  %616 = vrot.lane.b32.xlu0 %v557, 96
  %v617 = vpop.permute.xlu0 %616
  %618 = vrot.lane.b32.xlu0 %v559, 96
  %v619 = vpop.permute.xlu0 %618
  %620 = vrot.lane.b32.xlu0 %v561, 96
  %v621 = vpop.permute.xlu0 %620
  %622 = vrot.lane.b32.xlu0 %v563, 96
  %v623 = vpop.permute.xlu0 %622
  %624 = vrot.lane.b32.xlu0 %v565, 96
  %v625 = vpop.permute.xlu0 %624
  %626 = vrot.lane.b32.xlu0 %v567, 96
  %v627 = vpop.permute.xlu0 %626
  %628 = vrot.lane.b32.xlu0 %v569, 96
  %v629 = vpop.permute.xlu0 %628
  %630 = vrot.lane.b32.xlu0 %v571, 96
  %v631 = vpop.permute.xlu0 %630
  %632 = vrot.lane.b32.xlu0 %v573, 96
  %v633 = vpop.permute.xlu0 %632
  %634 = vrot.lane.b32.xlu0 %v575, 96
  %v635 = vpop.permute.xlu0 %634
  %636 = vrot.lane.b32.xlu0 %v577, 96
  %v637 = vpop.permute.xlu0 %636
  %638 = vrot.lane.b32.xlu0 %v579, 96
  %v639 = vpop.permute.xlu0 %638
  %640 = vrot.lane.b32.xlu0 %v581, 96
  %v641 = vpop.permute.xlu0 %640
  %642 = vrot.lane.b32.xlu0 %v583, 96
  %v643 = vpop.permute.xlu0 %642
  %644 = vrot.lane.b32.xlu0 %v585, 96
  %v645 = vpop.permute.xlu0 %644
  %666 = vst.msk [vmem:[%s7] sm:$0xff] %vm485, %v607
  %667 = vst.msk [vmem:[%s7 + $0x8] sm:$0xff] %vm485, %v609
  %668 = vst.msk [vmem:[%s7 + $0x10] sm:$0xff] %vm485, %v611
  %669 = vst.msk [vmem:[%s7 + $0x18] sm:$0xff] %vm485, %v613
  %670 = vst.msk [vmem:[%s7 + $0x20] sm:$0xff] %vm485, %v615
  %671 = vst.msk [vmem:[%s7 + $0x28] sm:$0xff] %vm485, %v617
  %672 = vst.msk [vmem:[%s7 + $0x30] sm:$0xff] %vm485, %v619
  %673 = vst.msk [vmem:[%s7 + $0x38] sm:$0xff] %vm485, %v621
  %674 = vst.msk [vmem:[%s7 + $0x40] sm:$0xff] %vm485, %v623
  %675 = vst.msk [vmem:[%s7 + $0x48] sm:$0xff] %vm485, %v625
  %676 = vst.msk [vmem:[%s7 + $0x50] sm:$0xff] %vm485, %v627
  %677 = vst.msk [vmem:[%s7 + $0x58] sm:$0xff] %vm485, %v629
  %678 = vst.msk [vmem:[%s7 + $0x60] sm:$0xff] %vm485, %v631
  %679 = vst.msk [vmem:[%s7 + $0x68] sm:$0xff] %vm485, %v633
  %680 = vst.msk [vmem:[%s7 + $0x70] sm:$0xff] %vm485, %v635
  %681 = vst.msk [vmem:[%s7 + $0x78] sm:$0xff] %vm485, %v637
  %682 = vst.msk [vmem:[%s7 + $0x80] sm:$0xff] %vm485, %v639
  %683 = vst.msk [vmem:[%s7 + $0x88] sm:$0xff] %vm485, %v641
  %684 = vst.msk [vmem:[%s7 + $0x90] sm:$0xff] %vm485, %v643
  %685 = vst.msk [vmem:[%s7 + $0x98] sm:$0xff] %vm485, %v645
  %vm686 = vcmask 326944
  %v687 = vsel %vm686, %v186, -inf
  %688 = vmax.xlane.f32.xlu0 %v687
  %v689 = vpop.xlane.xlu0 %688
  %v690 = vsel %vm686, %v189, -inf
  %691 = vmax.xlane.f32.xlu0 %v690
  %v692 = vpop.xlane.xlu0 %691
  %v693 = vsel %vm686, %v194, -inf
  %694 = vmax.xlane.f32.xlu0 %v693
  %v695 = vpop.xlane.xlu0 %694
  %v696 = vsel %vm686, %v197, -inf
  %697 = vmax.xlane.f32.xlu0 %v696
  %v698 = vpop.xlane.xlu0 %697
  %v699 = vsel %vm686, %v202, -inf
  %700 = vmax.xlane.f32.xlu0 %v699
  %v701 = vpop.xlane.xlu0 %700
  %v702 = vsel %vm686, %v205, -inf
  %703 = vmax.xlane.f32.xlu0 %v702
  %v704 = vpop.xlane.xlu0 %703
  %v705 = vsel %vm686, %v210, -inf
  %706 = vmax.xlane.f32.xlu0 %v705
  %v707 = vpop.xlane.xlu0 %706
  %v708 = vsel %vm686, %v213, -inf
  %709 = vmax.xlane.f32.xlu0 %v708
  %v710 = vpop.xlane.xlu0 %709
  %v711 = vsel %vm686, %v218, -inf
  %712 = vmax.xlane.f32.xlu0 %v711
  %v713 = vpop.xlane.xlu0 %712
  %v714 = vsel %vm686, %v221, -inf
  %715 = vmax.xlane.f32.xlu0 %v714
  %v716 = vpop.xlane.xlu0 %715
  %v717 = vsel %vm686, %v226, -inf
  %718 = vmax.xlane.f32.xlu0 %v717
  %v719 = vpop.xlane.xlu0 %718
  %v720 = vsel %vm686, %v229, -inf
  %721 = vmax.xlane.f32.xlu0 %v720
  %v722 = vpop.xlane.xlu0 %721
  %v723 = vsel %vm686, %v234, -inf
  %724 = vmax.xlane.f32.xlu0 %v723
  %v725 = vpop.xlane.xlu0 %724
  %v726 = vsel %vm686, %v237, -inf
  %727 = vmax.xlane.f32.xlu0 %v726
  %v728 = vpop.xlane.xlu0 %727
  %v729 = vsel %vm686, %v242, -inf
  %730 = vmax.xlane.f32.xlu0 %v729
  %v731 = vpop.xlane.xlu0 %730
  %v732 = vsel %vm686, %v245, -inf
  %733 = vmax.xlane.f32.xlu0 %v732
  %v734 = vpop.xlane.xlu0 %733
  %v735 = vsel %vm686, %v250, -inf
  %736 = vmax.xlane.f32.xlu0 %v735
  %v737 = vpop.xlane.xlu0 %736
  %v738 = vsel %vm686, %v253, -inf
  %739 = vmax.xlane.f32.xlu0 %v738
  %v740 = vpop.xlane.xlu0 %739
  %v741 = vsel %vm686, %v258, -inf
  %742 = vmax.xlane.f32.xlu0 %v741
  %v743 = vpop.xlane.xlu0 %742
  %v744 = vsel %vm686, %v261, -inf
  %745 = vmax.xlane.f32.xlu0 %v744
  %v746 = vpop.xlane.xlu0 %745
  %v747 = vsub.f32 %v186, %v689
  %v748 = vsub.f32 %v189, %v692
  %v749 = vsub.f32 %v194, %v695
  %v750 = vsub.f32 %v197, %v698
  %v751 = vsub.f32 %v202, %v701
  %v752 = vsub.f32 %v205, %v704
  %v753 = vsub.f32 %v210, %v707
  %v754 = vsub.f32 %v213, %v710
  %v755 = vsub.f32 %v218, %v713
  %v756 = vsub.f32 %v221, %v716
  %v757 = vsub.f32 %v226, %v719
  %v758 = vsub.f32 %v229, %v722
  %v759 = vsub.f32 %v234, %v725
  %v760 = vsub.f32 %v237, %v728
  %v761 = vsub.f32 %v242, %v731
  %v762 = vsub.f32 %v245, %v734
  %v763 = vsub.f32 %v250, %v737
  %v764 = vsub.f32 %v253, %v740
  %v765 = vsub.f32 %v258, %v743
  %v766 = vsub.f32 %v261, %v746
  %v767 = vmul.f32 %v747, 1.442695
  %v768 = vpow.pop %v767
  %v769 = vmul.f32 %v748, 1.442695
  %v770 = vpow.pop %v769
  %v771 = vmul.f32 %v749, 1.442695
  %v772 = vpow.pop %v771
  %v773 = vmul.f32 %v750, 1.442695
  %v774 = vpow.pop %v773
  %v775 = vmul.f32 %v751, 1.442695
  %v776 = vpow.pop %v775
  %v777 = vmul.f32 %v752, 1.442695
  %v778 = vpow.pop %v777
  %v779 = vmul.f32 %v753, 1.442695
  %v780 = vpow.pop %v779
  %v781 = vmul.f32 %v754, 1.442695
  %v782 = vpow.pop %v781
  %v783 = vmul.f32 %v755, 1.442695
  %v784 = vpow.pop %v783
  %v785 = vmul.f32 %v756, 1.442695
  %v786 = vpow.pop %v785
  %v787 = vmul.f32 %v757, 1.442695
  %v788 = vpow.pop %v787
  %v789 = vmul.f32 %v758, 1.442695
  %v790 = vpow.pop %v789
  %v791 = vmul.f32 %v759, 1.442695
  %v792 = vpow.pop %v791
  %v793 = vmul.f32 %v760, 1.442695
  %v794 = vpow.pop %v793
  %v795 = vmul.f32 %v761, 1.442695
  %v796 = vpow.pop %v795
  %v797 = vmul.f32 %v762, 1.442695
  %v798 = vpow.pop %v797
  %v799 = vmul.f32 %v763, 1.442695
  %v800 = vpow.pop %v799
  %v801 = vmul.f32 %v764, 1.442695
  %v802 = vpow.pop %v801
  %v803 = vmul.f32 %v765, 1.442695
  %v804 = vpow.pop %v803
  %v805 = vmul.f32 %v766, 1.442695
  %v806 = vpow.pop %v805
  %827 = vrot.lane.b32.xlu0 %v768, 92
  %v828 = vpop.permute.xlu0 %827
  %829 = vrot.lane.b32.xlu0 %v770, 92
  %v830 = vpop.permute.xlu0 %829
  %831 = vrot.lane.b32.xlu0 %v772, 92
  %v832 = vpop.permute.xlu0 %831
  %833 = vrot.lane.b32.xlu0 %v774, 92
  %v834 = vpop.permute.xlu0 %833
  %835 = vrot.lane.b32.xlu0 %v776, 92
  %v836 = vpop.permute.xlu0 %835
  %837 = vrot.lane.b32.xlu0 %v778, 92
  %v838 = vpop.permute.xlu0 %837
  %839 = vrot.lane.b32.xlu0 %v780, 92
  %v840 = vpop.permute.xlu0 %839
  %841 = vrot.lane.b32.xlu0 %v782, 92
  %v842 = vpop.permute.xlu0 %841
  %843 = vrot.lane.b32.xlu0 %v784, 92
  %v844 = vpop.permute.xlu0 %843
  %845 = vrot.lane.b32.xlu0 %v786, 92
  %v846 = vpop.permute.xlu0 %845
  %847 = vrot.lane.b32.xlu0 %v788, 92
  %v848 = vpop.permute.xlu0 %847
  %849 = vrot.lane.b32.xlu0 %v790, 92
  %v850 = vpop.permute.xlu0 %849
  %851 = vrot.lane.b32.xlu0 %v792, 92
  %v852 = vpop.permute.xlu0 %851
  %853 = vrot.lane.b32.xlu0 %v794, 92
  %v854 = vpop.permute.xlu0 %853
  %855 = vrot.lane.b32.xlu0 %v796, 92
  %v856 = vpop.permute.xlu0 %855
  %857 = vrot.lane.b32.xlu0 %v798, 92
  %v858 = vpop.permute.xlu0 %857
  %859 = vrot.lane.b32.xlu0 %v800, 92
  %v860 = vpop.permute.xlu0 %859
  %861 = vrot.lane.b32.xlu0 %v802, 92
  %v862 = vpop.permute.xlu0 %861
  %863 = vrot.lane.b32.xlu0 %v804, 92
  %v864 = vpop.permute.xlu0 %863
  %865 = vrot.lane.b32.xlu0 %v806, 92
  %v866 = vpop.permute.xlu0 %865
  %v887 = vsel %vm485, %v828, 0.0
  %888 = vadd.xlane.f32.xlu0 %v887
  %v889 = vpop.xlane.xlu0 %888
  %v890 = vsel %vm485, %v830, 0.0
  %891 = vadd.xlane.f32.xlu0 %v890
  %v892 = vpop.xlane.xlu0 %891
  %v893 = vsel %vm485, %v832, 0.0
  %894 = vadd.xlane.f32.xlu0 %v893
  %v895 = vpop.xlane.xlu0 %894
  %v896 = vsel %vm485, %v834, 0.0
  %897 = vadd.xlane.f32.xlu0 %v896
  %v898 = vpop.xlane.xlu0 %897
  %v899 = vsel %vm485, %v836, 0.0
  %900 = vadd.xlane.f32.xlu0 %v899
  %v901 = vpop.xlane.xlu0 %900
  %v902 = vsel %vm485, %v838, 0.0
  %903 = vadd.xlane.f32.xlu0 %v902
  %v904 = vpop.xlane.xlu0 %903
  %v905 = vsel %vm485, %v840, 0.0
  %906 = vadd.xlane.f32.xlu0 %v905
  %v907 = vpop.xlane.xlu0 %906
  %v908 = vsel %vm485, %v842, 0.0
  %909 = vadd.xlane.f32.xlu0 %v908
  %v910 = vpop.xlane.xlu0 %909
  %v911 = vsel %vm485, %v844, 0.0
  %912 = vadd.xlane.f32.xlu0 %v911
  %v913 = vpop.xlane.xlu0 %912
  %v914 = vsel %vm485, %v846, 0.0
  %915 = vadd.xlane.f32.xlu0 %v914
  %v916 = vpop.xlane.xlu0 %915
  %v917 = vsel %vm485, %v848, 0.0
  %918 = vadd.xlane.f32.xlu0 %v917
  %v919 = vpop.xlane.xlu0 %918
  %v920 = vsel %vm485, %v850, 0.0
  %921 = vadd.xlane.f32.xlu0 %v920
  %v922 = vpop.xlane.xlu0 %921
  %v923 = vsel %vm485, %v852, 0.0
  %924 = vadd.xlane.f32.xlu0 %v923
  %v925 = vpop.xlane.xlu0 %924
  %v926 = vsel %vm485, %v854, 0.0
  %927 = vadd.xlane.f32.xlu0 %v926
  %v928 = vpop.xlane.xlu0 %927
  %v929 = vsel %vm485, %v856, 0.0
  %930 = vadd.xlane.f32.xlu0 %v929
  %v931 = vpop.xlane.xlu0 %930
  %v932 = vsel %vm485, %v858, 0.0
  %933 = vadd.xlane.f32.xlu0 %v932
  %v934 = vpop.xlane.xlu0 %933
  %v935 = vsel %vm485, %v860, 0.0
  %936 = vadd.xlane.f32.xlu0 %v935
  %v937 = vpop.xlane.xlu0 %936
  %v938 = vsel %vm485, %v862, 0.0
  %939 = vadd.xlane.f32.xlu0 %v938
  %v940 = vpop.xlane.xlu0 %939
  %v941 = vsel %vm485, %v864, 0.0
  %942 = vadd.xlane.f32.xlu0 %v941
  %v943 = vpop.xlane.xlu0 %942
  %v944 = vsel %vm485, %v866, 0.0
  %945 = vadd.xlane.f32.xlu0 %v944
  %v946 = vpop.xlane.xlu0 %945
  %v947 = vrcp.pop %v889
  %v948 = vmul.f32 %v768, %v947
  %v949 = vrcp.pop %v892
  %v950 = vmul.f32 %v770, %v949
  %v951 = vrcp.pop %v895
  %v952 = vmul.f32 %v772, %v951
  %v953 = vrcp.pop %v898
  %v954 = vmul.f32 %v774, %v953
  %v955 = vrcp.pop %v901
  %v956 = vmul.f32 %v776, %v955
  %v957 = vrcp.pop %v904
  %v958 = vmul.f32 %v778, %v957
  %v959 = vrcp.pop %v907
  %v960 = vmul.f32 %v780, %v959
  %v961 = vrcp.pop %v910
  %v962 = vmul.f32 %v782, %v961
  %v963 = vrcp.pop %v913
  %v964 = vmul.f32 %v784, %v963
  %v965 = vrcp.pop %v916
  %v966 = vmul.f32 %v786, %v965
  %v967 = vrcp.pop %v919
  %v968 = vmul.f32 %v788, %v967
  %v969 = vrcp.pop %v922
  %v970 = vmul.f32 %v790, %v969
  %v971 = vrcp.pop %v925
  %v972 = vmul.f32 %v792, %v971
  %v973 = vrcp.pop %v928
  %v974 = vmul.f32 %v794, %v973
  %v975 = vrcp.pop %v931
  %v976 = vmul.f32 %v796, %v975
  %v977 = vrcp.pop %v934
  %v978 = vmul.f32 %v798, %v977
  %v979 = vrcp.pop %v937
  %v980 = vmul.f32 %v800, %v979
  %v981 = vrcp.pop %v940
  %v982 = vmul.f32 %v802, %v981
  %v983 = vrcp.pop %v943
  %v984 = vmul.f32 %v804, %v983
  %v985 = vrcp.pop %v946
  %v986 = vmul.f32 %v806, %v985
  %1007 = vrot.lane.b32.xlu0 %v948, 96
  %v1008 = vpop.permute.xlu0 %1007
  %1009 = vrot.lane.b32.xlu0 %v950, 96
  %v1010 = vpop.permute.xlu0 %1009
  %1011 = vrot.lane.b32.xlu0 %v952, 96
  %v1012 = vpop.permute.xlu0 %1011
  %1013 = vrot.lane.b32.xlu0 %v954, 96
  %v1014 = vpop.permute.xlu0 %1013
  %1015 = vrot.lane.b32.xlu0 %v956, 96
  %v1016 = vpop.permute.xlu0 %1015
  %1017 = vrot.lane.b32.xlu0 %v958, 96
  %v1018 = vpop.permute.xlu0 %1017
  %1019 = vrot.lane.b32.xlu0 %v960, 96
  %v1020 = vpop.permute.xlu0 %1019
  %1021 = vrot.lane.b32.xlu0 %v962, 96
  %v1022 = vpop.permute.xlu0 %1021
  %1023 = vrot.lane.b32.xlu0 %v964, 96
  %v1024 = vpop.permute.xlu0 %1023
  %1025 = vrot.lane.b32.xlu0 %v966, 96
  %v1026 = vpop.permute.xlu0 %1025
  %1027 = vrot.lane.b32.xlu0 %v968, 96
  %v1028 = vpop.permute.xlu0 %1027
  %1029 = vrot.lane.b32.xlu0 %v970, 96
  %v1030 = vpop.permute.xlu0 %1029
  %1031 = vrot.lane.b32.xlu0 %v972, 96
  %v1032 = vpop.permute.xlu0 %1031
  %1033 = vrot.lane.b32.xlu0 %v974, 96
  %v1034 = vpop.permute.xlu0 %1033
  %1035 = vrot.lane.b32.xlu0 %v976, 96
  %v1036 = vpop.permute.xlu0 %1035
  %1037 = vrot.lane.b32.xlu0 %v978, 96
  %v1038 = vpop.permute.xlu0 %1037
  %1039 = vrot.lane.b32.xlu0 %v980, 96
  %v1040 = vpop.permute.xlu0 %1039
  %1041 = vrot.lane.b32.xlu0 %v982, 96
  %v1042 = vpop.permute.xlu0 %1041
  %1043 = vrot.lane.b32.xlu0 %v984, 96
  %v1044 = vpop.permute.xlu0 %1043
  %1045 = vrot.lane.b32.xlu0 %v986, 96
  %v1046 = vpop.permute.xlu0 %1045
  %vm1067 = vcmask 64544
  %1068 = vst.msk [vmem:[%s7] sm:$0xff] %vm1067, %v1008
  %1069 = vst.msk [vmem:[%s7 + $0x8] sm:$0xff] %vm1067, %v1010
  %1070 = vst.msk [vmem:[%s7 + $0x10] sm:$0xff] %vm1067, %v1012
  %1071 = vst.msk [vmem:[%s7 + $0x18] sm:$0xff] %vm1067, %v1014
  %1072 = vst.msk [vmem:[%s7 + $0x20] sm:$0xff] %vm1067, %v1016
  %1073 = vst.msk [vmem:[%s7 + $0x28] sm:$0xff] %vm1067, %v1018
  %1074 = vst.msk [vmem:[%s7 + $0x30] sm:$0xff] %vm1067, %v1020
  %1075 = vst.msk [vmem:[%s7 + $0x38] sm:$0xff] %vm1067, %v1022
  %1076 = vst.msk [vmem:[%s7 + $0x40] sm:$0xff] %vm1067, %v1024
  %1077 = vst.msk [vmem:[%s7 + $0x48] sm:$0xff] %vm1067, %v1026
  %1078 = vst.msk [vmem:[%s7 + $0x50] sm:$0xff] %vm1067, %v1028
  %1079 = vst.msk [vmem:[%s7 + $0x58] sm:$0xff] %vm1067, %v1030
  %1080 = vst.msk [vmem:[%s7 + $0x60] sm:$0xff] %vm1067, %v1032
  %1081 = vst.msk [vmem:[%s7 + $0x68] sm:$0xff] %vm1067, %v1034
  %1082 = vst.msk [vmem:[%s7 + $0x70] sm:$0xff] %vm1067, %v1036
  %1083 = vst.msk [vmem:[%s7 + $0x78] sm:$0xff] %vm1067, %v1038
  %1084 = vst.msk [vmem:[%s7 + $0x80] sm:$0xff] %vm1067, %v1040
  %1085 = vst.msk [vmem:[%s7 + $0x88] sm:$0xff] %vm1067, %v1042
  %1086 = vst.msk [vmem:[%s7 + $0x90] sm:$0xff] %vm1067, %v1044
  %1087 = vst.msk [vmem:[%s7 + $0x98] sm:$0xff] %vm1067, %v1046
  %vm1088 = vcmask 359744
  %v1089 = vsel %vm1088, %v186, -inf
  %1090 = vmax.xlane.f32.xlu0 %v1089
  %v1091 = vpop.xlane.xlu0 %1090
  %v1092 = vsel %vm1088, %v189, -inf
  %1093 = vmax.xlane.f32.xlu0 %v1092
  %v1094 = vpop.xlane.xlu0 %1093
  %v1095 = vsel %vm1088, %v194, -inf
  %1096 = vmax.xlane.f32.xlu0 %v1095
  %v1097 = vpop.xlane.xlu0 %1096
  %v1098 = vsel %vm1088, %v197, -inf
  %1099 = vmax.xlane.f32.xlu0 %v1098
  %v1100 = vpop.xlane.xlu0 %1099
  %v1101 = vsel %vm1088, %v202, -inf
  %1102 = vmax.xlane.f32.xlu0 %v1101
  %v1103 = vpop.xlane.xlu0 %1102
  %v1104 = vsel %vm1088, %v205, -inf
  %1105 = vmax.xlane.f32.xlu0 %v1104
  %v1106 = vpop.xlane.xlu0 %1105
  %v1107 = vsel %vm1088, %v210, -inf
  %1108 = vmax.xlane.f32.xlu0 %v1107
  %v1109 = vpop.xlane.xlu0 %1108
  %v1110 = vsel %vm1088, %v213, -inf
  %1111 = vmax.xlane.f32.xlu0 %v1110
  %v1112 = vpop.xlane.xlu0 %1111
  %v1113 = vsel %vm1088, %v218, -inf
  %1114 = vmax.xlane.f32.xlu0 %v1113
  %v1115 = vpop.xlane.xlu0 %1114
  %v1116 = vsel %vm1088, %v221, -inf
  %1117 = vmax.xlane.f32.xlu0 %v1116
  %v1118 = vpop.xlane.xlu0 %1117
  %v1119 = vsel %vm1088, %v226, -inf
  %1120 = vmax.xlane.f32.xlu0 %v1119
  %v1121 = vpop.xlane.xlu0 %1120
  %v1122 = vsel %vm1088, %v229, -inf
  %1123 = vmax.xlane.f32.xlu0 %v1122
  %v1124 = vpop.xlane.xlu0 %1123
  %v1125 = vsel %vm1088, %v234, -inf
  %1126 = vmax.xlane.f32.xlu0 %v1125
  %v1127 = vpop.xlane.xlu0 %1126
  %v1128 = vsel %vm1088, %v237, -inf
  %1129 = vmax.xlane.f32.xlu0 %v1128
  %v1130 = vpop.xlane.xlu0 %1129
  %v1131 = vsel %vm1088, %v242, -inf
  %1132 = vmax.xlane.f32.xlu0 %v1131
  %v1133 = vpop.xlane.xlu0 %1132
  %v1134 = vsel %vm1088, %v245, -inf
  %1135 = vmax.xlane.f32.xlu0 %v1134
  %v1136 = vpop.xlane.xlu0 %1135
  %v1137 = vsel %vm1088, %v250, -inf
  %1138 = vmax.xlane.f32.xlu0 %v1137
  %v1139 = vpop.xlane.xlu0 %1138
  %v1140 = vsel %vm1088, %v253, -inf
  %1141 = vmax.xlane.f32.xlu0 %v1140
  %v1142 = vpop.xlane.xlu0 %1141
  %v1143 = vsel %vm1088, %v258, -inf
  %1144 = vmax.xlane.f32.xlu0 %v1143
  %v1145 = vpop.xlane.xlu0 %1144
  %v1146 = vsel %vm1088, %v261, -inf
  %1147 = vmax.xlane.f32.xlu0 %v1146
  %v1148 = vpop.xlane.xlu0 %1147
  %v1149 = vsub.f32 %v186, %v1091
  %v1150 = vsub.f32 %v189, %v1094
  %v1151 = vsub.f32 %v194, %v1097
  %v1152 = vsub.f32 %v197, %v1100
  %v1153 = vsub.f32 %v202, %v1103
  %v1154 = vsub.f32 %v205, %v1106
  %v1155 = vsub.f32 %v210, %v1109
  %v1156 = vsub.f32 %v213, %v1112
  %v1157 = vsub.f32 %v218, %v1115
  %v1158 = vsub.f32 %v221, %v1118
  %v1159 = vsub.f32 %v226, %v1121
  %v1160 = vsub.f32 %v229, %v1124
  %v1161 = vsub.f32 %v234, %v1127
  %v1162 = vsub.f32 %v237, %v1130
  %v1163 = vsub.f32 %v242, %v1133
  %v1164 = vsub.f32 %v245, %v1136
  %v1165 = vsub.f32 %v250, %v1139
  %v1166 = vsub.f32 %v253, %v1142
  %v1167 = vsub.f32 %v258, %v1145
  %v1168 = vsub.f32 %v261, %v1148
  %v1169 = vmul.f32 %v1149, 1.442695
  %v1170 = vpow.pop %v1169
  %v1171 = vmul.f32 %v1150, 1.442695
  %v1172 = vpow.pop %v1171
  %v1173 = vmul.f32 %v1151, 1.442695
  %v1174 = vpow.pop %v1173
  %v1175 = vmul.f32 %v1152, 1.442695
  %v1176 = vpow.pop %v1175
  %v1177 = vmul.f32 %v1153, 1.442695
  %v1178 = vpow.pop %v1177
  %v1179 = vmul.f32 %v1154, 1.442695
  %v1180 = vpow.pop %v1179
  %v1181 = vmul.f32 %v1155, 1.442695
  %v1182 = vpow.pop %v1181
  %v1183 = vmul.f32 %v1156, 1.442695
  %v1184 = vpow.pop %v1183
  %v1185 = vmul.f32 %v1157, 1.442695
  %v1186 = vpow.pop %v1185
  %v1187 = vmul.f32 %v1158, 1.442695
  %v1188 = vpow.pop %v1187
  %v1189 = vmul.f32 %v1159, 1.442695
  %v1190 = vpow.pop %v1189
  %v1191 = vmul.f32 %v1160, 1.442695
  %v1192 = vpow.pop %v1191
  %v1193 = vmul.f32 %v1161, 1.442695
  %v1194 = vpow.pop %v1193
  %v1195 = vmul.f32 %v1162, 1.442695
  %v1196 = vpow.pop %v1195
  %v1197 = vmul.f32 %v1163, 1.442695
  %v1198 = vpow.pop %v1197
  %v1199 = vmul.f32 %v1164, 1.442695
  %v1200 = vpow.pop %v1199
  %v1201 = vmul.f32 %v1165, 1.442695
  %v1202 = vpow.pop %v1201
  %v1203 = vmul.f32 %v1166, 1.442695
  %v1204 = vpow.pop %v1203
  %v1205 = vmul.f32 %v1167, 1.442695
  %v1206 = vpow.pop %v1205
  %v1207 = vmul.f32 %v1168, 1.442695
  %v1208 = vpow.pop %v1207
  %1229 = vrot.lane.b32.xlu0 %v1170, 88
  %v1230 = vpop.permute.xlu0 %1229
  %1231 = vrot.lane.b32.xlu0 %v1172, 88
  %v1232 = vpop.permute.xlu0 %1231
  %1233 = vrot.lane.b32.xlu0 %v1174, 88
  %v1234 = vpop.permute.xlu0 %1233
  %1235 = vrot.lane.b32.xlu0 %v1176, 88
  %v1236 = vpop.permute.xlu0 %1235
  %1237 = vrot.lane.b32.xlu0 %v1178, 88
  %v1238 = vpop.permute.xlu0 %1237
  %1239 = vrot.lane.b32.xlu0 %v1180, 88
  %v1240 = vpop.permute.xlu0 %1239
  %1241 = vrot.lane.b32.xlu0 %v1182, 88
  %v1242 = vpop.permute.xlu0 %1241
  %1243 = vrot.lane.b32.xlu0 %v1184, 88
  %v1244 = vpop.permute.xlu0 %1243
  %1245 = vrot.lane.b32.xlu0 %v1186, 88
  %v1246 = vpop.permute.xlu0 %1245
  %1247 = vrot.lane.b32.xlu0 %v1188, 88
  %v1248 = vpop.permute.xlu0 %1247
  %1249 = vrot.lane.b32.xlu0 %v1190, 88
  %v1250 = vpop.permute.xlu0 %1249
  %1251 = vrot.lane.b32.xlu0 %v1192, 88
  %v1252 = vpop.permute.xlu0 %1251
  %1253 = vrot.lane.b32.xlu0 %v1194, 88
  %v1254 = vpop.permute.xlu0 %1253
  %1255 = vrot.lane.b32.xlu0 %v1196, 88
  %v1256 = vpop.permute.xlu0 %1255
  %1257 = vrot.lane.b32.xlu0 %v1198, 88
  %v1258 = vpop.permute.xlu0 %1257
  %1259 = vrot.lane.b32.xlu0 %v1200, 88
  %v1260 = vpop.permute.xlu0 %1259
  %1261 = vrot.lane.b32.xlu0 %v1202, 88
  %v1262 = vpop.permute.xlu0 %1261
  %1263 = vrot.lane.b32.xlu0 %v1204, 88
  %v1264 = vpop.permute.xlu0 %1263
  %1265 = vrot.lane.b32.xlu0 %v1206, 88
  %v1266 = vpop.permute.xlu0 %1265
  %1267 = vrot.lane.b32.xlu0 %v1208, 88
  %v1268 = vpop.permute.xlu0 %1267
  %v1289 = vsel %vm485, %v1230, 0.0
  %1290 = vadd.xlane.f32.xlu0 %v1289
  %v1291 = vpop.xlane.xlu0 %1290
  %v1292 = vsel %vm485, %v1232, 0.0
  %1293 = vadd.xlane.f32.xlu0 %v1292
  %v1294 = vpop.xlane.xlu0 %1293
  %v1295 = vsel %vm485, %v1234, 0.0
  %1296 = vadd.xlane.f32.xlu0 %v1295
  %v1297 = vpop.xlane.xlu0 %1296
  %v1298 = vsel %vm485, %v1236, 0.0
  %1299 = vadd.xlane.f32.xlu0 %v1298
  %v1300 = vpop.xlane.xlu0 %1299
  %v1301 = vsel %vm485, %v1238, 0.0
  %1302 = vadd.xlane.f32.xlu0 %v1301
  %v1303 = vpop.xlane.xlu0 %1302
  %v1304 = vsel %vm485, %v1240, 0.0
  %1305 = vadd.xlane.f32.xlu0 %v1304
  %v1306 = vpop.xlane.xlu0 %1305
  %v1307 = vsel %vm485, %v1242, 0.0
  %1308 = vadd.xlane.f32.xlu0 %v1307
  %v1309 = vpop.xlane.xlu0 %1308
  %v1310 = vsel %vm485, %v1244, 0.0
  %1311 = vadd.xlane.f32.xlu0 %v1310
  %v1312 = vpop.xlane.xlu0 %1311
  %v1313 = vsel %vm485, %v1246, 0.0
  %1314 = vadd.xlane.f32.xlu0 %v1313
  %v1315 = vpop.xlane.xlu0 %1314
  %v1316 = vsel %vm485, %v1248, 0.0
  %1317 = vadd.xlane.f32.xlu0 %v1316
  %v1318 = vpop.xlane.xlu0 %1317
  %v1319 = vsel %vm485, %v1250, 0.0
  %1320 = vadd.xlane.f32.xlu0 %v1319
  %v1321 = vpop.xlane.xlu0 %1320
  %v1322 = vsel %vm485, %v1252, 0.0
  %1323 = vadd.xlane.f32.xlu0 %v1322
  %v1324 = vpop.xlane.xlu0 %1323
  %v1325 = vsel %vm485, %v1254, 0.0
  %1326 = vadd.xlane.f32.xlu0 %v1325
  %v1327 = vpop.xlane.xlu0 %1326
  %v1328 = vsel %vm485, %v1256, 0.0
  %1329 = vadd.xlane.f32.xlu0 %v1328
  %v1330 = vpop.xlane.xlu0 %1329
  %v1331 = vsel %vm485, %v1258, 0.0
  %1332 = vadd.xlane.f32.xlu0 %v1331
  %v1333 = vpop.xlane.xlu0 %1332
  %v1334 = vsel %vm485, %v1260, 0.0
  %1335 = vadd.xlane.f32.xlu0 %v1334
  %v1336 = vpop.xlane.xlu0 %1335
  %v1337 = vsel %vm485, %v1262, 0.0
  %1338 = vadd.xlane.f32.xlu0 %v1337
  %v1339 = vpop.xlane.xlu0 %1338
  %v1340 = vsel %vm485, %v1264, 0.0
  %1341 = vadd.xlane.f32.xlu0 %v1340
  %v1342 = vpop.xlane.xlu0 %1341
  %v1343 = vsel %vm485, %v1266, 0.0
  %1344 = vadd.xlane.f32.xlu0 %v1343
  %v1345 = vpop.xlane.xlu0 %1344
  %v1346 = vsel %vm485, %v1268, 0.0
  %1347 = vadd.xlane.f32.xlu0 %v1346
  %v1348 = vpop.xlane.xlu0 %1347
  %v1349 = vrcp.pop %v1291
  %v1350 = vmul.f32 %v1170, %v1349
  %v1351 = vrcp.pop %v1294
  %v1352 = vmul.f32 %v1172, %v1351
  %v1353 = vrcp.pop %v1297
  %v1354 = vmul.f32 %v1174, %v1353
  %v1355 = vrcp.pop %v1300
  %v1356 = vmul.f32 %v1176, %v1355
  %v1357 = vrcp.pop %v1303
  %v1358 = vmul.f32 %v1178, %v1357
  %v1359 = vrcp.pop %v1306
  %v1360 = vmul.f32 %v1180, %v1359
  %v1361 = vrcp.pop %v1309
  %v1362 = vmul.f32 %v1182, %v1361
  %v1363 = vrcp.pop %v1312
  %v1364 = vmul.f32 %v1184, %v1363
  %v1365 = vrcp.pop %v1315
  %v1366 = vmul.f32 %v1186, %v1365
  %v1367 = vrcp.pop %v1318
  %v1368 = vmul.f32 %v1188, %v1367
  %v1369 = vrcp.pop %v1321
  %v1370 = vmul.f32 %v1190, %v1369
  %v1371 = vrcp.pop %v1324
  %v1372 = vmul.f32 %v1192, %v1371
  %v1373 = vrcp.pop %v1327
  %v1374 = vmul.f32 %v1194, %v1373
  %v1375 = vrcp.pop %v1330
  %v1376 = vmul.f32 %v1196, %v1375
  %v1377 = vrcp.pop %v1333
  %v1378 = vmul.f32 %v1198, %v1377
  %v1379 = vrcp.pop %v1336
  %v1380 = vmul.f32 %v1200, %v1379
  %v1381 = vrcp.pop %v1339
  %v1382 = vmul.f32 %v1202, %v1381
  %v1383 = vrcp.pop %v1342
  %v1384 = vmul.f32 %v1204, %v1383
  %v1385 = vrcp.pop %v1345
  %v1386 = vmul.f32 %v1206, %v1385
  %v1387 = vrcp.pop %v1348
  %v1388 = vmul.f32 %v1208, %v1387
  %1409 = vrot.lane.b32.xlu0 %v1350, 96
  %v1410 = vpop.permute.xlu0 %1409
  %1411 = vrot.lane.b32.xlu0 %v1352, 96
  %v1412 = vpop.permute.xlu0 %1411
  %1413 = vrot.lane.b32.xlu0 %v1354, 96
  %v1414 = vpop.permute.xlu0 %1413
  %1415 = vrot.lane.b32.xlu0 %v1356, 96
  %v1416 = vpop.permute.xlu0 %1415
  %1417 = vrot.lane.b32.xlu0 %v1358, 96
  %v1418 = vpop.permute.xlu0 %1417
  %1419 = vrot.lane.b32.xlu0 %v1360, 96
  %v1420 = vpop.permute.xlu0 %1419
  %1421 = vrot.lane.b32.xlu0 %v1362, 96
  %v1422 = vpop.permute.xlu0 %1421
  %1423 = vrot.lane.b32.xlu0 %v1364, 96
  %v1424 = vpop.permute.xlu0 %1423
  %1425 = vrot.lane.b32.xlu0 %v1366, 96
  %v1426 = vpop.permute.xlu0 %1425
  %1427 = vrot.lane.b32.xlu0 %v1368, 96
  %v1428 = vpop.permute.xlu0 %1427
  %1429 = vrot.lane.b32.xlu0 %v1370, 96
  %v1430 = vpop.permute.xlu0 %1429
  %1431 = vrot.lane.b32.xlu0 %v1372, 96
  %v1432 = vpop.permute.xlu0 %1431
  %1433 = vrot.lane.b32.xlu0 %v1374, 96
  %v1434 = vpop.permute.xlu0 %1433
  %1435 = vrot.lane.b32.xlu0 %v1376, 96
  %v1436 = vpop.permute.xlu0 %1435
  %1437 = vrot.lane.b32.xlu0 %v1378, 96
  %v1438 = vpop.permute.xlu0 %1437
  %1439 = vrot.lane.b32.xlu0 %v1380, 96
  %v1440 = vpop.permute.xlu0 %1439
  %1441 = vrot.lane.b32.xlu0 %v1382, 96
  %v1442 = vpop.permute.xlu0 %1441
  %1443 = vrot.lane.b32.xlu0 %v1384, 96
  %v1444 = vpop.permute.xlu0 %1443
  %1445 = vrot.lane.b32.xlu0 %v1386, 96
  %v1446 = vpop.permute.xlu0 %1445
  %1447 = vrot.lane.b32.xlu0 %v1388, 96
  %v1448 = vpop.permute.xlu0 %1447
  %vm1469 = vcmask 97344
  %1470 = vst.msk [vmem:[%s7] sm:$0xff] %vm1469, %v1410
  %1471 = vst.msk [vmem:[%s7 + $0x8] sm:$0xff] %vm1469, %v1412
  %1472 = vst.msk [vmem:[%s7 + $0x10] sm:$0xff] %vm1469, %v1414
  %1473 = vst.msk [vmem:[%s7 + $0x18] sm:$0xff] %vm1469, %v1416
  %1474 = vst.msk [vmem:[%s7 + $0x20] sm:$0xff] %vm1469, %v1418
  %1475 = vst.msk [vmem:[%s7 + $0x28] sm:$0xff] %vm1469, %v1420
  %1476 = vst.msk [vmem:[%s7 + $0x30] sm:$0xff] %vm1469, %v1422
  %1477 = vst.msk [vmem:[%s7 + $0x38] sm:$0xff] %vm1469, %v1424
  %1478 = vst.msk [vmem:[%s7 + $0x40] sm:$0xff] %vm1469, %v1426
  %1479 = vst.msk [vmem:[%s7 + $0x48] sm:$0xff] %vm1469, %v1428
  %1480 = vst.msk [vmem:[%s7 + $0x50] sm:$0xff] %vm1469, %v1430
  %1481 = vst.msk [vmem:[%s7 + $0x58] sm:$0xff] %vm1469, %v1432
  %1482 = vst.msk [vmem:[%s7 + $0x60] sm:$0xff] %vm1469, %v1434
  %1483 = vst.msk [vmem:[%s7 + $0x68] sm:$0xff] %vm1469, %v1436
  %1484 = vst.msk [vmem:[%s7 + $0x70] sm:$0xff] %vm1469, %v1438
  %1485 = vst.msk [vmem:[%s7 + $0x78] sm:$0xff] %vm1469, %v1440
  %1486 = vst.msk [vmem:[%s7 + $0x80] sm:$0xff] %vm1469, %v1442
  %1487 = vst.msk [vmem:[%s7 + $0x88] sm:$0xff] %vm1469, %v1444
  %1488 = vst.msk [vmem:[%s7 + $0x90] sm:$0xff] %vm1469, %v1446
  %1489 = vst.msk [vmem:[%s7 + $0x98] sm:$0xff] %vm1469, %v1448
  %vm1490 = vcmask 392544
  %v1491 = vsel %vm1490, %v186, -inf
  %1492 = vmax.xlane.f32.xlu0 %v1491
  %v1493 = vpop.xlane.xlu0 %1492
  %v1494 = vsel %vm1490, %v189, -inf
  %1495 = vmax.xlane.f32.xlu0 %v1494
  %v1496 = vpop.xlane.xlu0 %1495
  %v1497 = vsel %vm1490, %v194, -inf
  %1498 = vmax.xlane.f32.xlu0 %v1497
  %v1499 = vpop.xlane.xlu0 %1498
  %v1500 = vsel %vm1490, %v197, -inf
  %1501 = vmax.xlane.f32.xlu0 %v1500
  %v1502 = vpop.xlane.xlu0 %1501
  %v1503 = vsel %vm1490, %v202, -inf
  %1504 = vmax.xlane.f32.xlu0 %v1503
  %v1505 = vpop.xlane.xlu0 %1504
  %v1506 = vsel %vm1490, %v205, -inf
  %1507 = vmax.xlane.f32.xlu0 %v1506
  %v1508 = vpop.xlane.xlu0 %1507
  %v1509 = vsel %vm1490, %v210, -inf
  %1510 = vmax.xlane.f32.xlu0 %v1509
  %v1511 = vpop.xlane.xlu0 %1510
  %v1512 = vsel %vm1490, %v213, -inf
  %1513 = vmax.xlane.f32.xlu0 %v1512
  %v1514 = vpop.xlane.xlu0 %1513
  %v1515 = vsel %vm1490, %v218, -inf
  %1516 = vmax.xlane.f32.xlu0 %v1515
  %v1517 = vpop.xlane.xlu0 %1516
  %v1518 = vsel %vm1490, %v221, -inf
  %1519 = vmax.xlane.f32.xlu0 %v1518
  %v1520 = vpop.xlane.xlu0 %1519
  %v1521 = vsel %vm1490, %v226, -inf
  %1522 = vmax.xlane.f32.xlu0 %v1521
  %v1523 = vpop.xlane.xlu0 %1522
  %v1524 = vsel %vm1490, %v229, -inf
  %1525 = vmax.xlane.f32.xlu0 %v1524
  %v1526 = vpop.xlane.xlu0 %1525
  %v1527 = vsel %vm1490, %v234, -inf
  %1528 = vmax.xlane.f32.xlu0 %v1527
  %v1529 = vpop.xlane.xlu0 %1528
  %v1530 = vsel %vm1490, %v237, -inf
  %1531 = vmax.xlane.f32.xlu0 %v1530
  %v1532 = vpop.xlane.xlu0 %1531
  %v1533 = vsel %vm1490, %v242, -inf
  %1534 = vmax.xlane.f32.xlu0 %v1533
  %v1535 = vpop.xlane.xlu0 %1534
  %v1536 = vsel %vm1490, %v245, -inf
  %1537 = vmax.xlane.f32.xlu0 %v1536
  %v1538 = vpop.xlane.xlu0 %1537
  %v1539 = vsel %vm1490, %v250, -inf
  %1540 = vmax.xlane.f32.xlu0 %v1539
  %v1541 = vpop.xlane.xlu0 %1540
  %v1542 = vsel %vm1490, %v253, -inf
  %1543 = vmax.xlane.f32.xlu0 %v1542
  %v1544 = vpop.xlane.xlu0 %1543
  %v1545 = vsel %vm1490, %v258, -inf
  %1546 = vmax.xlane.f32.xlu0 %v1545
  %v1547 = vpop.xlane.xlu0 %1546
  %v1548 = vsel %vm1490, %v261, -inf
  %1549 = vmax.xlane.f32.xlu0 %v1548
  %v1550 = vpop.xlane.xlu0 %1549
  %v1551 = vsub.f32 %v186, %v1493
  %v1552 = vsub.f32 %v189, %v1496
  %v1553 = vsub.f32 %v194, %v1499
  %v1554 = vsub.f32 %v197, %v1502
  %v1555 = vsub.f32 %v202, %v1505
  %v1556 = vsub.f32 %v205, %v1508
  %v1557 = vsub.f32 %v210, %v1511
  %v1558 = vsub.f32 %v213, %v1514
  %v1559 = vsub.f32 %v218, %v1517
  %v1560 = vsub.f32 %v221, %v1520
  %v1561 = vsub.f32 %v226, %v1523
  %v1562 = vsub.f32 %v229, %v1526
  %v1563 = vsub.f32 %v234, %v1529
  %v1564 = vsub.f32 %v237, %v1532
  %v1565 = vsub.f32 %v242, %v1535
  %v1566 = vsub.f32 %v245, %v1538
  %v1567 = vsub.f32 %v250, %v1541
  %v1568 = vsub.f32 %v253, %v1544
  %v1569 = vsub.f32 %v258, %v1547
  %v1570 = vsub.f32 %v261, %v1550
  %v1571 = vmul.f32 %v1551, 1.442695
  %v1572 = vpow.pop %v1571
  %v1573 = vmul.f32 %v1552, 1.442695
  %v1574 = vpow.pop %v1573
  %v1575 = vmul.f32 %v1553, 1.442695
  %v1576 = vpow.pop %v1575
  %v1577 = vmul.f32 %v1554, 1.442695
  %v1578 = vpow.pop %v1577
  %v1579 = vmul.f32 %v1555, 1.442695
  %v1580 = vpow.pop %v1579
  %v1581 = vmul.f32 %v1556, 1.442695
  %v1582 = vpow.pop %v1581
  %v1583 = vmul.f32 %v1557, 1.442695
  %v1584 = vpow.pop %v1583
  %v1585 = vmul.f32 %v1558, 1.442695
  %v1586 = vpow.pop %v1585
  %v1587 = vmul.f32 %v1559, 1.442695
  %v1588 = vpow.pop %v1587
  %v1589 = vmul.f32 %v1560, 1.442695
  %v1590 = vpow.pop %v1589
  %v1591 = vmul.f32 %v1561, 1.442695
  %v1592 = vpow.pop %v1591
  %v1593 = vmul.f32 %v1562, 1.442695
  %v1594 = vpow.pop %v1593
  %v1595 = vmul.f32 %v1563, 1.442695
  %v1596 = vpow.pop %v1595
  %v1597 = vmul.f32 %v1564, 1.442695
  %v1598 = vpow.pop %v1597
  %v1599 = vmul.f32 %v1565, 1.442695
  %v1600 = vpow.pop %v1599
  %v1601 = vmul.f32 %v1566, 1.442695
  %v1602 = vpow.pop %v1601
  %v1603 = vmul.f32 %v1567, 1.442695
  %v1604 = vpow.pop %v1603
  %v1605 = vmul.f32 %v1568, 1.442695
  %v1606 = vpow.pop %v1605
  %v1607 = vmul.f32 %v1569, 1.442695
  %v1608 = vpow.pop %v1607
  %v1609 = vmul.f32 %v1570, 1.442695
  %v1610 = vpow.pop %v1609
  %1631 = vrot.lane.b32.xlu0 %v1572, 84
  %v1632 = vpop.permute.xlu0 %1631
  %1633 = vrot.lane.b32.xlu0 %v1574, 84
  %v1634 = vpop.permute.xlu0 %1633
  %1635 = vrot.lane.b32.xlu0 %v1576, 84
  %v1636 = vpop.permute.xlu0 %1635
  %1637 = vrot.lane.b32.xlu0 %v1578, 84
  %v1638 = vpop.permute.xlu0 %1637
  %1639 = vrot.lane.b32.xlu0 %v1580, 84
  %v1640 = vpop.permute.xlu0 %1639
  %1641 = vrot.lane.b32.xlu0 %v1582, 84
  %v1642 = vpop.permute.xlu0 %1641
  %1643 = vrot.lane.b32.xlu0 %v1584, 84
  %v1644 = vpop.permute.xlu0 %1643
  %1645 = vrot.lane.b32.xlu0 %v1586, 84
  %v1646 = vpop.permute.xlu0 %1645
  %1647 = vrot.lane.b32.xlu0 %v1588, 84
  %v1648 = vpop.permute.xlu0 %1647
  %1649 = vrot.lane.b32.xlu0 %v1590, 84
  %v1650 = vpop.permute.xlu0 %1649
  %1651 = vrot.lane.b32.xlu0 %v1592, 84
  %v1652 = vpop.permute.xlu0 %1651
  %1653 = vrot.lane.b32.xlu0 %v1594, 84
  %v1654 = vpop.permute.xlu0 %1653
  %1655 = vrot.lane.b32.xlu0 %v1596, 84
  %v1656 = vpop.permute.xlu0 %1655
  %1657 = vrot.lane.b32.xlu0 %v1598, 84
  %v1658 = vpop.permute.xlu0 %1657
  %1659 = vrot.lane.b32.xlu0 %v1600, 84
  %v1660 = vpop.permute.xlu0 %1659
  %1661 = vrot.lane.b32.xlu0 %v1602, 84
  %v1662 = vpop.permute.xlu0 %1661
  %1663 = vrot.lane.b32.xlu0 %v1604, 84
  %v1664 = vpop.permute.xlu0 %1663
  %1665 = vrot.lane.b32.xlu0 %v1606, 84
  %v1666 = vpop.permute.xlu0 %1665
  %1667 = vrot.lane.b32.xlu0 %v1608, 84
  %v1668 = vpop.permute.xlu0 %1667
  %1669 = vrot.lane.b32.xlu0 %v1610, 84
  %v1670 = vpop.permute.xlu0 %1669
  %v1691 = vsel %vm485, %v1632, 0.0
  %1692 = vadd.xlane.f32.xlu0 %v1691
  %v1693 = vpop.xlane.xlu0 %1692
  %v1694 = vsel %vm485, %v1634, 0.0
  %1695 = vadd.xlane.f32.xlu0 %v1694
  %v1696 = vpop.xlane.xlu0 %1695
  %v1697 = vsel %vm485, %v1636, 0.0
  %1698 = vadd.xlane.f32.xlu0 %v1697
  %v1699 = vpop.xlane.xlu0 %1698
  %v1700 = vsel %vm485, %v1638, 0.0
  %1701 = vadd.xlane.f32.xlu0 %v1700
  %v1702 = vpop.xlane.xlu0 %1701
  %v1703 = vsel %vm485, %v1640, 0.0
  %1704 = vadd.xlane.f32.xlu0 %v1703
  %v1705 = vpop.xlane.xlu0 %1704
  %v1706 = vsel %vm485, %v1642, 0.0
  %1707 = vadd.xlane.f32.xlu0 %v1706
  %v1708 = vpop.xlane.xlu0 %1707
  %v1709 = vsel %vm485, %v1644, 0.0
  %1710 = vadd.xlane.f32.xlu0 %v1709
  %v1711 = vpop.xlane.xlu0 %1710
  %v1712 = vsel %vm485, %v1646, 0.0
  %1713 = vadd.xlane.f32.xlu0 %v1712
  %v1714 = vpop.xlane.xlu0 %1713
  %v1715 = vsel %vm485, %v1648, 0.0
  %1716 = vadd.xlane.f32.xlu0 %v1715
  %v1717 = vpop.xlane.xlu0 %1716
  %v1718 = vsel %vm485, %v1650, 0.0
  %1719 = vadd.xlane.f32.xlu0 %v1718
  %v1720 = vpop.xlane.xlu0 %1719
  %v1721 = vsel %vm485, %v1652, 0.0
  %1722 = vadd.xlane.f32.xlu0 %v1721
  %v1723 = vpop.xlane.xlu0 %1722
  %v1724 = vsel %vm485, %v1654, 0.0
  %1725 = vadd.xlane.f32.xlu0 %v1724
  %v1726 = vpop.xlane.xlu0 %1725
  %v1727 = vsel %vm485, %v1656, 0.0
  %1728 = vadd.xlane.f32.xlu0 %v1727
  %v1729 = vpop.xlane.xlu0 %1728
  %v1730 = vsel %vm485, %v1658, 0.0
  %1731 = vadd.xlane.f32.xlu0 %v1730
  %v1732 = vpop.xlane.xlu0 %1731
  %v1733 = vsel %vm485, %v1660, 0.0
  %1734 = vadd.xlane.f32.xlu0 %v1733
  %v1735 = vpop.xlane.xlu0 %1734
  %v1736 = vsel %vm485, %v1662, 0.0
  %1737 = vadd.xlane.f32.xlu0 %v1736
  %v1738 = vpop.xlane.xlu0 %1737
  %v1739 = vsel %vm485, %v1664, 0.0
  %1740 = vadd.xlane.f32.xlu0 %v1739
  %v1741 = vpop.xlane.xlu0 %1740
  %v1742 = vsel %vm485, %v1666, 0.0
  %1743 = vadd.xlane.f32.xlu0 %v1742
  %v1744 = vpop.xlane.xlu0 %1743
  %v1745 = vsel %vm485, %v1668, 0.0
  %1746 = vadd.xlane.f32.xlu0 %v1745
  %v1747 = vpop.xlane.xlu0 %1746
  %v1748 = vsel %vm485, %v1670, 0.0
  %1749 = vadd.xlane.f32.xlu0 %v1748
  %v1750 = vpop.xlane.xlu0 %1749
  %v1751 = vrcp.pop %v1693
  %v1752 = vmul.f32 %v1572, %v1751
  %v1753 = vrcp.pop %v1696
  %v1754 = vmul.f32 %v1574, %v1753
  %v1755 = vrcp.pop %v1699
  %v1756 = vmul.f32 %v1576, %v1755
  %v1757 = vrcp.pop %v1702
  %v1758 = vmul.f32 %v1578, %v1757
  %v1759 = vrcp.pop %v1705
  %v1760 = vmul.f32 %v1580, %v1759
  %v1761 = vrcp.pop %v1708
  %v1762 = vmul.f32 %v1582, %v1761
  %v1763 = vrcp.pop %v1711
  %v1764 = vmul.f32 %v1584, %v1763
  %v1765 = vrcp.pop %v1714
  %v1766 = vmul.f32 %v1586, %v1765
  %v1767 = vrcp.pop %v1717
  %v1768 = vmul.f32 %v1588, %v1767
  %v1769 = vrcp.pop %v1720
  %v1770 = vmul.f32 %v1590, %v1769
  %v1771 = vrcp.pop %v1723
  %v1772 = vmul.f32 %v1592, %v1771
  %v1773 = vrcp.pop %v1726
  %v1774 = vmul.f32 %v1594, %v1773
  %v1775 = vrcp.pop %v1729
  %v1776 = vmul.f32 %v1596, %v1775
  %v1777 = vrcp.pop %v1732
  %v1778 = vmul.f32 %v1598, %v1777
  %v1779 = vrcp.pop %v1735
  %v1780 = vmul.f32 %v1600, %v1779
  %v1781 = vrcp.pop %v1738
  %v1782 = vmul.f32 %v1602, %v1781
  %v1783 = vrcp.pop %v1741
  %v1784 = vmul.f32 %v1604, %v1783
  %v1785 = vrcp.pop %v1744
  %v1786 = vmul.f32 %v1606, %v1785
  %v1787 = vrcp.pop %v1747
  %v1788 = vmul.f32 %v1608, %v1787
  %v1789 = vrcp.pop %v1750
  %v1790 = vmul.f32 %v1610, %v1789
  %1811 = vrot.lane.b32.xlu0 %v1752, 96
  %v1812 = vpop.permute.xlu0 %1811
  %1813 = vrot.lane.b32.xlu0 %v1754, 96
  %v1814 = vpop.permute.xlu0 %1813
  %1815 = vrot.lane.b32.xlu0 %v1756, 96
  %v1816 = vpop.permute.xlu0 %1815
  %1817 = vrot.lane.b32.xlu0 %v1758, 96
  %v1818 = vpop.permute.xlu0 %1817
  %1819 = vrot.lane.b32.xlu0 %v1760, 96
  %v1820 = vpop.permute.xlu0 %1819
  %1821 = vrot.lane.b32.xlu0 %v1762, 96
  %v1822 = vpop.permute.xlu0 %1821
  %1823 = vrot.lane.b32.xlu0 %v1764, 96
  %v1824 = vpop.permute.xlu0 %1823
  %1825 = vrot.lane.b32.xlu0 %v1766, 96
  %v1826 = vpop.permute.xlu0 %1825
  %1827 = vrot.lane.b32.xlu0 %v1768, 96
  %v1828 = vpop.permute.xlu0 %1827
  %1829 = vrot.lane.b32.xlu0 %v1770, 96
  %v1830 = vpop.permute.xlu0 %1829
  %1831 = vrot.lane.b32.xlu0 %v1772, 96
  %v1832 = vpop.permute.xlu0 %1831
  %1833 = vrot.lane.b32.xlu0 %v1774, 96
  %v1834 = vpop.permute.xlu0 %1833
  %1835 = vrot.lane.b32.xlu0 %v1776, 96
  %v1836 = vpop.permute.xlu0 %1835
  %1837 = vrot.lane.b32.xlu0 %v1778, 96
  %v1838 = vpop.permute.xlu0 %1837
  %1839 = vrot.lane.b32.xlu0 %v1780, 96
  %v1840 = vpop.permute.xlu0 %1839
  %1841 = vrot.lane.b32.xlu0 %v1782, 96
  %v1842 = vpop.permute.xlu0 %1841
  %1843 = vrot.lane.b32.xlu0 %v1784, 96
  %v1844 = vpop.permute.xlu0 %1843
  %1845 = vrot.lane.b32.xlu0 %v1786, 96
  %v1846 = vpop.permute.xlu0 %1845
  %1847 = vrot.lane.b32.xlu0 %v1788, 96
  %v1848 = vpop.permute.xlu0 %1847
  %1849 = vrot.lane.b32.xlu0 %v1790, 96
  %v1850 = vpop.permute.xlu0 %1849
  %vm1871 = vcmask 130144
  %1872 = vst.msk [vmem:[%s7] sm:$0xff] %vm1871, %v1812
  %1873 = vst.msk [vmem:[%s7 + $0x8] sm:$0xff] %vm1871, %v1814
  %1874 = vst.msk [vmem:[%s7 + $0x10] sm:$0xff] %vm1871, %v1816
  %1875 = vst.msk [vmem:[%s7 + $0x18] sm:$0xff] %vm1871, %v1818
  %1876 = vst.msk [vmem:[%s7 + $0x20] sm:$0xff] %vm1871, %v1820
  %1877 = vst.msk [vmem:[%s7 + $0x28] sm:$0xff] %vm1871, %v1822
  %1878 = vst.msk [vmem:[%s7 + $0x30] sm:$0xff] %vm1871, %v1824
  %1879 = vst.msk [vmem:[%s7 + $0x38] sm:$0xff] %vm1871, %v1826
  %1880 = vst.msk [vmem:[%s7 + $0x40] sm:$0xff] %vm1871, %v1828
  %1881 = vst.msk [vmem:[%s7 + $0x48] sm:$0xff] %vm1871, %v1830
  %1882 = vst.msk [vmem:[%s7 + $0x50] sm:$0xff] %vm1871, %v1832
  %1883 = vst.msk [vmem:[%s7 + $0x58] sm:$0xff] %vm1871, %v1834
  %1884 = vst.msk [vmem:[%s7 + $0x60] sm:$0xff] %vm1871, %v1836
  %1885 = vst.msk [vmem:[%s7 + $0x68] sm:$0xff] %vm1871, %v1838
  %1886 = vst.msk [vmem:[%s7 + $0x70] sm:$0xff] %vm1871, %v1840
  %1887 = vst.msk [vmem:[%s7 + $0x78] sm:$0xff] %vm1871, %v1842
  %1888 = vst.msk [vmem:[%s7 + $0x80] sm:$0xff] %vm1871, %v1844
  %1889 = vst.msk [vmem:[%s7 + $0x88] sm:$0xff] %vm1871, %v1846
  %1890 = vst.msk [vmem:[%s7 + $0x90] sm:$0xff] %vm1871, %v1848
  %1891 = vst.msk [vmem:[%s7 + $0x98] sm:$0xff] %vm1871, %v1850
  %v1892 = vpack.c.bf16 %v28, %v27
  %v1893 = vpack.c.bf16 %v30, %v29
  %v1894 = vpack.c.bf16 %v32, %v31
  %v1895 = vpack.c.bf16 %v34, %v33
  %v1896 = vpack.c.bf16 %v36, %v35
  %v1897 = vpack.c.bf16 %v38, %v37
  %v1898 = vpack.c.bf16 %v40, %v39
  %v1899 = vpack.c.bf16 %v42, %v41
  %v1900 = vpack.c.bf16 %v44, %v43
  %v1901 = vpack.c.bf16 %v46, %v45
  %v1902 = vld [vmem:[%s4] sm:$0xf]
  %v1903 = vld [vmem:[%s4 + $0x4] sm:$0xf]
  %v1904 = vld [vmem:[%s4 + $0x8] sm:$0xf]
  %v1905 = vld [vmem:[%s4 + $0xc] sm:$0xf]
  %v1906 = vld [vmem:[%s5] sm:$0x1]
  %v1908 = vlaneseq
  %v1909 = vshrl.u32 %v1908, 7
  %v1910 = vsub.s32 0, %v1909
  %v1911 = vrot.slane %v1906, %v1910
  %v1917 = vunpack.c.l.b16 %v1902
  %v1918 = vunpack.c.l.b16 %v1903
  %v1919 = vunpack.c.l.b16 %v1904
  %v1920 = vunpack.c.l.b16 %v1905
  %v1921 = vpack.c.b16 %v1918, %v1917
  %v1922 = vpack.c.b16 %v1920, %v1919
  %v1926 = vsel %vm120, %v1892, 0
  %v1929 = vsel %vm120, %v1893, 0
  %v1932 = vsel %vm120, %v1894, 0
  %v1935 = vsel %vm120, %v1895, 0
  %v1938 = vsel %vm120, %v1896, 0
  %v1941 = vsel %vm120, %v1897, 0
  %v1944 = vsel %vm120, %v1898, 0
  %v1947 = vsel %vm120, %v1899, 0
  %v1950 = vsel %vm120, %v1900, 0
  %v1953 = vsel %vm120, %v1901, 0
  %1955 = vmatprep.subr.bf16.mxu0 0
  %1956 = vmatpush1.bf16.msra.mxu0 %v1921
  %1957 = vmatprep.subr.bf16.mxu0 0
  %1958 = vmatpush1.bf16.msra.mxu0 %v1922
  %1959 = vmatprep.subr.bf16.mxu0 0
  %1960 = vmatpush1.bf16.msra.mxu0 0
  %1961 = vmatprep.subr.bf16.mxu0 0
  %1962 = vmatpush1.bf16.msra.mxu0 0
  %1963 = vmatprep.subr.bf16.mxu0 0
  %1964 = vmatpush1.bf16.msra.mxu0 0
  %1965 = vmatprep.subr.bf16.mxu0 0
  %1966 = vmatpush1.bf16.msra.mxu0 0
  %1967 = vmatprep.subr.bf16.mxu0 0
  %1968 = vmatpush1.bf16.msra.mxu0 0
  %1969 = vmatprep.subr.bf16.mxu0 0
  %1970 = vmatpush1.bf16.msra.mxu0 0
  %1971 = vmatprep.subr.bf16.mxu0 0
  %1972 = vmatpush1.bf16.msra.mxu0 0
  %1973 = vmatprep.subr.bf16.mxu0 0
  %1974 = vmatpush1.bf16.msra.mxu0 0
  %1975 = vmatprep.subr.bf16.mxu0 0
  %1976 = vmatpush1.bf16.msra.mxu0 0
  %1977 = vmatprep.subr.bf16.mxu0 0
  %1978 = vmatpush1.bf16.msra.mxu0 0
  %1979 = vmatprep.subr.bf16.mxu0 0
  %1980 = vmatpush1.bf16.msra.mxu0 0
  %1981 = vmatprep.subr.bf16.mxu0 0
  %1982 = vmatpush1.bf16.msra.mxu0 0
  %1983 = vmatprep.subr.bf16.mxu0 0
  %1984 = vmatpush1.bf16.msra.mxu0 0
  %1985 = vmatprep.subr.bf16.mxu0 0
  %1986 = vmatpush1.bf16.msra.mxu0 0
  %1987 = vmatprep.mubr.bf16.mxu0 0
  %1988 = vmatmul.mubr.bf16.gmra.mrb[0].mxu0 %v1926
  %v1989 = vpop.f32.mrb[0].mxu0
  %v1990 = vadd.f32 %v1911, %v1989
  %v1991 = vpop.f32.mrb[0].mxu0
  %v1992 = vpop.f32.mrb[0].mxu0
  %v1993 = vadd.f32 %v1911, %v1992
  %v1994 = vpop.f32.mrb[0].mxu0
  %1995 = vmatprep.mubr.bf16.mxu0 0
  %1996 = vmatmul.mubr.bf16.gmra.mrb[0].mxu0 %v1929
  %v1997 = vpop.f32.mrb[0].mxu0
  %v1998 = vadd.f32 %v1911, %v1997
  %v1999 = vpop.f32.mrb[0].mxu0
  %v2000 = vpop.f32.mrb[0].mxu0
  %v2001 = vadd.f32 %v1911, %v2000
  %v2002 = vpop.f32.mrb[0].mxu0
  %2003 = vmatprep.mubr.bf16.mxu0 0
  %2004 = vmatmul.mubr.bf16.gmra.mrb[0].mxu0 %v1932
  %v2005 = vpop.f32.mrb[0].mxu0
  %v2006 = vadd.f32 %v1911, %v2005
  %v2007 = vpop.f32.mrb[0].mxu0
  %v2008 = vpop.f32.mrb[0].mxu0
  %v2009 = vadd.f32 %v1911, %v2008
  %v2010 = vpop.f32.mrb[0].mxu0
  %2011 = vmatprep.mubr.bf16.mxu0 0
  %2012 = vmatmul.mubr.bf16.gmra.mrb[0].mxu0 %v1935
  %v2013 = vpop.f32.mrb[0].mxu0
  %v2014 = vadd.f32 %v1911, %v2013
  %v2015 = vpop.f32.mrb[0].mxu0
  %v2016 = vpop.f32.mrb[0].mxu0
  %v2017 = vadd.f32 %v1911, %v2016
  %v2018 = vpop.f32.mrb[0].mxu0
  %2019 = vmatprep.mubr.bf16.mxu0 0
  %2020 = vmatmul.mubr.bf16.gmra.mrb[0].mxu0 %v1938
  %v2021 = vpop.f32.mrb[0].mxu0
  %v2022 = vadd.f32 %v1911, %v2021
  %v2023 = vpop.f32.mrb[0].mxu0
  %v2024 = vpop.f32.mrb[0].mxu0
  %v2025 = vadd.f32 %v1911, %v2024
  %v2026 = vpop.f32.mrb[0].mxu0
  %2027 = vmatprep.mubr.bf16.mxu0 0
  %2028 = vmatmul.mubr.bf16.gmra.mrb[0].mxu0 %v1941
  %v2029 = vpop.f32.mrb[0].mxu0
  %v2030 = vadd.f32 %v1911, %v2029
  %v2031 = vpop.f32.mrb[0].mxu0
  %v2032 = vpop.f32.mrb[0].mxu0
  %v2033 = vadd.f32 %v1911, %v2032
  %v2034 = vpop.f32.mrb[0].mxu0
  %2035 = vmatprep.mubr.bf16.mxu0 0
  %2036 = vmatmul.mubr.bf16.gmra.mrb[0].mxu0 %v1944
  %v2037 = vpop.f32.mrb[0].mxu0
  %v2038 = vadd.f32 %v1911, %v2037
  %v2039 = vpop.f32.mrb[0].mxu0
  %v2040 = vpop.f32.mrb[0].mxu0
  %v2041 = vadd.f32 %v1911, %v2040
  %v2042 = vpop.f32.mrb[0].mxu0
  %2043 = vmatprep.mubr.bf16.mxu0 0
  %2044 = vmatmul.mubr.bf16.gmra.mrb[0].mxu0 %v1947
  %v2045 = vpop.f32.mrb[0].mxu0
  %v2046 = vadd.f32 %v1911, %v2045
  %v2047 = vpop.f32.mrb[0].mxu0
  %v2048 = vpop.f32.mrb[0].mxu0
  %v2049 = vadd.f32 %v1911, %v2048
  %v2050 = vpop.f32.mrb[0].mxu0
  %2051 = vmatprep.mubr.bf16.mxu0 0
  %2052 = vmatmul.mubr.bf16.gmra.mrb[0].mxu0 %v1950
  %v2053 = vpop.f32.mrb[0].mxu0
  %v2054 = vadd.f32 %v1911, %v2053
  %v2055 = vpop.f32.mrb[0].mxu0
  %v2056 = vpop.f32.mrb[0].mxu0
  %v2057 = vadd.f32 %v1911, %v2056
  %v2058 = vpop.f32.mrb[0].mxu0
  %2059 = vmatprep.mubr.bf16.mxu0 0
  %2060 = vmatmul.mubr.bf16.gmra.mrb[0].mxu0 %v1953
  %v2061 = vpop.f32.mrb[0].mxu0
  %v2062 = vadd.f32 %v1911, %v2061
  %v2063 = vpop.f32.mrb[0].mxu0
  %v2064 = vpop.f32.mrb[0].mxu0
  %v2065 = vadd.f32 %v1911, %v2064
  %v2066 = vpop.f32.mrb[0].mxu0
  %2067 = vdwg.mxu0
  %2068 = vst.msk [vmem:[%s8] sm:$0xff] %vm120, %v1990
  %2069 = vst.msk [vmem:[%s8 + $0x8] sm:$0xff] %vm120, %v1993
  %2070 = vst.msk [vmem:[%s8 + $0x10] sm:$0xff] %vm120, %v1998
  %2071 = vst.msk [vmem:[%s8 + $0x18] sm:$0xff] %vm120, %v2001
  %2072 = vst.msk [vmem:[%s8 + $0x20] sm:$0xff] %vm120, %v2006
  %2073 = vst.msk [vmem:[%s8 + $0x28] sm:$0xff] %vm120, %v2009
  %2074 = vst.msk [vmem:[%s8 + $0x30] sm:$0xff] %vm120, %v2014
  %2075 = vst.msk [vmem:[%s8 + $0x38] sm:$0xff] %vm120, %v2017
  %2076 = vst.msk [vmem:[%s8 + $0x40] sm:$0xff] %vm120, %v2022
  %2077 = vst.msk [vmem:[%s8 + $0x48] sm:$0xff] %vm120, %v2025
  %2078 = vst.msk [vmem:[%s8 + $0x50] sm:$0xff] %vm120, %v2030
  %2079 = vst.msk [vmem:[%s8 + $0x58] sm:$0xff] %vm120, %v2033
  %2080 = vst.msk [vmem:[%s8 + $0x60] sm:$0xff] %vm120, %v2038
  %2081 = vst.msk [vmem:[%s8 + $0x68] sm:$0xff] %vm120, %v2041
  %2082 = vst.msk [vmem:[%s8 + $0x70] sm:$0xff] %vm120, %v2046
  %2083 = vst.msk [vmem:[%s8 + $0x78] sm:$0xff] %vm120, %v2049
  %2084 = vst.msk [vmem:[%s8 + $0x80] sm:$0xff] %vm120, %v2054
  %2085 = vst.msk [vmem:[%s8 + $0x88] sm:$0xff] %vm120, %v2057
  %2086 = vst.msk [vmem:[%s8 + $0x90] sm:$0xff] %vm120, %v2062
  %2087 = vst.msk [vmem:[%s8 + $0x98] sm:$0xff] %vm120, %v2065
  // Predicated region
  $region26: #{deformable_encoder_forward.9} parent=0 // pred_check
    _
  $region27: #{deformable_encoder_forward.9} parent=0 // pred_check_branch
    %2089 = sbr.rel (0) target = $region29
  $region28: #{deformable_encoder_forward.9} parent=0 // pred_region
    _
  $region29: #{deformable_encoder_forward.9} parent=0 // pred_fallthru
    _
  // Predicated region
  $region30: #{deformable_encoder_forward.9} parent=0 // pred_check
    _
  $region31: #{deformable_encoder_forward.9} parent=0 // pred_check_branch
    %2091 = sbr.rel (0) target = $region33
  $region32: #{deformable_encoder_forward.9} parent=0 // pred_region
    _
  $region33: #{deformable_encoder_forward.9} parent=0 // pred_fallthru
    _
  // Predicated region
  $region34: #{deformable_encoder_forward.9} parent=0 // pred_check
    _
  $region35: #{deformable_encoder_forward.9} parent=0 // pred_check_branch
    %2093 = sbr.rel (0) target = $region37
  $region36: #{deformable_encoder_forward.9} parent=0 // pred_region
    _
  $region37: #{deformable_encoder_forward.9} parent=0 // pred_fallthru
    _
  // Predicated region
  $region38: #{deformable_encoder_forward.9} parent=0 // pred_check
    _
  $region39: #{deformable_encoder_forward.9} parent=0 // pred_check_branch
    %2095 = sbr.rel (0) target = $region41
  $region40: #{deformable_encoder_forward.9} parent=0 // pred_region
    _
  $region41: #{deformable_encoder_forward.9} parent=0 // pred_fallthru
    _
  // Predicated region
  $region42: #{deformable_encoder_forward.9} parent=0 // pred_check
    _
  $region43: #{deformable_encoder_forward.9} parent=0 // pred_check_branch
    %2097 = sbr.rel (0) target = $region45
  $region44: #{deformable_encoder_forward.9} parent=0 // pred_region
    _
  $region45: #{deformable_encoder_forward.9} parent=0 // pred_fallthru
    _
  // Predicated region
  $region46: #{deformable_encoder_forward.9} parent=0 // pred_check
    _
  $region47: #{deformable_encoder_forward.9} parent=0 // pred_check_branch
    %2099 = sbr.rel (0) target = $region49
  $region48: #{deformable_encoder_forward.9} parent=0 // pred_region
    _
  $region49: #{deformable_encoder_forward.9} parent=0 // pred_fallthru
    _

</llo_original>
